<compile_context>
chip_gen: v7x
topology: tpu7x:2x2x1
jax: 0.10.0
libtpu: 0.0.40
codegen_flags: <defaults>
</compile_context>

<pallas_src>
import functools

import numpy as np

import jax
import jax.numpy as jnp
from jax import lax
from jax.experimental import pallas as pl
from jax.experimental.pallas import tpu as pltpu


# ---------------------------------------------------------------------------
# Fused forward kernel (per batch element)
# ---------------------------------------------------------------------------
def _dqn_fused_kernel(p1_ref, w1_ref, b1_ref, gall_ref, w2_ref, b2_ref,
                      w3_ref, b3_ref, w4_ref, b4_ref, out_ref, p2_s):
    f32 = jnp.float32
    oc1p = w1_ref.shape[0]                 # 8  (conv1 out-channels, 6 padded to 8)
    n_pool = p1_ref.shape[1]               # 4  (2x2 pool positions)
    n_kk = gall_ref.shape[0]               # 16 (conv2 kernel offsets)

    # ---- conv1 (7x7 s3) + 2x2 max-pool + bias + ReLU -----------------------
    # One (8,152)@(152,225) matmul per pool position; max over the 4 results
    # IS the 2x2 pool (bias/ReLU commute with the spatial max).
    w1 = w1_ref[...]                                                   # (8, 152)
    z = jnp.dot(w1, p1_ref[0, 0], preferred_element_type=f32)          # (8, 225)
    for k in range(1, n_pool):
        z = jnp.maximum(z, jnp.dot(w1, p1_ref[0, k],
                                   preferred_element_type=f32))
    a1 = jnp.maximum(z + b1_ref[...], 0.0)                             # (8, 225)

    # ---- conv2 im2col via exact 0/1 gather matmuls --------------------------
    # Each gather matmul writes a full-width, sublane-aligned (8, 144) block.
    # All 128 sublanes x 144 lanes of p2_s are overwritten every grid step.
    for kk in range(n_kk):
        p2_s[kk * oc1p:(kk + 1) * oc1p, :] = jnp.dot(
            a1, gall_ref[kk], preferred_element_type=f32)              # (8, 144)

    # ---- conv2 (single matmul) + 2x2 max-pool + bias + ReLU -----------------
    z2 = jnp.dot(w2_ref[...], p2_s[...], preferred_element_type=f32)   # (12, 144)
    ns = z2.shape[1] // 4                                              # 36
    m2 = jnp.maximum(jnp.maximum(z2[:, 0:ns], z2[:, ns:2 * ns]),
                     jnp.maximum(z2[:, 2 * ns:3 * ns], z2[:, 3 * ns:4 * ns]))
    a2 = jnp.maximum(m2 + b2_ref[...], 0.0)                            # (12, 36)

    # ---- fc1 (+ReLU) contracted directly against the (channel, spatial)
    #      layout: 12 accumulating (1,36)@(36,216) matmuls (no flatten scratch)
    y = b3_ref[...]                                                    # (1, 216)
    for c in range(a2.shape[0]):
        y = y + jnp.dot(a2[c:c + 1, :], w3_ref[c], preferred_element_type=f32)
    y = jnp.maximum(y, 0.0)

    # ---- fc2 ----------------------------------------------------------------
    out_ref[0] = (jnp.dot(y, w4_ref[...], preferred_element_type=f32)
                  + b4_ref[...]).astype(out_ref.dtype)


# ---------------------------------------------------------------------------
# XLA glue: conv1 im2col in the kernel's final lane-dense layout.
#   p1[b, rs*2+cs, (c,i,j), ho*PW+wo] = x[b, c, (2*ho+rs)*s + i, (2*wo+cs)*s + j]
# ---------------------------------------------------------------------------
def _conv1_patches(x, kh, kw, stride, k_pad):
    B, C, H, W = x.shape
    OH = (H - kh) // stride + 1
    OW = (W - kw) // stride + 1
    assert OH % 2 == 0 and OW % 2 == 0
    PH, PW = OH // 2, OW // 2
    cols = []
    for i in range(kh):
        for j in range(kw):
            cols.append(x[:, :, i:i + stride * OH:stride, j:j + stride * OW:stride])
    p = jnp.stack(cols, axis=2)                       # (B, C, kh*kw, OH, OW)
    p = p.reshape(B, C * kh * kw, OH, OW)             # K order (c, i, j)
    k = C * kh * kw
    if k_pad > k:
        p = jnp.pad(p, ((0, 0), (0, k_pad - k), (0, 0), (0, 0)))
    p = p.reshape(B, k_pad, PH, 2, PW, 2)             # (b, kk, ho, rs, wo, cs)
    p = p.transpose(0, 3, 5, 1, 2, 4)                 # (b, rs, cs, kk, ho, wo)
    return p.reshape(B, 4, k_pad, PH * PW), OH, OW


# ---------------------------------------------------------------------------
# Exact 0/1 conv2 im2col gather constants, one (225, 144) matrix per kernel
# offset (i, j).  Columns ordered [pool-pos, ho, wo] so pool2 is 3 maxes.
# ---------------------------------------------------------------------------
def _make_conv2_gather(p1h, kh2, p2h):
    n_pos = p2h * p2h
    g = np.zeros((kh2 * kh2, p1h * p1h, 4 * n_pos), np.float32)
    for i in range(kh2):
        for j in range(kh2):
            blk = g[i * kh2 + j]
            for rs in range(2):
                for cs in range(2):
                    for ho in range(p2h):
                        for wo in range(p2h):
                            col = (rs * 2 + cs) * n_pos + ho * p2h + wo
                            r = 2 * ho + rs + i
                            c = 2 * wo + cs + j
                            blk[r * p1h + c, col] = 1.0
    return jnp.asarray(g)


# ---------------------------------------------------------------------------
# One-time parameter preparation (padding / transposes outside the hot path)
# ---------------------------------------------------------------------------
def prepare_params(params):
    w1, b1, w2, b2, w3, b3, w4, b4 = params
    oc1, c_in, kh1, kw1 = w1.shape
    k1 = c_in * kh1 * kw1                              # 147
    k1p = ((k1 + 7) // 8) * 8                          # 152
    oc1p = ((oc1 + 7) // 8) * 8                        # 8

    w1m = jnp.pad(w1.reshape(oc1, k1), ((0, oc1p - oc1), (0, k1p - k1)))   # (8, 152)
    b1c = jnp.pad(b1.reshape(oc1, 1), ((0, oc1p - oc1), (0, 0)))           # (8, 1)

    oc2, ic2, kh2, kw2 = w2.shape
    w2t = jnp.transpose(w2, (0, 2, 3, 1))                                  # (12,4,4,6)
    w2t = jnp.pad(w2t, ((0, 0), (0, 0), (0, 0), (0, oc1p - ic2)))          # (12,4,4,8)
    w2m = w2t.reshape(oc2, kh2 * kw2 * oc1p)                               # (12, 128)
    b2c = b2.reshape(oc2, 1)

    nf1, feat = w3.shape                                                   # 216, 432
    hw2 = feat // oc2                                                      # 36
    p2h = int(round(hw2 ** 0.5))                                           # 6
    assert p2h * p2h == hw2
    n2 = 2 * p2h                                                           # 12
    p1h = n2 + kh2 - 1                                                     # 15

    w3r = jnp.transpose(w3).reshape(oc2, hw2, nf1)                         # (12,36,216)
    b3r = b3.reshape(1, -1)
    w4t = jnp.transpose(w4)                                                # (216, nout)
    b4r = b4.reshape(1, -1)

    gall = _make_conv2_gather(p1h, kh2, p2h)                               # (16,225,144)
    return (w1m, b1c, w2m, b2c, w3r, b3r, w4t, b4r, gall)


# ---------------------------------------------------------------------------
# Forward pass: one fused pallas_call, gridded over batch.
# ---------------------------------------------------------------------------
def dqn_forward(x, prepped):
    w1m, b1c, w2m, b2c, w3r, b3r, w4t, b4r, gall = prepped
    B = x.shape[0]
    kh1, st1 = 7, 3
    oc1p, k1p = w1m.shape
    oc2 = w2m.shape[0]
    hw2 = w3r.shape[1]                   # 36
    nf1 = w3r.shape[2]                   # 216
    nout = w4t.shape[1]
    kk_blocks, php, c2cols = gall.shape  # 16, 225, 144

    p1, oh1, ow1 = _conv1_patches(x, kh1, kh1, st1, k1p)   # (B, 4, 152, 225)
    assert (oh1 // 2) * (ow1 // 2) == php
    assert kk_blocks * oc1p == w2m.shape[1]
    assert 4 * hw2 == c2cols

    flops = 2 * B * (oc1p * k1p * 4 * php            # conv1 (4 pool positions)
                     + kk_blocks * oc1p * php * c2cols   # conv2 im2col gathers
                     + oc2 * kk_blocks * oc1p * c2cols   # conv2
                     + oc2 * hw2 * nf1                   # fc1
                     + nf1 * nout)                       # fc2
    bytes_accessed = 4 * (p1.size + gall.size + w1m.size + b1c.size
                          + w2m.size + b2c.size + w3r.size + b3r.size
                          + w4t.size + b4r.size + B * nout)

    out = pl.pallas_call(
        _dqn_fused_kernel,
        out_shape=jax.ShapeDtypeStruct((B, 1, nout), jnp.float32),
        grid=(B,),
        in_specs=[
            pl.BlockSpec((1, 4, k1p, php), lambda b: (b, 0, 0, 0)),   # conv1 patches
            pl.BlockSpec((oc1p, k1p), lambda b: (0, 0)),              # w1
            pl.BlockSpec((oc1p, 1), lambda b: (0, 0)),                # b1
            pl.BlockSpec((kk_blocks, php, c2cols),
                         lambda b: (0, 0, 0)),                        # conv2 gathers
            pl.BlockSpec((oc2, kk_blocks * oc1p), lambda b: (0, 0)),  # w2
            pl.BlockSpec((oc2, 1), lambda b: (0, 0)),                 # b2
            pl.BlockSpec((oc2, hw2, nf1), lambda b: (0, 0, 0)),       # w3 (reshaped)
            pl.BlockSpec((1, nf1), lambda b: (0, 0)),                 # b3
            pl.BlockSpec((nf1, nout), lambda b: (0, 0)),              # w4^T
            pl.BlockSpec((1, nout), lambda b: (0, 0)),                # b4
        ],
        out_specs=pl.BlockSpec((1, 1, nout), lambda b: (b, 0, 0)),
        scratch_shapes=[
            pltpu.VMEM((kk_blocks * oc1p, c2cols), jnp.float32),      # conv2 im2col (128,144)
        ],
        compiler_params=pltpu.CompilerParams(
            dimension_semantics=("parallel",)),
        cost_estimate=pl.CostEstimate(flops=flops, transcendentals=0,
                                      bytes_accessed=bytes_accessed),
    )(p1, w1m, b1c, gall, w2m, b2c, w3r, b3r, w4t, b4r)
    return out.reshape(B, nout)


# ---------------------------------------------------------------------------
# Pure-JAX reference (correctness check only)
# ---------------------------------------------------------------------------
def dqn_forward_ref(x, params):
    w1, b1, w2, b2, w3, b3, w4, b4 = params
    dn1 = lax.conv_dimension_numbers(x.shape, w1.shape, ('NCHW', 'OIHW', 'NCHW'))
    y = lax.conv_general_dilated(x, w1, (3, 3), 'VALID', dimension_numbers=dn1)
    y = jnp.maximum(y + b1[None, :, None, None], 0.0)
    y = lax.reduce_window(y, -jnp.inf, lax.max, (1, 1, 2, 2), (1, 1, 2, 2), 'VALID')
    dn2 = lax.conv_dimension_numbers(y.shape, w2.shape, ('NCHW', 'OIHW', 'NCHW'))
    y = lax.conv_general_dilated(y, w2, (1, 1), 'VALID', dimension_numbers=dn2)
    y = jnp.maximum(y + b2[None, :, None, None], 0.0)
    y = lax.reduce_window(y, -jnp.inf, lax.max, (1, 1, 2, 2), (1, 1, 2, 2), 'VALID')
    y = y.reshape(y.shape[0], -1)
    y = jnp.maximum(y @ w3.T + b3, 0.0)
    return y @ w4.T + b4


# ---------------------------------------------------------------------------
# Deterministic kaiming-style parameter init (synthetic)
# ---------------------------------------------------------------------------
def make_params(key, ninputs, noutputs):
    ks = jax.random.split(key, 8)

    def kaiming(k, shape, fan_in):
        return (jax.random.normal(k, shape, jnp.float32)
                * jnp.sqrt(2.0 / fan_in).astype(jnp.float32))

    def bias(k, n, fan_in):
        bound = 1.0 / jnp.sqrt(jnp.float32(fan_in))
        return jax.random.uniform(k, (n,), jnp.float32, -bound, bound)

    w1 = kaiming(ks[0], (6, ninputs, 7, 7), ninputs * 7 * 7)
    b1 = bias(ks[1], 6, ninputs * 7 * 7)
    w2 = kaiming(ks[2], (12, 6, 4, 4), 6 * 4 * 4)
    b2 = bias(ks[3], 12, 6 * 4 * 4)
    w3 = kaiming(ks[4], (216, 432), 432)
    b3 = bias(ks[5], 216, 432)
    w4 = kaiming(ks[6], (noutputs, 216), 216)
    b4 = bias(ks[7], noutputs, 216)
    return (w1, b1, w2, b2, w3, b3, w4, b4)


if __name__ == "__main__":
    NINPUTS, NOUTPUTS, BATCH = 3, 4, 2

    key = jax.random.PRNGKey(0)
    k_param, k_x = jax.random.split(key)
    params = make_params(k_param, NINPUTS, NOUTPUTS)
    prepped = prepare_params(params)                     # one-time layout prep
    # spatial 96x96 is implied by fc1 in_features = 432
    x = jax.random.normal(k_x, (BATCH, NINPUTS, 96, 96), jnp.float32)

    fwd = jax.jit(dqn_forward)
    out = jax.block_until_ready(fwd(x, prepped))

    ref = jax.block_until_ready(dqn_forward_ref(x, params))
    assert out.shape == (BATCH, NOUTPUTS), out.shape
    assert jnp.allclose(out, ref, atol=2e-3, rtol=2e-3), (out, ref)

    print("KERNEL_OK")
</pallas_src>

<mosaic_0001>
module attributes {stable_mosaic.version = 11 : i64} {
  func.func @_dqn_fused_kernel(%arg0: i32, %arg1: memref<1x4x152x225xf32, #tpu.memory_space<vmem>>, %arg2: memref<8x152xf32, #tpu.memory_space<vmem>>, %arg3: memref<8x1xf32, #tpu.memory_space<vmem>>, %arg4: memref<16x225x144xf32, #tpu.memory_space<vmem>>, %arg5: memref<12x128xf32, #tpu.memory_space<vmem>>, %arg6: memref<12x1xf32, #tpu.memory_space<vmem>>, %arg7: memref<12x36x216xf32, #tpu.memory_space<vmem>>, %arg8: memref<1x216xf32, #tpu.memory_space<vmem>>, %arg9: memref<216x4xf32, #tpu.memory_space<vmem>>, %arg10: memref<1x4xf32, #tpu.memory_space<vmem>>, %arg11: memref<1x1x4xf32, #tpu.memory_space<vmem>>, %arg12: memref<128x144xf32, #tpu.memory_space<vmem>>) attributes {dimension_semantics = [#tpu.dimension_semantics<parallel>], iteration_bounds = array<i64: 2>, scalar_prefetch = 0 : i64, scratch_operands = 1 : i64, tpu.core_type = #tpu.core_type<tc>, window_params = [{transform_indices = @transform_0, window_bounds = array<i64: 1, 4, 152, 225>}, {pipeline_mode = #tpu.pipeline_mode<synchronous>, transform_indices = @transform_1, window_bounds = array<i64: 8, 152>}, {pipeline_mode = #tpu.pipeline_mode<synchronous>, transform_indices = @transform_2, window_bounds = array<i64: 8, 1>}, {pipeline_mode = #tpu.pipeline_mode<synchronous>, transform_indices = @transform_3, window_bounds = array<i64: 16, 225, 144>}, {pipeline_mode = #tpu.pipeline_mode<synchronous>, transform_indices = @transform_4, window_bounds = array<i64: 12, 128>}, {pipeline_mode = #tpu.pipeline_mode<synchronous>, transform_indices = @transform_5, window_bounds = array<i64: 12, 1>}, {pipeline_mode = #tpu.pipeline_mode<synchronous>, transform_indices = @transform_6, window_bounds = array<i64: 12, 36, 216>}, {pipeline_mode = #tpu.pipeline_mode<synchronous>, transform_indices = @transform_7, window_bounds = array<i64: 1, 216>}, {pipeline_mode = #tpu.pipeline_mode<synchronous>, transform_indices = @transform_8, window_bounds = array<i64: 216, 4>}, {pipeline_mode = #tpu.pipeline_mode<synchronous>, transform_indices = @transform_9, window_bounds = array<i64: 1, 4>}, {transform_indices = @transform_10, window_bounds = array<i64: 1, 1, 4>}]} {
    %c0 = arith.constant 0 : index
    %c0_0 = arith.constant 0 : index
    %0 = vector.load %arg2[%c0, %c0_0] : memref<8x152xf32, #tpu.memory_space<vmem>>, vector<8x152xf32>
    %c0_1 = arith.constant 0 : index
    %c0_2 = arith.constant 0 : index
    %c0_3 = arith.constant 0 : index
    %c0_4 = arith.constant 0 : index
    %1 = vector.load %arg1[%c0_1, %c0_2, %c0_3, %c0_4] : memref<1x4x152x225xf32, #tpu.memory_space<vmem>>, vector<1x1x152x225xf32>
    %2 = vector.shape_cast %1 : vector<1x1x152x225xf32> to vector<152x225xf32>
    %cst = arith.constant dense<0.000000e+00> : vector<8x225xf32>
    %3 = tpu.matmul %0, %2, %cst {dimension_numbers = #tpu.dot_dimension_numbers<[1], [0], [0], [1], [0, 0, 1, 1], [], []>} : vector<8x152xf32>, vector<152x225xf32>, vector<8x225xf32> -> vector<8x225xf32>
    %c0_5 = arith.constant 0 : index
    %c1 = arith.constant 1 : index
    %c0_6 = arith.constant 0 : index
    %c0_7 = arith.constant 0 : index
    %4 = vector.load %arg1[%c0_5, %c1, %c0_6, %c0_7] : memref<1x4x152x225xf32, #tpu.memory_space<vmem>>, vector<1x1x152x225xf32>
    %5 = vector.shape_cast %4 : vector<1x1x152x225xf32> to vector<152x225xf32>
    %cst_8 = arith.constant dense<0.000000e+00> : vector<8x225xf32>
    %6 = tpu.matmul %0, %5, %cst_8 {dimension_numbers = #tpu.dot_dimension_numbers<[1], [0], [0], [1], [0, 0, 1, 1], [], []>} : vector<8x152xf32>, vector<152x225xf32>, vector<8x225xf32> -> vector<8x225xf32>
    %7 = arith.maximumf %3, %6 : vector<8x225xf32>
    %c0_9 = arith.constant 0 : index
    %c2 = arith.constant 2 : index
    %c0_10 = arith.constant 0 : index
    %c0_11 = arith.constant 0 : index
    %8 = vector.load %arg1[%c0_9, %c2, %c0_10, %c0_11] : memref<1x4x152x225xf32, #tpu.memory_space<vmem>>, vector<1x1x152x225xf32>
    %9 = vector.shape_cast %8 : vector<1x1x152x225xf32> to vector<152x225xf32>
    %cst_12 = arith.constant dense<0.000000e+00> : vector<8x225xf32>
    %10 = tpu.matmul %0, %9, %cst_12 {dimension_numbers = #tpu.dot_dimension_numbers<[1], [0], [0], [1], [0, 0, 1, 1], [], []>} : vector<8x152xf32>, vector<152x225xf32>, vector<8x225xf32> -> vector<8x225xf32>
    %11 = arith.maximumf %7, %10 : vector<8x225xf32>
    %c0_13 = arith.constant 0 : index
    %c3 = arith.constant 3 : index
    %c0_14 = arith.constant 0 : index
    %c0_15 = arith.constant 0 : index
    %12 = vector.load %arg1[%c0_13, %c3, %c0_14, %c0_15] : memref<1x4x152x225xf32, #tpu.memory_space<vmem>>, vector<1x1x152x225xf32>
    %13 = vector.shape_cast %12 : vector<1x1x152x225xf32> to vector<152x225xf32>
    %cst_16 = arith.constant dense<0.000000e+00> : vector<8x225xf32>
    %14 = tpu.matmul %0, %13, %cst_16 {dimension_numbers = #tpu.dot_dimension_numbers<[1], [0], [0], [1], [0, 0, 1, 1], [], []>} : vector<8x152xf32>, vector<152x225xf32>, vector<8x225xf32> -> vector<8x225xf32>
    %15 = arith.maximumf %11, %14 : vector<8x225xf32>
    %c0_17 = arith.constant 0 : index
    %c0_18 = arith.constant 0 : index
    %16 = vector.load %arg3[%c0_17, %c0_18] : memref<8x1xf32, #tpu.memory_space<vmem>>, vector<8x1xf32>
    %17 = vector.broadcast %16 : vector<8x1xf32> to vector<8x225xf32>
    %18 = arith.addf %15, %17 : vector<8x225xf32>
    %cst_19 = arith.constant 0.000000e+00 : f32
    %19 = vector.broadcast %cst_19 : f32 to vector<8x225xf32>
    %20 = arith.maximumf %18, %19 : vector<8x225xf32>
    %c0_20 = arith.constant 0 : index
    %c0_21 = arith.constant 0 : index
    %c0_22 = arith.constant 0 : index
    %21 = vector.load %arg4[%c0_20, %c0_21, %c0_22] : memref<16x225x144xf32, #tpu.memory_space<vmem>>, vector<1x225x144xf32>
    %22 = vector.shape_cast %21 : vector<1x225x144xf32> to vector<225x144xf32>
    %cst_23 = arith.constant dense<0.000000e+00> : vector<8x144xf32>
    %23 = tpu.matmul %20, %22, %cst_23 {dimension_numbers = #tpu.dot_dimension_numbers<[1], [0], [0], [1], [0, 0, 1, 1], [], []>} : vector<8x225xf32>, vector<225x144xf32>, vector<8x144xf32> -> vector<8x144xf32>
    %c0_24 = arith.constant 0 : index
    %c0_25 = arith.constant 0 : index
    %24 = vector.load %arg12[%c0_24, %c0_25] : memref<128x144xf32, #tpu.memory_space<vmem>>, vector<8x144xf32>
    tpu.vector_store %arg12[%c0_24, %c0_25], %23 {strides = array<i32>} : memref<128x144xf32, #tpu.memory_space<vmem>>, vector<8x144xf32>,
    %c1_26 = arith.constant 1 : index
    %c0_27 = arith.constant 0 : index
    %c0_28 = arith.constant 0 : index
    %25 = vector.load %arg4[%c1_26, %c0_27, %c0_28] : memref<16x225x144xf32, #tpu.memory_space<vmem>>, vector<1x225x144xf32>
    %26 = vector.shape_cast %25 : vector<1x225x144xf32> to vector<225x144xf32>
    %cst_29 = arith.constant dense<0.000000e+00> : vector<8x144xf32>
    %27 = tpu.matmul %20, %26, %cst_29 {dimension_numbers = #tpu.dot_dimension_numbers<[1], [0], [0], [1], [0, 0, 1, 1], [], []>} : vector<8x225xf32>, vector<225x144xf32>, vector<8x144xf32> -> vector<8x144xf32>
    %c8 = arith.constant 8 : index
    %c0_30 = arith.constant 0 : index
    %28 = vector.load %arg12[%c8, %c0_30] : memref<128x144xf32, #tpu.memory_space<vmem>>, vector<8x144xf32>
    tpu.vector_store %arg12[%c8, %c0_30], %27 {strides = array<i32>} : memref<128x144xf32, #tpu.memory_space<vmem>>, vector<8x144xf32>,
    %c2_31 = arith.constant 2 : index
    %c0_32 = arith.constant 0 : index
    %c0_33 = arith.constant 0 : index
    %29 = vector.load %arg4[%c2_31, %c0_32, %c0_33] : memref<16x225x144xf32, #tpu.memory_space<vmem>>, vector<1x225x144xf32>
    %30 = vector.shape_cast %29 : vector<1x225x144xf32> to vector<225x144xf32>
    %cst_34 = arith.constant dense<0.000000e+00> : vector<8x144xf32>
    %31 = tpu.matmul %20, %30, %cst_34 {dimension_numbers = #tpu.dot_dimension_numbers<[1], [0], [0], [1], [0, 0, 1, 1], [], []>} : vector<8x225xf32>, vector<225x144xf32>, vector<8x144xf32> -> vector<8x144xf32>
    %c16 = arith.constant 16 : index
    %c0_35 = arith.constant 0 : index
    %32 = vector.load %arg12[%c16, %c0_35] : memref<128x144xf32, #tpu.memory_space<vmem>>, vector<8x144xf32>
    tpu.vector_store %arg12[%c16, %c0_35], %31 {strides = array<i32>} : memref<128x144xf32, #tpu.memory_space<vmem>>, vector<8x144xf32>,
    %c3_36 = arith.constant 3 : index
    %c0_37 = arith.constant 0 : index
    %c0_38 = arith.constant 0 : index
    %33 = vector.load %arg4[%c3_36, %c0_37, %c0_38] : memref<16x225x144xf32, #tpu.memory_space<vmem>>, vector<1x225x144xf32>
    %34 = vector.shape_cast %33 : vector<1x225x144xf32> to vector<225x144xf32>
    %cst_39 = arith.constant dense<0.000000e+00> : vector<8x144xf32>
    %35 = tpu.matmul %20, %34, %cst_39 {dimension_numbers = #tpu.dot_dimension_numbers<[1], [0], [0], [1], [0, 0, 1, 1], [], []>} : vector<8x225xf32>, vector<225x144xf32>, vector<8x144xf32> -> vector<8x144xf32>
    %c24 = arith.constant 24 : index
    %c0_40 = arith.constant 0 : index
    %36 = vector.load %arg12[%c24, %c0_40] : memref<128x144xf32, #tpu.memory_space<vmem>>, vector<8x144xf32>
    tpu.vector_store %arg12[%c24, %c0_40], %35 {strides = array<i32>} : memref<128x144xf32, #tpu.memory_space<vmem>>, vector<8x144xf32>,
    %c4 = arith.constant 4 : index
    %c0_41 = arith.constant 0 : index
    %c0_42 = arith.constant 0 : index
    %37 = vector.load %arg4[%c4, %c0_41, %c0_42] : memref<16x225x144xf32, #tpu.memory_space<vmem>>, vector<1x225x144xf32>
    %38 = vector.shape_cast %37 : vector<1x225x144xf32> to vector<225x144xf32>
    %cst_43 = arith.constant dense<0.000000e+00> : vector<8x144xf32>
    %39 = tpu.matmul %20, %38, %cst_43 {dimension_numbers = #tpu.dot_dimension_numbers<[1], [0], [0], [1], [0, 0, 1, 1], [], []>} : vector<8x225xf32>, vector<225x144xf32>, vector<8x144xf32> -> vector<8x144xf32>
    %c32 = arith.constant 32 : index
    %c0_44 = arith.constant 0 : index
    %40 = vector.load %arg12[%c32, %c0_44] : memref<128x144xf32, #tpu.memory_space<vmem>>, vector<8x144xf32>
    tpu.vector_store %arg12[%c32, %c0_44], %39 {strides = array<i32>} : memref<128x144xf32, #tpu.memory_space<vmem>>, vector<8x144xf32>,
    %c5 = arith.constant 5 : index
    %c0_45 = arith.constant 0 : index
    %c0_46 = arith.constant 0 : index
    %41 = vector.load %arg4[%c5, %c0_45, %c0_46] : memref<16x225x144xf32, #tpu.memory_space<vmem>>, vector<1x225x144xf32>
    %42 = vector.shape_cast %41 : vector<1x225x144xf32> to vector<225x144xf32>
    %cst_47 = arith.constant dense<0.000000e+00> : vector<8x144xf32>
    %43 = tpu.matmul %20, %42, %cst_47 {dimension_numbers = #tpu.dot_dimension_numbers<[1], [0], [0], [1], [0, 0, 1, 1], [], []>} : vector<8x225xf32>, vector<225x144xf32>, vector<8x144xf32> -> vector<8x144xf32>
    %c40 = arith.constant 40 : index
    %c0_48 = arith.constant 0 : index
    %44 = vector.load %arg12[%c40, %c0_48] : memref<128x144xf32, #tpu.memory_space<vmem>>, vector<8x144xf32>
    tpu.vector_store %arg12[%c40, %c0_48], %43 {strides = array<i32>} : memref<128x144xf32, #tpu.memory_space<vmem>>, vector<8x144xf32>,
    %c6 = arith.constant 6 : index
    %c0_49 = arith.constant 0 : index
    %c0_50 = arith.constant 0 : index
    %45 = vector.load %arg4[%c6, %c0_49, %c0_50] : memref<16x225x144xf32, #tpu.memory_space<vmem>>, vector<1x225x144xf32>
    %46 = vector.shape_cast %45 : vector<1x225x144xf32> to vector<225x144xf32>
    %cst_51 = arith.constant dense<0.000000e+00> : vector<8x144xf32>
    %47 = tpu.matmul %20, %46, %cst_51 {dimension_numbers = #tpu.dot_dimension_numbers<[1], [0], [0], [1], [0, 0, 1, 1], [], []>} : vector<8x225xf32>, vector<225x144xf32>, vector<8x144xf32> -> vector<8x144xf32>
    %c48 = arith.constant 48 : index
    %c0_52 = arith.constant 0 : index
    %48 = vector.load %arg12[%c48, %c0_52] : memref<128x144xf32, #tpu.memory_space<vmem>>, vector<8x144xf32>
    tpu.vector_store %arg12[%c48, %c0_52], %47 {strides = array<i32>} : memref<128x144xf32, #tpu.memory_space<vmem>>, vector<8x144xf32>,
    %c7 = arith.constant 7 : index
    %c0_53 = arith.constant 0 : index
    %c0_54 = arith.constant 0 : index
    %49 = vector.load %arg4[%c7, %c0_53, %c0_54] : memref<16x225x144xf32, #tpu.memory_space<vmem>>, vector<1x225x144xf32>
    %50 = vector.shape_cast %49 : vector<1x225x144xf32> to vector<225x144xf32>
    %cst_55 = arith.constant dense<0.000000e+00> : vector<8x144xf32>
    %51 = tpu.matmul %20, %50, %cst_55 {dimension_numbers = #tpu.dot_dimension_numbers<[1], [0], [0], [1], [0, 0, 1, 1], [], []>} : vector<8x225xf32>, vector<225x144xf32>, vector<8x144xf32> -> vector<8x144xf32>
    %c56 = arith.constant 56 : index
    %c0_56 = arith.constant 0 : index
    %52 = vector.load %arg12[%c56, %c0_56] : memref<128x144xf32, #tpu.memory_space<vmem>>, vector<8x144xf32>
    tpu.vector_store %arg12[%c56, %c0_56], %51 {strides = array<i32>} : memref<128x144xf32, #tpu.memory_space<vmem>>, vector<8x144xf32>,
    %c8_57 = arith.constant 8 : index
    %c0_58 = arith.constant 0 : index
    %c0_59 = arith.constant 0 : index
    %53 = vector.load %arg4[%c8_57, %c0_58, %c0_59] : memref<16x225x144xf32, #tpu.memory_space<vmem>>, vector<1x225x144xf32>
    %54 = vector.shape_cast %53 : vector<1x225x144xf32> to vector<225x144xf32>
    %cst_60 = arith.constant dense<0.000000e+00> : vector<8x144xf32>
    %55 = tpu.matmul %20, %54, %cst_60 {dimension_numbers = #tpu.dot_dimension_numbers<[1], [0], [0], [1], [0, 0, 1, 1], [], []>} : vector<8x225xf32>, vector<225x144xf32>, vector<8x144xf32> -> vector<8x144xf32>
    %c64 = arith.constant 64 : index
    %c0_61 = arith.constant 0 : index
    %56 = vector.load %arg12[%c64, %c0_61] : memref<128x144xf32, #tpu.memory_space<vmem>>, vector<8x144xf32>
    tpu.vector_store %arg12[%c64, %c0_61], %55 {strides = array<i32>} : memref<128x144xf32, #tpu.memory_space<vmem>>, vector<8x144xf32>,
    %c9 = arith.constant 9 : index
    %c0_62 = arith.constant 0 : index
    %c0_63 = arith.constant 0 : index
    %57 = vector.load %arg4[%c9, %c0_62, %c0_63] : memref<16x225x144xf32, #tpu.memory_space<vmem>>, vector<1x225x144xf32>
    %58 = vector.shape_cast %57 : vector<1x225x144xf32> to vector<225x144xf32>
    %cst_64 = arith.constant dense<0.000000e+00> : vector<8x144xf32>
    %59 = tpu.matmul %20, %58, %cst_64 {dimension_numbers = #tpu.dot_dimension_numbers<[1], [0], [0], [1], [0, 0, 1, 1], [], []>} : vector<8x225xf32>, vector<225x144xf32>, vector<8x144xf32> -> vector<8x144xf32>
    %c72 = arith.constant 72 : index
    %c0_65 = arith.constant 0 : index
    %60 = vector.load %arg12[%c72, %c0_65] : memref<128x144xf32, #tpu.memory_space<vmem>>, vector<8x144xf32>
    tpu.vector_store %arg12[%c72, %c0_65], %59 {strides = array<i32>} : memref<128x144xf32, #tpu.memory_space<vmem>>, vector<8x144xf32>,
    %c10 = arith.constant 10 : index
    %c0_66 = arith.constant 0 : index
    %c0_67 = arith.constant 0 : index
    %61 = vector.load %arg4[%c10, %c0_66, %c0_67] : memref<16x225x144xf32, #tpu.memory_space<vmem>>, vector<1x225x144xf32>
    %62 = vector.shape_cast %61 : vector<1x225x144xf32> to vector<225x144xf32>
    %cst_68 = arith.constant dense<0.000000e+00> : vector<8x144xf32>
    %63 = tpu.matmul %20, %62, %cst_68 {dimension_numbers = #tpu.dot_dimension_numbers<[1], [0], [0], [1], [0, 0, 1, 1], [], []>} : vector<8x225xf32>, vector<225x144xf32>, vector<8x144xf32> -> vector<8x144xf32>
    %c80 = arith.constant 80 : index
    %c0_69 = arith.constant 0 : index
    %64 = vector.load %arg12[%c80, %c0_69] : memref<128x144xf32, #tpu.memory_space<vmem>>, vector<8x144xf32>
    tpu.vector_store %arg12[%c80, %c0_69], %63 {strides = array<i32>} : memref<128x144xf32, #tpu.memory_space<vmem>>, vector<8x144xf32>,
    %c11 = arith.constant 11 : index
    %c0_70 = arith.constant 0 : index
    %c0_71 = arith.constant 0 : index
    %65 = vector.load %arg4[%c11, %c0_70, %c0_71] : memref<16x225x144xf32, #tpu.memory_space<vmem>>, vector<1x225x144xf32>
    %66 = vector.shape_cast %65 : vector<1x225x144xf32> to vector<225x144xf32>
    %cst_72 = arith.constant dense<0.000000e+00> : vector<8x144xf32>
    %67 = tpu.matmul %20, %66, %cst_72 {dimension_numbers = #tpu.dot_dimension_numbers<[1], [0], [0], [1], [0, 0, 1, 1], [], []>} : vector<8x225xf32>, vector<225x144xf32>, vector<8x144xf32> -> vector<8x144xf32>
    %c88 = arith.constant 88 : index
    %c0_73 = arith.constant 0 : index
    %68 = vector.load %arg12[%c88, %c0_73] : memref<128x144xf32, #tpu.memory_space<vmem>>, vector<8x144xf32>
    tpu.vector_store %arg12[%c88, %c0_73], %67 {strides = array<i32>} : memref<128x144xf32, #tpu.memory_space<vmem>>, vector<8x144xf32>,
    %c12 = arith.constant 12 : index
    %c0_74 = arith.constant 0 : index
    %c0_75 = arith.constant 0 : index
    %69 = vector.load %arg4[%c12, %c0_74, %c0_75] : memref<16x225x144xf32, #tpu.memory_space<vmem>>, vector<1x225x144xf32>
    %70 = vector.shape_cast %69 : vector<1x225x144xf32> to vector<225x144xf32>
    %cst_76 = arith.constant dense<0.000000e+00> : vector<8x144xf32>
    %71 = tpu.matmul %20, %70, %cst_76 {dimension_numbers = #tpu.dot_dimension_numbers<[1], [0], [0], [1], [0, 0, 1, 1], [], []>} : vector<8x225xf32>, vector<225x144xf32>, vector<8x144xf32> -> vector<8x144xf32>
    %c96 = arith.constant 96 : index
    %c0_77 = arith.constant 0 : index
    %72 = vector.load %arg12[%c96, %c0_77] : memref<128x144xf32, #tpu.memory_space<vmem>>, vector<8x144xf32>
    tpu.vector_store %arg12[%c96, %c0_77], %71 {strides = array<i32>} : memref<128x144xf32, #tpu.memory_space<vmem>>, vector<8x144xf32>,
    %c13 = arith.constant 13 : index
    %c0_78 = arith.constant 0 : index
    %c0_79 = arith.constant 0 : index
    %73 = vector.load %arg4[%c13, %c0_78, %c0_79] : memref<16x225x144xf32, #tpu.memory_space<vmem>>, vector<1x225x144xf32>
    %74 = vector.shape_cast %73 : vector<1x225x144xf32> to vector<225x144xf32>
    %cst_80 = arith.constant dense<0.000000e+00> : vector<8x144xf32>
    %75 = tpu.matmul %20, %74, %cst_80 {dimension_numbers = #tpu.dot_dimension_numbers<[1], [0], [0], [1], [0, 0, 1, 1], [], []>} : vector<8x225xf32>, vector<225x144xf32>, vector<8x144xf32> -> vector<8x144xf32>
    %c104 = arith.constant 104 : index
    %c0_81 = arith.constant 0 : index
    %76 = vector.load %arg12[%c104, %c0_81] : memref<128x144xf32, #tpu.memory_space<vmem>>, vector<8x144xf32>
    tpu.vector_store %arg12[%c104, %c0_81], %75 {strides = array<i32>} : memref<128x144xf32, #tpu.memory_space<vmem>>, vector<8x144xf32>,
    %c14 = arith.constant 14 : index
    %c0_82 = arith.constant 0 : index
    %c0_83 = arith.constant 0 : index
    %77 = vector.load %arg4[%c14, %c0_82, %c0_83] : memref<16x225x144xf32, #tpu.memory_space<vmem>>, vector<1x225x144xf32>
    %78 = vector.shape_cast %77 : vector<1x225x144xf32> to vector<225x144xf32>
    %cst_84 = arith.constant dense<0.000000e+00> : vector<8x144xf32>
    %79 = tpu.matmul %20, %78, %cst_84 {dimension_numbers = #tpu.dot_dimension_numbers<[1], [0], [0], [1], [0, 0, 1, 1], [], []>} : vector<8x225xf32>, vector<225x144xf32>, vector<8x144xf32> -> vector<8x144xf32>
    %c112 = arith.constant 112 : index
    %c0_85 = arith.constant 0 : index
    %80 = vector.load %arg12[%c112, %c0_85] : memref<128x144xf32, #tpu.memory_space<vmem>>, vector<8x144xf32>
    tpu.vector_store %arg12[%c112, %c0_85], %79 {strides = array<i32>} : memref<128x144xf32, #tpu.memory_space<vmem>>, vector<8x144xf32>,
    %c15 = arith.constant 15 : index
    %c0_86 = arith.constant 0 : index
    %c0_87 = arith.constant 0 : index
    %81 = vector.load %arg4[%c15, %c0_86, %c0_87] : memref<16x225x144xf32, #tpu.memory_space<vmem>>, vector<1x225x144xf32>
    %82 = vector.shape_cast %81 : vector<1x225x144xf32> to vector<225x144xf32>
    %cst_88 = arith.constant dense<0.000000e+00> : vector<8x144xf32>
    %83 = tpu.matmul %20, %82, %cst_88 {dimension_numbers = #tpu.dot_dimension_numbers<[1], [0], [0], [1], [0, 0, 1, 1], [], []>} : vector<8x225xf32>, vector<225x144xf32>, vector<8x144xf32> -> vector<8x144xf32>
    %c120 = arith.constant 120 : index
    %c0_89 = arith.constant 0 : index
    %84 = vector.load %arg12[%c120, %c0_89] : memref<128x144xf32, #tpu.memory_space<vmem>>, vector<8x144xf32>
    tpu.vector_store %arg12[%c120, %c0_89], %83 {strides = array<i32>} : memref<128x144xf32, #tpu.memory_space<vmem>>, vector<8x144xf32>,
    %c0_90 = arith.constant 0 : index
    %c0_91 = arith.constant 0 : index
    %85 = vector.load %arg5[%c0_90, %c0_91] : memref<12x128xf32, #tpu.memory_space<vmem>>, vector<12x128xf32>
    %c0_92 = arith.constant 0 : index
    %c0_93 = arith.constant 0 : index
    %86 = vector.load %arg12[%c0_92, %c0_93] : memref<128x144xf32, #tpu.memory_space<vmem>>, vector<128x144xf32>
    %cst_94 = arith.constant dense<0.000000e+00> : vector<12x144xf32>
    %87 = tpu.matmul %85, %86, %cst_94 {dimension_numbers = #tpu.dot_dimension_numbers<[1], [0], [0], [1], [0, 0, 1, 1], [], []>} : vector<12x128xf32>, vector<128x144xf32>, vector<12x144xf32> -> vector<12x144xf32>
    %88 = vector.extract_strided_slice %87 {offsets = [0, 0], sizes = [12, 36], strides = [1, 1]} : vector<12x144xf32> to vector<12x36xf32>
    %89 = vector.extract_strided_slice %87 {offsets = [0, 36], sizes = [12, 36], strides = [1, 1]} : vector<12x144xf32> to vector<12x36xf32>
    %90 = arith.maximumf %88, %89 : vector<12x36xf32>
    %91 = vector.extract_strided_slice %87 {offsets = [0, 72], sizes = [12, 36], strides = [1, 1]} : vector<12x144xf32> to vector<12x36xf32>
    %92 = vector.extract_strided_slice %87 {offsets = [0, 108], sizes = [12, 36], strides = [1, 1]} : vector<12x144xf32> to vector<12x36xf32>
    %93 = arith.maximumf %91, %92 : vector<12x36xf32>
    %94 = arith.maximumf %90, %93 : vector<12x36xf32>
    %c0_95 = arith.constant 0 : index
    %c0_96 = arith.constant 0 : index
    %95 = vector.load %arg6[%c0_95, %c0_96] : memref<12x1xf32, #tpu.memory_space<vmem>>, vector<12x1xf32>
    %96 = vector.broadcast %95 : vector<12x1xf32> to vector<12x36xf32>
    %97 = arith.addf %94, %96 : vector<12x36xf32>
    %cst_97 = arith.constant 0.000000e+00 : f32
    %98 = vector.broadcast %cst_97 : f32 to vector<12x36xf32>
    %99 = arith.maximumf %97, %98 : vector<12x36xf32>
    %c0_98 = arith.constant 0 : index
    %c0_99 = arith.constant 0 : index
    %100 = vector.load %arg8[%c0_98, %c0_99] : memref<1x216xf32, #tpu.memory_space<vmem>>, vector<1x216xf32>
    %101 = vector.extract_strided_slice %99 {offsets = [0, 0], sizes = [1, 36], strides = [1, 1]} : vector<12x36xf32> to vector<1x36xf32>
    %c0_100 = arith.constant 0 : index
    %c0_101 = arith.constant 0 : index
    %c0_102 = arith.constant 0 : index
    %102 = vector.load %arg7[%c0_100, %c0_101, %c0_102] : memref<12x36x216xf32, #tpu.memory_space<vmem>>, vector<1x36x216xf32>
    %103 = vector.shape_cast %102 : vector<1x36x216xf32> to vector<36x216xf32>
    %cst_103 = arith.constant dense<0.000000e+00> : vector<1x216xf32>
    %104 = tpu.matmul %101, %103, %cst_103 {dimension_numbers = #tpu.dot_dimension_numbers<[1], [0], [0], [1], [0, 0, 1, 1], [], []>} : vector<1x36xf32>, vector<36x216xf32>, vector<1x216xf32> -> vector<1x216xf32>
    %105 = arith.addf %100, %104 : vector<1x216xf32>
    %106 = vector.extract_strided_slice %99 {offsets = [1, 0], sizes = [1, 36], strides = [1, 1]} : vector<12x36xf32> to vector<1x36xf32>
    %c1_104 = arith.constant 1 : index
    %c0_105 = arith.constant 0 : index
    %c0_106 = arith.constant 0 : index
    %107 = vector.load %arg7[%c1_104, %c0_105, %c0_106] : memref<12x36x216xf32, #tpu.memory_space<vmem>>, vector<1x36x216xf32>
    %108 = vector.shape_cast %107 : vector<1x36x216xf32> to vector<36x216xf32>
    %cst_107 = arith.constant dense<0.000000e+00> : vector<1x216xf32>
    %109 = tpu.matmul %106, %108, %cst_107 {dimension_numbers = #tpu.dot_dimension_numbers<[1], [0], [0], [1], [0, 0, 1, 1], [], []>} : vector<1x36xf32>, vector<36x216xf32>, vector<1x216xf32> -> vector<1x216xf32>
    %110 = arith.addf %105, %109 : vector<1x216xf32>
    %111 = vector.extract_strided_slice %99 {offsets = [2, 0], sizes = [1, 36], strides = [1, 1]} : vector<12x36xf32> to vector<1x36xf32>
    %c2_108 = arith.constant 2 : index
    %c0_109 = arith.constant 0 : index
    %c0_110 = arith.constant 0 : index
    %112 = vector.load %arg7[%c2_108, %c0_109, %c0_110] : memref<12x36x216xf32, #tpu.memory_space<vmem>>, vector<1x36x216xf32>
    %113 = vector.shape_cast %112 : vector<1x36x216xf32> to vector<36x216xf32>
    %cst_111 = arith.constant dense<0.000000e+00> : vector<1x216xf32>
    %114 = tpu.matmul %111, %113, %cst_111 {dimension_numbers = #tpu.dot_dimension_numbers<[1], [0], [0], [1], [0, 0, 1, 1], [], []>} : vector<1x36xf32>, vector<36x216xf32>, vector<1x216xf32> -> vector<1x216xf32>
    %115 = arith.addf %110, %114 : vector<1x216xf32>
    %116 = vector.extract_strided_slice %99 {offsets = [3, 0], sizes = [1, 36], strides = [1, 1]} : vector<12x36xf32> to vector<1x36xf32>
    %c3_112 = arith.constant 3 : index
    %c0_113 = arith.constant 0 : index
    %c0_114 = arith.constant 0 : index
    %117 = vector.load %arg7[%c3_112, %c0_113, %c0_114] : memref<12x36x216xf32, #tpu.memory_space<vmem>>, vector<1x36x216xf32>
    %118 = vector.shape_cast %117 : vector<1x36x216xf32> to vector<36x216xf32>
    %cst_115 = arith.constant dense<0.000000e+00> : vector<1x216xf32>
    %119 = tpu.matmul %116, %118, %cst_115 {dimension_numbers = #tpu.dot_dimension_numbers<[1], [0], [0], [1], [0, 0, 1, 1], [], []>} : vector<1x36xf32>, vector<36x216xf32>, vector<1x216xf32> -> vector<1x216xf32>
    %120 = arith.addf %115, %119 : vector<1x216xf32>
    %121 = vector.extract_strided_slice %99 {offsets = [4, 0], sizes = [1, 36], strides = [1, 1]} : vector<12x36xf32> to vector<1x36xf32>
    %c4_116 = arith.constant 4 : index
    %c0_117 = arith.constant 0 : index
    %c0_118 = arith.constant 0 : index
    %122 = vector.load %arg7[%c4_116, %c0_117, %c0_118] : memref<12x36x216xf32, #tpu.memory_space<vmem>>, vector<1x36x216xf32>
    %123 = vector.shape_cast %122 : vector<1x36x216xf32> to vector<36x216xf32>
    %cst_119 = arith.constant dense<0.000000e+00> : vector<1x216xf32>
    %124 = tpu.matmul %121, %123, %cst_119 {dimension_numbers = #tpu.dot_dimension_numbers<[1], [0], [0], [1], [0, 0, 1, 1], [], []>} : vector<1x36xf32>, vector<36x216xf32>, vector<1x216xf32> -> vector<1x216xf32>
    %125 = arith.addf %120, %124 : vector<1x216xf32>
    %126 = vector.extract_strided_slice %99 {offsets = [5, 0], sizes = [1, 36], strides = [1, 1]} : vector<12x36xf32> to vector<1x36xf32>
    %c5_120 = arith.constant 5 : index
    %c0_121 = arith.constant 0 : index
    %c0_122 = arith.constant 0 : index
    %127 = vector.load %arg7[%c5_120, %c0_121, %c0_122] : memref<12x36x216xf32, #tpu.memory_space<vmem>>, vector<1x36x216xf32>
    %128 = vector.shape_cast %127 : vector<1x36x216xf32> to vector<36x216xf32>
    %cst_123 = arith.constant dense<0.000000e+00> : vector<1x216xf32>
    %129 = tpu.matmul %126, %128, %cst_123 {dimension_numbers = #tpu.dot_dimension_numbers<[1], [0], [0], [1], [0, 0, 1, 1], [], []>} : vector<1x36xf32>, vector<36x216xf32>, vector<1x216xf32> -> vector<1x216xf32>
    %130 = arith.addf %125, %129 : vector<1x216xf32>
    %131 = vector.extract_strided_slice %99 {offsets = [6, 0], sizes = [1, 36], strides = [1, 1]} : vector<12x36xf32> to vector<1x36xf32>
    %c6_124 = arith.constant 6 : index
    %c0_125 = arith.constant 0 : index
    %c0_126 = arith.constant 0 : index
    %132 = vector.load %arg7[%c6_124, %c0_125, %c0_126] : memref<12x36x216xf32, #tpu.memory_space<vmem>>, vector<1x36x216xf32>
    %133 = vector.shape_cast %132 : vector<1x36x216xf32> to vector<36x216xf32>
    %cst_127 = arith.constant dense<0.000000e+00> : vector<1x216xf32>
    %134 = tpu.matmul %131, %133, %cst_127 {dimension_numbers = #tpu.dot_dimension_numbers<[1], [0], [0], [1], [0, 0, 1, 1], [], []>} : vector<1x36xf32>, vector<36x216xf32>, vector<1x216xf32> -> vector<1x216xf32>
    %135 = arith.addf %130, %134 : vector<1x216xf32>
    %136 = vector.extract_strided_slice %99 {offsets = [7, 0], sizes = [1, 36], strides = [1, 1]} : vector<12x36xf32> to vector<1x36xf32>
    %c7_128 = arith.constant 7 : index
    %c0_129 = arith.constant 0 : index
    %c0_130 = arith.constant 0 : index
    %137 = vector.load %arg7[%c7_128, %c0_129, %c0_130] : memref<12x36x216xf32, #tpu.memory_space<vmem>>, vector<1x36x216xf32>
    %138 = vector.shape_cast %137 : vector<1x36x216xf32> to vector<36x216xf32>
    %cst_131 = arith.constant dense<0.000000e+00> : vector<1x216xf32>
    %139 = tpu.matmul %136, %138, %cst_131 {dimension_numbers = #tpu.dot_dimension_numbers<[1], [0], [0], [1], [0, 0, 1, 1], [], []>} : vector<1x36xf32>, vector<36x216xf32>, vector<1x216xf32> -> vector<1x216xf32>
    %140 = arith.addf %135, %139 : vector<1x216xf32>
    %141 = vector.extract_strided_slice %99 {offsets = [8, 0], sizes = [1, 36], strides = [1, 1]} : vector<12x36xf32> to vector<1x36xf32>
    %c8_132 = arith.constant 8 : index
    %c0_133 = arith.constant 0 : index
    %c0_134 = arith.constant 0 : index
    %142 = vector.load %arg7[%c8_132, %c0_133, %c0_134] : memref<12x36x216xf32, #tpu.memory_space<vmem>>, vector<1x36x216xf32>
    %143 = vector.shape_cast %142 : vector<1x36x216xf32> to vector<36x216xf32>
    %cst_135 = arith.constant dense<0.000000e+00> : vector<1x216xf32>
    %144 = tpu.matmul %141, %143, %cst_135 {dimension_numbers = #tpu.dot_dimension_numbers<[1], [0], [0], [1], [0, 0, 1, 1], [], []>} : vector<1x36xf32>, vector<36x216xf32>, vector<1x216xf32> -> vector<1x216xf32>
    %145 = arith.addf %140, %144 : vector<1x216xf32>
    %146 = vector.extract_strided_slice %99 {offsets = [9, 0], sizes = [1, 36], strides = [1, 1]} : vector<12x36xf32> to vector<1x36xf32>
    %c9_136 = arith.constant 9 : index
    %c0_137 = arith.constant 0 : index
    %c0_138 = arith.constant 0 : index
    %147 = vector.load %arg7[%c9_136, %c0_137, %c0_138] : memref<12x36x216xf32, #tpu.memory_space<vmem>>, vector<1x36x216xf32>
    %148 = vector.shape_cast %147 : vector<1x36x216xf32> to vector<36x216xf32>
    %cst_139 = arith.constant dense<0.000000e+00> : vector<1x216xf32>
    %149 = tpu.matmul %146, %148, %cst_139 {dimension_numbers = #tpu.dot_dimension_numbers<[1], [0], [0], [1], [0, 0, 1, 1], [], []>} : vector<1x36xf32>, vector<36x216xf32>, vector<1x216xf32> -> vector<1x216xf32>
    %150 = arith.addf %145, %149 : vector<1x216xf32>
    %151 = vector.extract_strided_slice %99 {offsets = [10, 0], sizes = [1, 36], strides = [1, 1]} : vector<12x36xf32> to vector<1x36xf32>
    %c10_140 = arith.constant 10 : index
    %c0_141 = arith.constant 0 : index
    %c0_142 = arith.constant 0 : index
    %152 = vector.load %arg7[%c10_140, %c0_141, %c0_142] : memref<12x36x216xf32, #tpu.memory_space<vmem>>, vector<1x36x216xf32>
    %153 = vector.shape_cast %152 : vector<1x36x216xf32> to vector<36x216xf32>
    %cst_143 = arith.constant dense<0.000000e+00> : vector<1x216xf32>
    %154 = tpu.matmul %151, %153, %cst_143 {dimension_numbers = #tpu.dot_dimension_numbers<[1], [0], [0], [1], [0, 0, 1, 1], [], []>} : vector<1x36xf32>, vector<36x216xf32>, vector<1x216xf32> -> vector<1x216xf32>
    %155 = arith.addf %150, %154 : vector<1x216xf32>
    %156 = vector.extract_strided_slice %99 {offsets = [11, 0], sizes = [1, 36], strides = [1, 1]} : vector<12x36xf32> to vector<1x36xf32>
    %c11_144 = arith.constant 11 : index
    %c0_145 = arith.constant 0 : index
    %c0_146 = arith.constant 0 : index
    %157 = vector.load %arg7[%c11_144, %c0_145, %c0_146] : memref<12x36x216xf32, #tpu.memory_space<vmem>>, vector<1x36x216xf32>
    %158 = vector.shape_cast %157 : vector<1x36x216xf32> to vector<36x216xf32>
    %cst_147 = arith.constant dense<0.000000e+00> : vector<1x216xf32>
    %159 = tpu.matmul %156, %158, %cst_147 {dimension_numbers = #tpu.dot_dimension_numbers<[1], [0], [0], [1], [0, 0, 1, 1], [], []>} : vector<1x36xf32>, vector<36x216xf32>, vector<1x216xf32> -> vector<1x216xf32>
    %160 = arith.addf %155, %159 : vector<1x216xf32>
    %cst_148 = arith.constant 0.000000e+00 : f32
    %161 = vector.broadcast %cst_148 : f32 to vector<1x216xf32>
    %162 = arith.maximumf %160, %161 : vector<1x216xf32>
    %c0_149 = arith.constant 0 : index
    %c0_150 = arith.constant 0 : index
    %163 = vector.load %arg9[%c0_149, %c0_150] : memref<216x4xf32, #tpu.memory_space<vmem>>, vector<216x4xf32>
    %cst_151 = arith.constant dense<0.000000e+00> : vector<1x4xf32>
    %164 = tpu.matmul %162, %163, %cst_151 {dimension_numbers = #tpu.dot_dimension_numbers<[1], [0], [0], [1], [0, 0, 1, 1], [], []>} : vector<1x216xf32>, vector<216x4xf32>, vector<1x4xf32> -> vector<1x4xf32>
    %c0_152 = arith.constant 0 : index
    %c0_153 = arith.constant 0 : index
    %165 = vector.load %arg10[%c0_152, %c0_153] : memref<1x4xf32, #tpu.memory_space<vmem>>, vector<1x4xf32>
    %166 = arith.addf %164, %165 : vector<1x4xf32>
    %c0_154 = arith.constant 0 : index
    %c0_155 = arith.constant 0 : index
    %c0_156 = arith.constant 0 : index
    %167 = vector.load %arg11[%c0_154, %c0_155, %c0_156] : memref<1x1x4xf32, #tpu.memory_space<vmem>>, vector<1x1x4xf32>
    %168 = vector.shape_cast %167 : vector<1x1x4xf32> to vector<1x4xf32>
    %169 = vector.shape_cast %166 : vector<1x4xf32> to vector<1x1x4xf32>
    tpu.vector_store %arg11[%c0_154, %c0_155, %c0_156], %169 {strides = array<i32>} : memref<1x1x4xf32, #tpu.memory_space<vmem>>, vector<1x1x4xf32>,
    return
  }
  func.func @transform_0(%arg0: i32) -> (i32, i32, i32, i32) {
    %c0_i32 = arith.constant 0 : i32
    %c0_i32_0 = arith.constant 0 : i32
    %c0_i32_1 = arith.constant 0 : i32
    %c0_i32_2 = arith.constant 0 : i32
    return %arg0, %c0_i32, %c0_i32_0, %c0_i32_1 : i32, i32, i32, i32
  }
  func.func @transform_1(%arg0: i32) -> (i32, i32) {
    %c0_i32 = arith.constant 0 : i32
    %c0_i32_0 = arith.constant 0 : i32
    %c0_i32_1 = arith.constant 0 : i32
    return %c0_i32, %c0_i32_0 : i32, i32
  }
  func.func @transform_2(%arg0: i32) -> (i32, i32) {
    %c0_i32 = arith.constant 0 : i32
    %c0_i32_0 = arith.constant 0 : i32
    %c0_i32_1 = arith.constant 0 : i32
    return %c0_i32, %c0_i32_0 : i32, i32
  }
  func.func @transform_3(%arg0: i32) -> (i32, i32, i32) {
    %c0_i32 = arith.constant 0 : i32
    %c0_i32_0 = arith.constant 0 : i32
    %c0_i32_1 = arith.constant 0 : i32
    %c0_i32_2 = arith.constant 0 : i32
    return %c0_i32, %c0_i32_0, %c0_i32_1 : i32, i32, i32
  }
  func.func @transform_4(%arg0: i32) -> (i32, i32) {
    %c0_i32 = arith.constant 0 : i32
    %c0_i32_0 = arith.constant 0 : i32
    %c0_i32_1 = arith.constant 0 : i32
    return %c0_i32, %c0_i32_0 : i32, i32
  }
  func.func @transform_5(%arg0: i32) -> (i32, i32) {
    %c0_i32 = arith.constant 0 : i32
    %c0_i32_0 = arith.constant 0 : i32
    %c0_i32_1 = arith.constant 0 : i32
    return %c0_i32, %c0_i32_0 : i32, i32
  }
  func.func @transform_6(%arg0: i32) -> (i32, i32, i32) {
    %c0_i32 = arith.constant 0 : i32
    %c0_i32_0 = arith.constant 0 : i32
    %c0_i32_1 = arith.constant 0 : i32
    %c0_i32_2 = arith.constant 0 : i32
    return %c0_i32, %c0_i32_0, %c0_i32_1 : i32, i32, i32
  }
  func.func @transform_7(%arg0: i32) -> (i32, i32) {
    %c0_i32 = arith.constant 0 : i32
    %c0_i32_0 = arith.constant 0 : i32
    %c0_i32_1 = arith.constant 0 : i32
    return %c0_i32, %c0_i32_0 : i32, i32
  }
  func.func @transform_8(%arg0: i32) -> (i32, i32) {
    %c0_i32 = arith.constant 0 : i32
    %c0_i32_0 = arith.constant 0 : i32
    %c0_i32_1 = arith.constant 0 : i32
    return %c0_i32, %c0_i32_0 : i32, i32
  }
  func.func @transform_9(%arg0: i32) -> (i32, i32) {
    %c0_i32 = arith.constant 0 : i32
    %c0_i32_0 = arith.constant 0 : i32
    %c0_i32_1 = arith.constant 0 : i32
    return %c0_i32, %c0_i32_0 : i32, i32
  }
  func.func @transform_10(%arg0: i32) -> (i32, i32, i32) {
    %c0_i32 = arith.constant 0 : i32
    %c0_i32_0 = arith.constant 0 : i32
    %c0_i32_1 = arith.constant 0 : i32
    return %arg0, %c0_i32, %c0_i32_0 : i32, i32, i32
  }
}

</mosaic_0001>

<llo_original>
// kernel: dqn_forward.1
$region0: #{dqn_forward.1}
  #allocation0 [shape = 'u32[]', space=smem, size = 0x4, offset = 0x4, fixed_abs, tag = 'smem constant byte address 0x4 - core index']
  #allocation1 [shape = 'u32[144,128]{1,0:T(1,128)}', space=vmem, size = 0x12000, scoped, tag = 'internal scratch']
  #allocation2 [shape = 'f32[128,144]{1,0:T(8,128)}', space=vmem, size = 0x20000, scoped, tag = 'scratch operand']
  %s0 = inlined_call_operand.vmem [shape: f32[2,4,152,225], index: 0, kind: input, shape index: {}]
  %s1 = inlined_call_operand.vmem [shape: f32[8,152], index: 1, kind: input, shape index: {}]
  %s2 = inlined_call_operand.vmem [shape: f32[8,1], index: 2, kind: input, shape index: {}]
  %s3 = inlined_call_operand.vmem [shape: f32[16,225,144], index: 3, kind: input, shape index: {}]
  %s4 = inlined_call_operand.vmem [shape: f32[12,128], index: 4, kind: input, shape index: {}]
  %s5 = inlined_call_operand.vmem [shape: f32[12,1], index: 5, kind: input, shape index: {}]
  %s6 = inlined_call_operand.vmem [shape: f32[12,36,216], index: 6, kind: input, shape index: {}]
  %s7 = inlined_call_operand.vmem [shape: f32[1,216], index: 7, kind: input, shape index: {}]
  %s8 = inlined_call_operand.vmem [shape: f32[216,4], index: 8, kind: input, shape index: {}]
  %s9 = inlined_call_operand.vmem [shape: f32[1,4], index: 9, kind: input, shape index: {}]
  %s10 = inlined_call_operand.hbm [shape: f32[2,1,4], index: 10, kind: output, shape index: {}]
  %s11 = sld [smem:[#allocation0]]
  $region73: #{dqn_forward.1} parent=0
    _
  %s13 = ssub.s32 1, %s11
  %s14 = scalar_select 0, %s13, %s11
  $region1: #{dqn_forward.1} parent=0
    #allocation3 [shape = 'u8[1024]{0}', space=vmem, size = 0x400, scoped, tag = 'output window, operand 0']
    #allocation4 [shape = 's32[2]{0}', space=sflag, size = 0x8, scoped, tag = 'scoped memory for dqn_forward.1']
    %15 = vsyncpa [#allocation4], 0
    %s16 = scalar_lea.sflag [#allocation4], 1
    %17 = vsyncpa %s16, 0
    loop: start=0, step=1, limit=4
    $region2: #{dqn_forward.1} parent=1 // loop_pre_header
      _
    $region3: #{dqn_forward.1} parent=1 // loop_header
      %s19 = sphi 0, %s23
      %p20 = scmp.ge.s32.totalorder %s19, 4
      %s29 = sphi 0, %s31
      %s32 = sphi 0, %s29
      %s33 = sphi 0, %s32
      %s49 = sphi 0, %s33
      %s53 = sphi 0, %s53
      %s55 = sphi 0, %s53
      %s56 = sphi 0, %s55
      %s70 = sphi 0, %s56
      %s74 = sphi 0, %s74
      %s76 = sphi 0, %s74
      %s77 = sphi 0, %s76
      %s91 = sphi 0, %s77
      %s95 = sphi 0, %s95
      %s97 = sphi 0, %s95
      %s98 = sphi 0, %s97
      %s112 = sphi 0, %s98
      %s116 = sphi 0, %s116
      %s118 = sphi 0, %s116
      %s119 = sphi 0, %s118
      %s133 = sphi 0, %s119
      %s137 = sphi 0, %s137
      %s139 = sphi 0, %s137
      %s140 = sphi 0, %s139
      %s154 = sphi 0, %s140
      %s158 = sphi 0, %s158
      %s160 = sphi 0, %s158
      %s161 = sphi 0, %s160
      %s175 = sphi 0, %s161
      %s179 = sphi 0, %s179
      %s181 = sphi 0, %s179
      %s182 = sphi 0, %s181
      %s196 = sphi 0, %s182
      %s200 = sphi 0, %s200
      %s202 = sphi 0, %s200
      %s203 = sphi 0, %s202
      %s217 = sphi 0, %s203
      %s221 = sphi 0, %s221
      %s223 = sphi 0, %s221
      %s224 = sphi 0, %s223
      %s238 = sphi 0, %s224
      %s244 = sphi 0, %s246
      %s247 = sphi 0, %s244
      %s248 = sphi 0, %s247
      %s264 = sphi 0, %s248
    $region4: #{dqn_forward.1} parent=1 // loop_header_branch
      %22 = sbr.rel (%p20) target = $region8
    $region5: #{dqn_forward.1} parent=1 // loop_body
      %s24 = ssub.s32 %s19, 1
      %s25 = ssub.s32 %s19, 2
      %s26 = sadd.s32 %s19, 1
      %s27 = ssub.s32 %s19, %s26
      %p28 = scmp.eq.s32.totalorder %s27, 0
      %s30 = sadd.s32 %s29, 1
      %s31 = scalar_select %p28, %s29, %s30
      %p34 = pneg %p28
      %p35 = scmp.eq.s32.totalorder %s19, 1
      %p36 = por %p34, %p35
      %p37 = scmp.ne.s32.totalorder %s29, %s32
      %p38 = scmp.eq.s32.totalorder %s19, 0
      %p39 = por %p37, %p38
      %p40 = scmp.ne.s32.totalorder %s29, %s32
      %p41 = scmp.eq.s32.totalorder %s24, 1
      %p42 = por %p40, %p41
      %p43 = scmp.ne.s32.totalorder %s32, %s33
      %p44 = scmp.eq.s32.totalorder %s24, 0
      %p45 = por %p43, %p44
      %p46 = scmp.ne.s32.totalorder %s32, %s33
      %p47 = scmp.eq.s32.totalorder %s25, 1
      %p48 = por %p46, %p47
      %p50 = scmp.ne.s32.totalorder %s33, %s49
      %p51 = scmp.eq.s32.totalorder %s25, 0
      %p52 = por %p50, %p51
      %s54 = sadd.s32 %s53, 1
      %p57 = scmp.eq.s32.totalorder %s19, 1
      %p58 = scmp.ne.s32.totalorder %s53, %s55
      %p59 = scmp.eq.s32.totalorder %s19, 0
      %p60 = por %p58, %p59
      %p61 = scmp.ne.s32.totalorder %s53, %s55
      %p62 = scmp.eq.s32.totalorder %s24, 1
      %p63 = por %p61, %p62
      %p64 = scmp.ne.s32.totalorder %s55, %s56
      %p65 = scmp.eq.s32.totalorder %s24, 0
      %p66 = por %p64, %p65
      %p67 = scmp.ne.s32.totalorder %s55, %s56
      %p68 = scmp.eq.s32.totalorder %s25, 1
      %p69 = por %p67, %p68
      %p71 = scmp.ne.s32.totalorder %s56, %s70
      %p72 = scmp.eq.s32.totalorder %s25, 0
      %p73 = por %p71, %p72
      %s75 = sadd.s32 %s74, 1
      %p78 = scmp.eq.s32.totalorder %s19, 1
      %p79 = scmp.ne.s32.totalorder %s74, %s76
      %p80 = scmp.eq.s32.totalorder %s19, 0
      %p81 = por %p79, %p80
      %p82 = scmp.ne.s32.totalorder %s74, %s76
      %p83 = scmp.eq.s32.totalorder %s24, 1
      %p84 = por %p82, %p83
      %p85 = scmp.ne.s32.totalorder %s76, %s77
      %p86 = scmp.eq.s32.totalorder %s24, 0
      %p87 = por %p85, %p86
      %p88 = scmp.ne.s32.totalorder %s76, %s77
      %p89 = scmp.eq.s32.totalorder %s25, 1
      %p90 = por %p88, %p89
      %p92 = scmp.ne.s32.totalorder %s77, %s91
      %p93 = scmp.eq.s32.totalorder %s25, 0
      %p94 = por %p92, %p93
      %s96 = sadd.s32 %s95, 1
      %p99 = scmp.eq.s32.totalorder %s19, 1
      %p100 = scmp.ne.s32.totalorder %s95, %s97
      %p101 = scmp.eq.s32.totalorder %s19, 0
      %p102 = por %p100, %p101
      %p103 = scmp.ne.s32.totalorder %s95, %s97
      %p104 = scmp.eq.s32.totalorder %s24, 1
      %p105 = por %p103, %p104
      %p106 = scmp.ne.s32.totalorder %s97, %s98
      %p107 = scmp.eq.s32.totalorder %s24, 0
      %p108 = por %p106, %p107
      %p109 = scmp.ne.s32.totalorder %s97, %s98
      %p110 = scmp.eq.s32.totalorder %s25, 1
      %p111 = por %p109, %p110
      %p113 = scmp.ne.s32.totalorder %s98, %s112
      %p114 = scmp.eq.s32.totalorder %s25, 0
      %p115 = por %p113, %p114
      %s117 = sadd.s32 %s116, 1
      %p120 = scmp.eq.s32.totalorder %s19, 1
      %p121 = scmp.ne.s32.totalorder %s116, %s118
      %p122 = scmp.eq.s32.totalorder %s19, 0
      %p123 = por %p121, %p122
      %p124 = scmp.ne.s32.totalorder %s116, %s118
      %p125 = scmp.eq.s32.totalorder %s24, 1
      %p126 = por %p124, %p125
      %p127 = scmp.ne.s32.totalorder %s118, %s119
      %p128 = scmp.eq.s32.totalorder %s24, 0
      %p129 = por %p127, %p128
      %p130 = scmp.ne.s32.totalorder %s118, %s119
      %p131 = scmp.eq.s32.totalorder %s25, 1
      %p132 = por %p130, %p131
      %p134 = scmp.ne.s32.totalorder %s119, %s133
      %p135 = scmp.eq.s32.totalorder %s25, 0
      %p136 = por %p134, %p135
      %s138 = sadd.s32 %s137, 1
      %p141 = scmp.eq.s32.totalorder %s19, 1
      %p142 = scmp.ne.s32.totalorder %s137, %s139
      %p143 = scmp.eq.s32.totalorder %s19, 0
      %p144 = por %p142, %p143
      %p145 = scmp.ne.s32.totalorder %s137, %s139
      %p146 = scmp.eq.s32.totalorder %s24, 1
      %p147 = por %p145, %p146
      %p148 = scmp.ne.s32.totalorder %s139, %s140
      %p149 = scmp.eq.s32.totalorder %s24, 0
      %p150 = por %p148, %p149
      %p151 = scmp.ne.s32.totalorder %s139, %s140
      %p152 = scmp.eq.s32.totalorder %s25, 1
      %p153 = por %p151, %p152
      %p155 = scmp.ne.s32.totalorder %s140, %s154
      %p156 = scmp.eq.s32.totalorder %s25, 0
      %p157 = por %p155, %p156
      %s159 = sadd.s32 %s158, 1
      %p162 = scmp.eq.s32.totalorder %s19, 1
      %p163 = scmp.ne.s32.totalorder %s158, %s160
      %p164 = scmp.eq.s32.totalorder %s19, 0
      %p165 = por %p163, %p164
      %p166 = scmp.ne.s32.totalorder %s158, %s160
      %p167 = scmp.eq.s32.totalorder %s24, 1
      %p168 = por %p166, %p167
      %p169 = scmp.ne.s32.totalorder %s160, %s161
      %p170 = scmp.eq.s32.totalorder %s24, 0
      %p171 = por %p169, %p170
      %p172 = scmp.ne.s32.totalorder %s160, %s161
      %p173 = scmp.eq.s32.totalorder %s25, 1
      %p174 = por %p172, %p173
      %p176 = scmp.ne.s32.totalorder %s161, %s175
      %p177 = scmp.eq.s32.totalorder %s25, 0
      %p178 = por %p176, %p177
      %s180 = sadd.s32 %s179, 1
      %p183 = scmp.eq.s32.totalorder %s19, 1
      %p184 = scmp.ne.s32.totalorder %s179, %s181
      %p185 = scmp.eq.s32.totalorder %s19, 0
      %p186 = por %p184, %p185
      %p187 = scmp.ne.s32.totalorder %s179, %s181
      %p188 = scmp.eq.s32.totalorder %s24, 1
      %p189 = por %p187, %p188
      %p190 = scmp.ne.s32.totalorder %s181, %s182
      %p191 = scmp.eq.s32.totalorder %s24, 0
      %p192 = por %p190, %p191
      %p193 = scmp.ne.s32.totalorder %s181, %s182
      %p194 = scmp.eq.s32.totalorder %s25, 1
      %p195 = por %p193, %p194
      %p197 = scmp.ne.s32.totalorder %s182, %s196
      %p198 = scmp.eq.s32.totalorder %s25, 0
      %p199 = por %p197, %p198
      %s201 = sadd.s32 %s200, 1
      %p204 = scmp.eq.s32.totalorder %s19, 1
      %p205 = scmp.ne.s32.totalorder %s200, %s202
      %p206 = scmp.eq.s32.totalorder %s19, 0
      %p207 = por %p205, %p206
      %p208 = scmp.ne.s32.totalorder %s200, %s202
      %p209 = scmp.eq.s32.totalorder %s24, 1
      %p210 = por %p208, %p209
      %p211 = scmp.ne.s32.totalorder %s202, %s203
      %p212 = scmp.eq.s32.totalorder %s24, 0
      %p213 = por %p211, %p212
      %p214 = scmp.ne.s32.totalorder %s202, %s203
      %p215 = scmp.eq.s32.totalorder %s25, 1
      %p216 = por %p214, %p215
      %p218 = scmp.ne.s32.totalorder %s203, %s217
      %p219 = scmp.eq.s32.totalorder %s25, 0
      %p220 = por %p218, %p219
      %s222 = sadd.s32 %s221, 1
      %p225 = scmp.eq.s32.totalorder %s19, 1
      %p226 = scmp.ne.s32.totalorder %s221, %s223
      %p227 = scmp.eq.s32.totalorder %s19, 0
      %p228 = por %p226, %p227
      %p229 = scmp.ne.s32.totalorder %s221, %s223
      %p230 = scmp.eq.s32.totalorder %s24, 1
      %p231 = por %p229, %p230
      %p232 = scmp.ne.s32.totalorder %s223, %s224
      %p233 = scmp.eq.s32.totalorder %s24, 0
      %p234 = por %p232, %p233
      %p235 = scmp.ne.s32.totalorder %s223, %s224
      %p236 = scmp.eq.s32.totalorder %s25, 1
      %p237 = por %p235, %p236
      %p239 = scmp.ne.s32.totalorder %s224, %s238
      %p240 = scmp.eq.s32.totalorder %s25, 0
      %p241 = por %p239, %p240
      %s242 = ssub.s32 %s19, %s26
      %p243 = scmp.eq.s32.totalorder %s242, 0
      %s245 = sadd.s32 %s244, 1
      %s246 = scalar_select %p243, %s244, %s245
      %p249 = pneg %p243
      %p250 = scmp.eq.s32.totalorder %s19, 1
      %p251 = por %p249, %p250
      %p252 = scmp.ne.s32.totalorder %s244, %s247
      %p253 = scmp.eq.s32.totalorder %s19, 0
      %p254 = por %p252, %p253
      %p255 = scmp.ne.s32.totalorder %s244, %s247
      %p256 = scmp.eq.s32.totalorder %s24, 1
      %p257 = por %p255, %p256
      %p258 = scmp.ne.s32.totalorder %s247, %s248
      %p259 = scmp.eq.s32.totalorder %s24, 0
      %p260 = por %p258, %p259
      %p261 = scmp.ne.s32.totalorder %s247, %s248
      %p262 = scmp.eq.s32.totalorder %s25, 1
      %p263 = por %p261, %p262
      %p265 = scmp.ne.s32.totalorder %s248, %s264
      %p266 = scmp.eq.s32.totalorder %s25, 0
      %p267 = por %p265, %p266
      %p268 = scmp.le.s32.totalorder 1, %s19
      %p269 = scmp.lt.s32.totalorder %s19, 3
      %p270 = pnand %p268, %p269
      %p271 = pneg %p270
      // Predicated region
      $region9: #{dqn_forward.1} parent=5 // pred_check
        _
      $region10: #{dqn_forward.1} parent=5 // pred_check_branch
        %273 = sbr.rel (%p270) target = $region12
      $region11: #{dqn_forward.1} parent=5 // pred_region
        %s274 = ssub.s32 %s19, 1
        // Predicated region
        $region13: #{dqn_forward.1} parent=11 // pred_check
          %p275 = pneg %p66
        $region14: #{dqn_forward.1} parent=11 // pred_check_branch
          %277 = sbr.rel (%p275) target = $region16
        $region15: #{dqn_forward.1} parent=11 // pred_region
          _
        $region16: #{dqn_forward.1} parent=11 // pred_fallthru
          _
        // Predicated region
        $region17: #{dqn_forward.1} parent=11 // pred_check
          %p278 = pneg %p87
        $region18: #{dqn_forward.1} parent=11 // pred_check_branch
          %280 = sbr.rel (%p278) target = $region20
        $region19: #{dqn_forward.1} parent=11 // pred_region
          _
        $region20: #{dqn_forward.1} parent=11 // pred_fallthru
          _
        // Predicated region
        $region21: #{dqn_forward.1} parent=11 // pred_check
          %p281 = pneg %p108
        $region22: #{dqn_forward.1} parent=11 // pred_check_branch
          %283 = sbr.rel (%p281) target = $region24
        $region23: #{dqn_forward.1} parent=11 // pred_region
          _
        $region24: #{dqn_forward.1} parent=11 // pred_fallthru
          _
        // Predicated region
        $region25: #{dqn_forward.1} parent=11 // pred_check
          %p284 = pneg %p129
        $region26: #{dqn_forward.1} parent=11 // pred_check_branch
          %286 = sbr.rel (%p284) target = $region28
        $region27: #{dqn_forward.1} parent=11 // pred_region
          _
        $region28: #{dqn_forward.1} parent=11 // pred_fallthru
          _
        // Predicated region
        $region29: #{dqn_forward.1} parent=11 // pred_check
          %p287 = pneg %p150
        $region30: #{dqn_forward.1} parent=11 // pred_check_branch
          %289 = sbr.rel (%p287) target = $region32
        $region31: #{dqn_forward.1} parent=11 // pred_region
          _
        $region32: #{dqn_forward.1} parent=11 // pred_fallthru
          _
        // Predicated region
        $region33: #{dqn_forward.1} parent=11 // pred_check
          %p290 = pneg %p171
        $region34: #{dqn_forward.1} parent=11 // pred_check_branch
          %292 = sbr.rel (%p290) target = $region36
        $region35: #{dqn_forward.1} parent=11 // pred_region
          _
        $region36: #{dqn_forward.1} parent=11 // pred_fallthru
          _
        // Predicated region
        $region37: #{dqn_forward.1} parent=11 // pred_check
          %p293 = pneg %p192
        $region38: #{dqn_forward.1} parent=11 // pred_check_branch
          %295 = sbr.rel (%p293) target = $region40
        $region39: #{dqn_forward.1} parent=11 // pred_region
          _
        $region40: #{dqn_forward.1} parent=11 // pred_fallthru
          _
        // Predicated region
        $region41: #{dqn_forward.1} parent=11 // pred_check
          %p296 = pneg %p213
        $region42: #{dqn_forward.1} parent=11 // pred_check_branch
          %298 = sbr.rel (%p296) target = $region44
        $region43: #{dqn_forward.1} parent=11 // pred_region
          _
        $region44: #{dqn_forward.1} parent=11 // pred_fallthru
          _
        // Predicated region
        $region45: #{dqn_forward.1} parent=11 // pred_check
          %p299 = pneg %p234
        $region46: #{dqn_forward.1} parent=11 // pred_check_branch
          %301 = sbr.rel (%p299) target = $region48
        $region47: #{dqn_forward.1} parent=11 // pred_region
          _
        $region48: #{dqn_forward.1} parent=11 // pred_fallthru
          _
      $region12: #{dqn_forward.1} parent=5 // pred_fallthru
        _
      %p302 = scmp.lt.s32.totalorder %s19, 2
      // Predicated region
      $region49: #{dqn_forward.1} parent=5 // pred_check
        %p303 = pneg %p302
      $region50: #{dqn_forward.1} parent=5 // pred_check_branch
        %305 = sbr.rel (%p303) target = $region52
      $region51: #{dqn_forward.1} parent=5 // pred_region
        // Predicated region
        $region53: #{dqn_forward.1} parent=51 // pred_check
          %p306 = pneg %p39
        $region54: #{dqn_forward.1} parent=51 // pred_check_branch
          %308 = sbr.rel (%p306) target = $region56
        $region55: #{dqn_forward.1} parent=51 // pred_region
          %p309 = scmp.lt.s32.totalorder %s19, 1
          %s310 = scalar_select %p309, %s19, 1
          %s311 = smul.addr %s310, 152
          %s312 = smul.addr %s311, 8
          %s313 = scalar_lea.vmem %s0, %s312
        $region56: #{dqn_forward.1} parent=51 // pred_fallthru
          _
      $region52: #{dqn_forward.1} parent=5 // pred_fallthru
        _
      %p314 = scmp.le.s32.totalorder 1, %s19
      %p315 = scmp.lt.s32.totalorder %s19, 3
      %p316 = pnand %p314, %p315
      %p317 = pneg %p316
      // Predicated region
      $region57: #{dqn_forward.1} parent=5 // pred_check
        _
      $region58: #{dqn_forward.1} parent=5 // pred_check_branch
        %319 = sbr.rel (%p316) target = $region60
      $region59: #{dqn_forward.1} parent=5 // pred_region
        %s320 = ssub.s32 %s19, 1
        %p321 = scmp.lt.s32.totalorder %s24, 1
        %s322 = scalar_select %p321, %s24, 1
        %s323 = smul.addr %s322, 152
        %s324 = smul.addr %s323, 8
        %s325 = scalar_lea.vmem %s0, %s324
        %p326 = pneg %p45
        %p327 = pneg %p42
        %p328 = pneg %p66
        %p329 = pneg %p63
        %p330 = pneg %p87
        %p331 = pneg %p84
        %p332 = pneg %p108
        %p333 = pneg %p105
        %p334 = pneg %p129
        %p335 = pneg %p126
        %p336 = pneg %p150
        %p337 = pneg %p147
        %p338 = pneg %p171
        %p339 = pneg %p168
        %p340 = pneg %p192
        %p341 = pneg %p189
        %p342 = pneg %p213
        %p343 = pneg %p210
        %p344 = pneg %p234
        %p345 = pneg %p231
        %p346 = pneg %p260
        %p347 = pneg %p257
        %s348 = sand.u32 %s247, 1
        %s349 = scalar_lea.sflag [#allocation4], %s348
        %s350 = sand.u32 %s247, 1
        %s351 = scalar_lea.vmem [#allocation3], %s350
        %p352 = scmp.lt.s32.totalorder %s24, 1
        %s353 = scalar_select %p352, %s24, 1
        %s354 = smul.addr %s353, 152
        %s355 = smul.addr %s354, 8
        %s356 = scalar_lea.vmem %s0, %s355
        %v357 = vld [vmem:[%s1] sm:$0xff]
        %v358 = vld [vmem:[%s1 + $0x8] sm:$0xff]
        %v359 = vld [vmem:[%s356] sm:$0xff]
        %v360 = vld [vmem:[%s356 + $0x8] sm:$0xff]
        %v361 = vld [vmem:[%s356 + $0x10] sm:$0xff]
        %v362 = vld [vmem:[%s356 + $0x18] sm:$0xff]
        %v363 = vld [vmem:[%s356 + $0x20] sm:$0xff]
        %v364 = vld [vmem:[%s356 + $0x28] sm:$0xff]
        %v365 = vld [vmem:[%s356 + $0x30] sm:$0xff]
        %v366 = vld [vmem:[%s356 + $0x38] sm:$0xff]
        %v367 = vld [vmem:[%s356 + $0x40] sm:$0xff]
        %v368 = vld [vmem:[%s356 + $0x48] sm:$0xff]
        %v369 = vld [vmem:[%s356 + $0x50] sm:$0xff]
        %v370 = vld [vmem:[%s356 + $0x58] sm:$0xff]
        %v371 = vld [vmem:[%s356 + $0x60] sm:$0xff]
        %v372 = vld [vmem:[%s356 + $0x68] sm:$0xff]
        %v373 = vld [vmem:[%s356 + $0x70] sm:$0xff]
        %v374 = vld [vmem:[%s356 + $0x78] sm:$0xff]
        %v375 = vld [vmem:[%s356 + $0x80] sm:$0xff]
        %v376 = vld [vmem:[%s356 + $0x88] sm:$0xff]
        %v377 = vld [vmem:[%s356 + $0x90] sm:$0xff]
        %v378 = vld [vmem:[%s356 + $0x98] sm:$0xff]
        %v379 = vld [vmem:[%s356 + $0xa0] sm:$0xff]
        %v380 = vld [vmem:[%s356 + $0xa8] sm:$0xff]
        %v381 = vld [vmem:[%s356 + $0xb0] sm:$0xff]
        %v382 = vld [vmem:[%s356 + $0xb8] sm:$0xff]
        %v383 = vld [vmem:[%s356 + $0xc0] sm:$0xff]
        %v384 = vld [vmem:[%s356 + $0xc8] sm:$0xff]
        %v385 = vld [vmem:[%s356 + $0xd0] sm:$0xff]
        %v386 = vld [vmem:[%s356 + $0xd8] sm:$0xff]
        %v387 = vld [vmem:[%s356 + $0xe0] sm:$0xff]
        %v388 = vld [vmem:[%s356 + $0xe8] sm:$0xff]
        %v389 = vld [vmem:[%s356 + $0xf0] sm:$0xff]
        %v390 = vld [vmem:[%s356 + $0xf8] sm:$0xff]
        %v391 = vld [vmem:[%s356 + $0x100] sm:$0xff]
        %v392 = vld [vmem:[%s356 + $0x108] sm:$0xff]
        %v393 = vld [vmem:[%s356 + $0x110] sm:$0xff]
        %v394 = vld [vmem:[%s356 + $0x118] sm:$0xff]
        %v395 = vld [vmem:[%s356 + $0x120] sm:$0xff]
        %v396 = vld [vmem:[%s356 + $0x128] sm:$0xff]
        %vm397 = vcmask 195584
        %v399 = vsel %vm397, %v358, 0
        %401 = vmatprep.subr.mxu0 %v360
        %402 = vmatpush1.msra.mxu0 %v359
        %403 = vmatprep.subr.mxu0 %v362
        %404 = vmatpush1.msra.mxu0 %v361
        %405 = vmatprep.subr.mxu0 %v364
        %406 = vmatpush1.msra.mxu0 %v363
        %407 = vmatprep.subr.mxu0 %v366
        %408 = vmatpush1.msra.mxu0 %v365
        %409 = vmatprep.subr.mxu0 %v368
        %410 = vmatpush1.msra.mxu0 %v367
        %411 = vmatprep.subr.mxu0 %v370
        %412 = vmatpush1.msra.mxu0 %v369
        %413 = vmatprep.subr.mxu0 %v372
        %414 = vmatpush1.msra.mxu0 %v371
        %415 = vmatprep.subr.mxu0 %v374
        %416 = vmatpush1.msra.mxu0 %v373
        %417 = vmatprep.subr.mxu0 %v376
        %418 = vmatpush1.msra.mxu0 %v375
        %419 = vmatprep.subr.mxu0 %v378
        %420 = vmatpush1.msra.mxu0 %v377
        %421 = vmatprep.subr.mxu0 %v380
        %422 = vmatpush1.msra.mxu0 %v379
        %423 = vmatprep.subr.mxu0 %v382
        %424 = vmatpush1.msra.mxu0 %v381
        %425 = vmatprep.subr.mxu0 %v384
        %426 = vmatpush1.msra.mxu0 %v383
        %427 = vmatprep.subr.mxu0 %v386
        %428 = vmatpush1.msra.mxu0 %v385
        %429 = vmatprep.subr.mxu0 %v388
        %430 = vmatpush1.msra.mxu0 %v387
        %431 = vmatprep.subr.mxu0 %v390
        %432 = vmatpush1.msra.mxu0 %v389
        %433 = vmatprep.subr.mxu0 %v392
        %434 = vmatpush1.msra.mxu0 %v391
        %435 = vmatprep.subr.mxu0 %v394
        %436 = vmatpush1.msra.mxu0 %v393
        %437 = vmatprep.subr.mxu0 %v396
        %438 = vmatpush1.msra.mxu0 %v395
        %439 = vmatprep.subr.mxu0 0.0
        %440 = vmatpush1.msra.mxu0 0.0
        %441 = vmatprep.subr.mxu0 0.0
        %442 = vmatpush1.msra.mxu0 0.0
        %443 = vmatprep.subr.mxu0 0.0
        %444 = vmatpush1.msra.mxu0 0.0
        %445 = vmatprep.subr.mxu0 0.0
        %446 = vmatpush1.msra.mxu0 0.0
        %447 = vmatprep.subr.mxu0 0.0
        %448 = vmatpush1.msra.mxu0 0.0
        %449 = vmatprep.subr.mxu0 0.0
        %450 = vmatpush1.msra.mxu0 0.0
        %451 = vmatprep.subr.mxu0 0.0
        %452 = vmatpush1.msra.mxu0 0.0
        %453 = vmatprep.subr.mxu0 0.0
        %454 = vmatpush1.msra.mxu0 0.0
        %455 = vmatprep.subr.mxu0 0.0
        %456 = vmatpush1.msra.mxu0 0.0
        %457 = vmatprep.subr.mxu0 0.0
        %458 = vmatpush1.msra.mxu0 0.0
        %459 = vmatprep.subr.mxu0 0.0
        %460 = vmatpush1.msra.mxu0 0.0
        %461 = vmatprep.subr.mxu0 0.0
        %462 = vmatpush1.msra.mxu0 0.0
        %463 = vmatprep.subr.mxu0 0.0
        %464 = vmatpush1.msra.mxu0 0.0
        %465 = vmatprep.mubr.f32.mxu0 %v399
        %466 = vmatmul.mubr.f32.gmra.mrb[0].mxu0 %v357
        %v467 = vpop.f32.mrb[0].mxu0
        %v468 = vadd.f32 0.0, %v467
        %v469 = vpop.f32.mrb[0].mxu0
        %v470 = vadd.f32 0.0, %v469
        %471 = vdwg.mxu0
        %s472 = scalar_lea.vmem %s356, 304
        %v473 = vld [vmem:[%s472] sm:$0xff]
        %v474 = vld [vmem:[%s472 + $0x8] sm:$0xff]
        %v475 = vld [vmem:[%s472 + $0x10] sm:$0xff]
        %v476 = vld [vmem:[%s472 + $0x18] sm:$0xff]
        %v477 = vld [vmem:[%s472 + $0x20] sm:$0xff]
        %v478 = vld [vmem:[%s472 + $0x28] sm:$0xff]
        %v479 = vld [vmem:[%s472 + $0x30] sm:$0xff]
        %v480 = vld [vmem:[%s472 + $0x38] sm:$0xff]
        %v481 = vld [vmem:[%s472 + $0x40] sm:$0xff]
        %v482 = vld [vmem:[%s472 + $0x48] sm:$0xff]
        %v483 = vld [vmem:[%s472 + $0x50] sm:$0xff]
        %v484 = vld [vmem:[%s472 + $0x58] sm:$0xff]
        %v485 = vld [vmem:[%s472 + $0x60] sm:$0xff]
        %v486 = vld [vmem:[%s472 + $0x68] sm:$0xff]
        %v487 = vld [vmem:[%s472 + $0x70] sm:$0xff]
        %v488 = vld [vmem:[%s472 + $0x78] sm:$0xff]
        %v489 = vld [vmem:[%s472 + $0x80] sm:$0xff]
        %v490 = vld [vmem:[%s472 + $0x88] sm:$0xff]
        %v491 = vld [vmem:[%s472 + $0x90] sm:$0xff]
        %v492 = vld [vmem:[%s472 + $0x98] sm:$0xff]
        %v493 = vld [vmem:[%s472 + $0xa0] sm:$0xff]
        %v494 = vld [vmem:[%s472 + $0xa8] sm:$0xff]
        %v495 = vld [vmem:[%s472 + $0xb0] sm:$0xff]
        %v496 = vld [vmem:[%s472 + $0xb8] sm:$0xff]
        %v497 = vld [vmem:[%s472 + $0xc0] sm:$0xff]
        %v498 = vld [vmem:[%s472 + $0xc8] sm:$0xff]
        %v499 = vld [vmem:[%s472 + $0xd0] sm:$0xff]
        %v500 = vld [vmem:[%s472 + $0xd8] sm:$0xff]
        %v501 = vld [vmem:[%s472 + $0xe0] sm:$0xff]
        %v502 = vld [vmem:[%s472 + $0xe8] sm:$0xff]
        %v503 = vld [vmem:[%s472 + $0xf0] sm:$0xff]
        %v504 = vld [vmem:[%s472 + $0xf8] sm:$0xff]
        %v505 = vld [vmem:[%s472 + $0x100] sm:$0xff]
        %v506 = vld [vmem:[%s472 + $0x108] sm:$0xff]
        %v507 = vld [vmem:[%s472 + $0x110] sm:$0xff]
        %v508 = vld [vmem:[%s472 + $0x118] sm:$0xff]
        %v509 = vld [vmem:[%s472 + $0x120] sm:$0xff]
        %v510 = vld [vmem:[%s472 + $0x128] sm:$0xff]
        %511 = vmatprep.subr.mxu0 %v474
        %512 = vmatpush1.msra.mxu0 %v473
        %513 = vmatprep.subr.mxu0 %v476
        %514 = vmatpush1.msra.mxu0 %v475
        %515 = vmatprep.subr.mxu0 %v478
        %516 = vmatpush1.msra.mxu0 %v477
        %517 = vmatprep.subr.mxu0 %v480
        %518 = vmatpush1.msra.mxu0 %v479
        %519 = vmatprep.subr.mxu0 %v482
        %520 = vmatpush1.msra.mxu0 %v481
        %521 = vmatprep.subr.mxu0 %v484
        %522 = vmatpush1.msra.mxu0 %v483
        %523 = vmatprep.subr.mxu0 %v486
        %524 = vmatpush1.msra.mxu0 %v485
        %525 = vmatprep.subr.mxu0 %v488
        %526 = vmatpush1.msra.mxu0 %v487
        %527 = vmatprep.subr.mxu0 %v490
        %528 = vmatpush1.msra.mxu0 %v489
        %529 = vmatprep.subr.mxu0 %v492
        %530 = vmatpush1.msra.mxu0 %v491
        %531 = vmatprep.subr.mxu0 %v494
        %532 = vmatpush1.msra.mxu0 %v493
        %533 = vmatprep.subr.mxu0 %v496
        %534 = vmatpush1.msra.mxu0 %v495
        %535 = vmatprep.subr.mxu0 %v498
        %536 = vmatpush1.msra.mxu0 %v497
        %537 = vmatprep.subr.mxu0 %v500
        %538 = vmatpush1.msra.mxu0 %v499
        %539 = vmatprep.subr.mxu0 %v502
        %540 = vmatpush1.msra.mxu0 %v501
        %541 = vmatprep.subr.mxu0 %v504
        %542 = vmatpush1.msra.mxu0 %v503
        %543 = vmatprep.subr.mxu0 %v506
        %544 = vmatpush1.msra.mxu0 %v505
        %545 = vmatprep.subr.mxu0 %v508
        %546 = vmatpush1.msra.mxu0 %v507
        %547 = vmatprep.subr.mxu0 %v510
        %548 = vmatpush1.msra.mxu0 %v509
        %549 = vmatprep.subr.mxu0 0.0
        %550 = vmatpush1.msra.mxu0 0.0
        %551 = vmatprep.subr.mxu0 0.0
        %552 = vmatpush1.msra.mxu0 0.0
        %553 = vmatprep.subr.mxu0 0.0
        %554 = vmatpush1.msra.mxu0 0.0
        %555 = vmatprep.subr.mxu0 0.0
        %556 = vmatpush1.msra.mxu0 0.0
        %557 = vmatprep.subr.mxu0 0.0
        %558 = vmatpush1.msra.mxu0 0.0
        %559 = vmatprep.subr.mxu0 0.0
        %560 = vmatpush1.msra.mxu0 0.0
        %561 = vmatprep.subr.mxu0 0.0
        %562 = vmatpush1.msra.mxu0 0.0
        %563 = vmatprep.subr.mxu0 0.0
        %564 = vmatpush1.msra.mxu0 0.0
        %565 = vmatprep.subr.mxu0 0.0
        %566 = vmatpush1.msra.mxu0 0.0
        %567 = vmatprep.subr.mxu0 0.0
        %568 = vmatpush1.msra.mxu0 0.0
        %569 = vmatprep.subr.mxu0 0.0
        %570 = vmatpush1.msra.mxu0 0.0
        %571 = vmatprep.subr.mxu0 0.0
        %572 = vmatpush1.msra.mxu0 0.0
        %573 = vmatprep.subr.mxu0 0.0
        %574 = vmatpush1.msra.mxu0 0.0
        %575 = vmatprep.mubr.f32.mxu0 %v399
        %576 = vmatmul.mubr.f32.gmra.mrb[0].mxu0 %v357
        %v577 = vpop.f32.mrb[0].mxu0
        %v578 = vadd.f32 0.0, %v577
        %v579 = vpop.f32.mrb[0].mxu0
        %v580 = vadd.f32 0.0, %v579
        %581 = vdwg.mxu0
        %v582 = vmax.f32 %v468, %v578
        %v583 = vmax.f32 %v470, %v580
        %s584 = scalar_lea.vmem %s356, 608
        %v585 = vld [vmem:[%s584] sm:$0xff]
        %v586 = vld [vmem:[%s584 + $0x8] sm:$0xff]
        %v587 = vld [vmem:[%s584 + $0x10] sm:$0xff]
        %v588 = vld [vmem:[%s584 + $0x18] sm:$0xff]
        %v589 = vld [vmem:[%s584 + $0x20] sm:$0xff]
        %v590 = vld [vmem:[%s584 + $0x28] sm:$0xff]
        %v591 = vld [vmem:[%s584 + $0x30] sm:$0xff]
        %v592 = vld [vmem:[%s584 + $0x38] sm:$0xff]
        %v593 = vld [vmem:[%s584 + $0x40] sm:$0xff]
        %v594 = vld [vmem:[%s584 + $0x48] sm:$0xff]
        %v595 = vld [vmem:[%s584 + $0x50] sm:$0xff]
        %v596 = vld [vmem:[%s584 + $0x58] sm:$0xff]
        %v597 = vld [vmem:[%s584 + $0x60] sm:$0xff]
        %v598 = vld [vmem:[%s584 + $0x68] sm:$0xff]
        %v599 = vld [vmem:[%s584 + $0x70] sm:$0xff]
        %v600 = vld [vmem:[%s584 + $0x78] sm:$0xff]
        %v601 = vld [vmem:[%s584 + $0x80] sm:$0xff]
        %v602 = vld [vmem:[%s584 + $0x88] sm:$0xff]
        %v603 = vld [vmem:[%s584 + $0x90] sm:$0xff]
        %v604 = vld [vmem:[%s584 + $0x98] sm:$0xff]
        %v605 = vld [vmem:[%s584 + $0xa0] sm:$0xff]
        %v606 = vld [vmem:[%s584 + $0xa8] sm:$0xff]
        %v607 = vld [vmem:[%s584 + $0xb0] sm:$0xff]
        %v608 = vld [vmem:[%s584 + $0xb8] sm:$0xff]
        %v609 = vld [vmem:[%s584 + $0xc0] sm:$0xff]
        %v610 = vld [vmem:[%s584 + $0xc8] sm:$0xff]
        %v611 = vld [vmem:[%s584 + $0xd0] sm:$0xff]
        %v612 = vld [vmem:[%s584 + $0xd8] sm:$0xff]
        %v613 = vld [vmem:[%s584 + $0xe0] sm:$0xff]
        %v614 = vld [vmem:[%s584 + $0xe8] sm:$0xff]
        %v615 = vld [vmem:[%s584 + $0xf0] sm:$0xff]
        %v616 = vld [vmem:[%s584 + $0xf8] sm:$0xff]
        %v617 = vld [vmem:[%s584 + $0x100] sm:$0xff]
        %v618 = vld [vmem:[%s584 + $0x108] sm:$0xff]
        %v619 = vld [vmem:[%s584 + $0x110] sm:$0xff]
        %v620 = vld [vmem:[%s584 + $0x118] sm:$0xff]
        %v621 = vld [vmem:[%s584 + $0x120] sm:$0xff]
        %v622 = vld [vmem:[%s584 + $0x128] sm:$0xff]
        %623 = vmatprep.subr.mxu0 %v586
        %624 = vmatpush1.msra.mxu0 %v585
        %625 = vmatprep.subr.mxu0 %v588
        %626 = vmatpush1.msra.mxu0 %v587
        %627 = vmatprep.subr.mxu0 %v590
        %628 = vmatpush1.msra.mxu0 %v589
        %629 = vmatprep.subr.mxu0 %v592
        %630 = vmatpush1.msra.mxu0 %v591
        %631 = vmatprep.subr.mxu0 %v594
        %632 = vmatpush1.msra.mxu0 %v593
        %633 = vmatprep.subr.mxu0 %v596
        %634 = vmatpush1.msra.mxu0 %v595
        %635 = vmatprep.subr.mxu0 %v598
        %636 = vmatpush1.msra.mxu0 %v597
        %637 = vmatprep.subr.mxu0 %v600
        %638 = vmatpush1.msra.mxu0 %v599
        %639 = vmatprep.subr.mxu0 %v602
        %640 = vmatpush1.msra.mxu0 %v601
        %641 = vmatprep.subr.mxu0 %v604
        %642 = vmatpush1.msra.mxu0 %v603
        %643 = vmatprep.subr.mxu0 %v606
        %644 = vmatpush1.msra.mxu0 %v605
        %645 = vmatprep.subr.mxu0 %v608
        %646 = vmatpush1.msra.mxu0 %v607
        %647 = vmatprep.subr.mxu0 %v610
        %648 = vmatpush1.msra.mxu0 %v609
        %649 = vmatprep.subr.mxu0 %v612
        %650 = vmatpush1.msra.mxu0 %v611
        %651 = vmatprep.subr.mxu0 %v614
        %652 = vmatpush1.msra.mxu0 %v613
        %653 = vmatprep.subr.mxu0 %v616
        %654 = vmatpush1.msra.mxu0 %v615
        %655 = vmatprep.subr.mxu0 %v618
        %656 = vmatpush1.msra.mxu0 %v617
        %657 = vmatprep.subr.mxu0 %v620
        %658 = vmatpush1.msra.mxu0 %v619
        %659 = vmatprep.subr.mxu0 %v622
        %660 = vmatpush1.msra.mxu0 %v621
        %661 = vmatprep.subr.mxu0 0.0
        %662 = vmatpush1.msra.mxu0 0.0
        %663 = vmatprep.subr.mxu0 0.0
        %664 = vmatpush1.msra.mxu0 0.0
        %665 = vmatprep.subr.mxu0 0.0
        %666 = vmatpush1.msra.mxu0 0.0
        %667 = vmatprep.subr.mxu0 0.0
        %668 = vmatpush1.msra.mxu0 0.0
        %669 = vmatprep.subr.mxu0 0.0
        %670 = vmatpush1.msra.mxu0 0.0
        %671 = vmatprep.subr.mxu0 0.0
        %672 = vmatpush1.msra.mxu0 0.0
        %673 = vmatprep.subr.mxu0 0.0
        %674 = vmatpush1.msra.mxu0 0.0
        %675 = vmatprep.subr.mxu0 0.0
        %676 = vmatpush1.msra.mxu0 0.0
        %677 = vmatprep.subr.mxu0 0.0
        %678 = vmatpush1.msra.mxu0 0.0
        %679 = vmatprep.subr.mxu0 0.0
        %680 = vmatpush1.msra.mxu0 0.0
        %681 = vmatprep.subr.mxu0 0.0
        %682 = vmatpush1.msra.mxu0 0.0
        %683 = vmatprep.subr.mxu0 0.0
        %684 = vmatpush1.msra.mxu0 0.0
        %685 = vmatprep.subr.mxu0 0.0
        %686 = vmatpush1.msra.mxu0 0.0
        %687 = vmatprep.mubr.f32.mxu0 %v399
        %688 = vmatmul.mubr.f32.gmra.mrb[0].mxu0 %v357
        %v689 = vpop.f32.mrb[0].mxu0
        %v690 = vadd.f32 0.0, %v689
        %v691 = vpop.f32.mrb[0].mxu0
        %v692 = vadd.f32 0.0, %v691
        %693 = vdwg.mxu0
        %v694 = vmax.f32 %v582, %v690
        %v695 = vmax.f32 %v583, %v692
        %s696 = scalar_lea.vmem %s356, 912
        %v697 = vld [vmem:[%s696] sm:$0xff]
        %v698 = vld [vmem:[%s696 + $0x8] sm:$0xff]
        %v699 = vld [vmem:[%s696 + $0x10] sm:$0xff]
        %v700 = vld [vmem:[%s696 + $0x18] sm:$0xff]
        %v701 = vld [vmem:[%s696 + $0x20] sm:$0xff]
        %v702 = vld [vmem:[%s696 + $0x28] sm:$0xff]
        %v703 = vld [vmem:[%s696 + $0x30] sm:$0xff]
        %v704 = vld [vmem:[%s696 + $0x38] sm:$0xff]
        %v705 = vld [vmem:[%s696 + $0x40] sm:$0xff]
        %v706 = vld [vmem:[%s696 + $0x48] sm:$0xff]
        %v707 = vld [vmem:[%s696 + $0x50] sm:$0xff]
        %v708 = vld [vmem:[%s696 + $0x58] sm:$0xff]
        %v709 = vld [vmem:[%s696 + $0x60] sm:$0xff]
        %v710 = vld [vmem:[%s696 + $0x68] sm:$0xff]
        %v711 = vld [vmem:[%s696 + $0x70] sm:$0xff]
        %v712 = vld [vmem:[%s696 + $0x78] sm:$0xff]
        %v713 = vld [vmem:[%s696 + $0x80] sm:$0xff]
        %v714 = vld [vmem:[%s696 + $0x88] sm:$0xff]
        %v715 = vld [vmem:[%s696 + $0x90] sm:$0xff]
        %v716 = vld [vmem:[%s696 + $0x98] sm:$0xff]
        %v717 = vld [vmem:[%s696 + $0xa0] sm:$0xff]
        %v718 = vld [vmem:[%s696 + $0xa8] sm:$0xff]
        %v719 = vld [vmem:[%s696 + $0xb0] sm:$0xff]
        %v720 = vld [vmem:[%s696 + $0xb8] sm:$0xff]
        %v721 = vld [vmem:[%s696 + $0xc0] sm:$0xff]
        %v722 = vld [vmem:[%s696 + $0xc8] sm:$0xff]
        %v723 = vld [vmem:[%s696 + $0xd0] sm:$0xff]
        %v724 = vld [vmem:[%s696 + $0xd8] sm:$0xff]
        %v725 = vld [vmem:[%s696 + $0xe0] sm:$0xff]
        %v726 = vld [vmem:[%s696 + $0xe8] sm:$0xff]
        %v727 = vld [vmem:[%s696 + $0xf0] sm:$0xff]
        %v728 = vld [vmem:[%s696 + $0xf8] sm:$0xff]
        %v729 = vld [vmem:[%s696 + $0x100] sm:$0xff]
        %v730 = vld [vmem:[%s696 + $0x108] sm:$0xff]
        %v731 = vld [vmem:[%s696 + $0x110] sm:$0xff]
        %v732 = vld [vmem:[%s696 + $0x118] sm:$0xff]
        %v733 = vld [vmem:[%s696 + $0x120] sm:$0xff]
        %v734 = vld [vmem:[%s696 + $0x128] sm:$0xff]
        %735 = vmatprep.subr.mxu0 %v698
        %736 = vmatpush1.msra.mxu0 %v697
        %737 = vmatprep.subr.mxu0 %v700
        %738 = vmatpush1.msra.mxu0 %v699
        %739 = vmatprep.subr.mxu0 %v702
        %740 = vmatpush1.msra.mxu0 %v701
        %741 = vmatprep.subr.mxu0 %v704
        %742 = vmatpush1.msra.mxu0 %v703
        %743 = vmatprep.subr.mxu0 %v706
        %744 = vmatpush1.msra.mxu0 %v705
        %745 = vmatprep.subr.mxu0 %v708
        %746 = vmatpush1.msra.mxu0 %v707
        %747 = vmatprep.subr.mxu0 %v710
        %748 = vmatpush1.msra.mxu0 %v709
        %749 = vmatprep.subr.mxu0 %v712
        %750 = vmatpush1.msra.mxu0 %v711
        %751 = vmatprep.subr.mxu0 %v714
        %752 = vmatpush1.msra.mxu0 %v713
        %753 = vmatprep.subr.mxu0 %v716
        %754 = vmatpush1.msra.mxu0 %v715
        %755 = vmatprep.subr.mxu0 %v718
        %756 = vmatpush1.msra.mxu0 %v717
        %757 = vmatprep.subr.mxu0 %v720
        %758 = vmatpush1.msra.mxu0 %v719
        %759 = vmatprep.subr.mxu0 %v722
        %760 = vmatpush1.msra.mxu0 %v721
        %761 = vmatprep.subr.mxu0 %v724
        %762 = vmatpush1.msra.mxu0 %v723
        %763 = vmatprep.subr.mxu0 %v726
        %764 = vmatpush1.msra.mxu0 %v725
        %765 = vmatprep.subr.mxu0 %v728
        %766 = vmatpush1.msra.mxu0 %v727
        %767 = vmatprep.subr.mxu0 %v730
        %768 = vmatpush1.msra.mxu0 %v729
        %769 = vmatprep.subr.mxu0 %v732
        %770 = vmatpush1.msra.mxu0 %v731
        %771 = vmatprep.subr.mxu0 %v734
        %772 = vmatpush1.msra.mxu0 %v733
        %773 = vmatprep.subr.mxu0 0.0
        %774 = vmatpush1.msra.mxu0 0.0
        %775 = vmatprep.subr.mxu0 0.0
        %776 = vmatpush1.msra.mxu0 0.0
        %777 = vmatprep.subr.mxu0 0.0
        %778 = vmatpush1.msra.mxu0 0.0
        %779 = vmatprep.subr.mxu0 0.0
        %780 = vmatpush1.msra.mxu0 0.0
        %781 = vmatprep.subr.mxu0 0.0
        %782 = vmatpush1.msra.mxu0 0.0
        %783 = vmatprep.subr.mxu0 0.0
        %784 = vmatpush1.msra.mxu0 0.0
        %785 = vmatprep.subr.mxu0 0.0
        %786 = vmatpush1.msra.mxu0 0.0
        %787 = vmatprep.subr.mxu0 0.0
        %788 = vmatpush1.msra.mxu0 0.0
        %789 = vmatprep.subr.mxu0 0.0
        %790 = vmatpush1.msra.mxu0 0.0
        %791 = vmatprep.subr.mxu0 0.0
        %792 = vmatpush1.msra.mxu0 0.0
        %793 = vmatprep.subr.mxu0 0.0
        %794 = vmatpush1.msra.mxu0 0.0
        %795 = vmatprep.subr.mxu0 0.0
        %796 = vmatpush1.msra.mxu0 0.0
        %797 = vmatprep.subr.mxu0 0.0
        %798 = vmatpush1.msra.mxu0 0.0
        %799 = vmatprep.mubr.f32.mxu0 %v399
        %800 = vmatmul.mubr.f32.gmra.mrb[0].mxu0 %v357
        %v801 = vpop.f32.mrb[0].mxu0
        %v802 = vadd.f32 0.0, %v801
        %v803 = vpop.f32.mrb[0].mxu0
        %v804 = vadd.f32 0.0, %v803
        %805 = vdwg.mxu0
        %v806 = vmax.f32 %v694, %v802
        %v807 = vmax.f32 %v695, %v804
        %v808 = vld [vmem:[%s2] sm:$0xff]
        %810 = vset.pattern.permute.xlu0 0
        %811 = vperm.xlu0 %810, %v808
        %v812 = vpop.permute.xlu0 %811
        %v814 = vadd.f32 %v806, %v812
        %v815 = vadd.f32 %v807, %v812
        %v816 = vmax.f32 %v814, 0.0
        %v817 = vmax.f32 %v815, 0.0
        %v818 = vld [vmem:[%s3] sm:$0xff]
        %v819 = vld [vmem:[%s3 + $0x8] sm:$0xff]
        %v820 = vld [vmem:[%s3 + $0x10] sm:$0xff]
        %v821 = vld [vmem:[%s3 + $0x18] sm:$0xff]
        %v822 = vld [vmem:[%s3 + $0x20] sm:$0xff]
        %v823 = vld [vmem:[%s3 + $0x28] sm:$0xff]
        %v824 = vld [vmem:[%s3 + $0x30] sm:$0xff]
        %v825 = vld [vmem:[%s3 + $0x38] sm:$0xff]
        %v826 = vld [vmem:[%s3 + $0x40] sm:$0xff]
        %v827 = vld [vmem:[%s3 + $0x48] sm:$0xff]
        %v828 = vld [vmem:[%s3 + $0x50] sm:$0xff]
        %v829 = vld [vmem:[%s3 + $0x58] sm:$0xff]
        %v830 = vld [vmem:[%s3 + $0x60] sm:$0xff]
        %v831 = vld [vmem:[%s3 + $0x68] sm:$0xff]
        %v832 = vld [vmem:[%s3 + $0x70] sm:$0xff]
        %v833 = vld [vmem:[%s3 + $0x78] sm:$0xff]
        %v834 = vld [vmem:[%s3 + $0x80] sm:$0xff]
        %v835 = vld [vmem:[%s3 + $0x88] sm:$0xff]
        %v836 = vld [vmem:[%s3 + $0x90] sm:$0xff]
        %v837 = vld [vmem:[%s3 + $0x98] sm:$0xff]
        %v838 = vld [vmem:[%s3 + $0xa0] sm:$0xff]
        %v839 = vld [vmem:[%s3 + $0xa8] sm:$0xff]
        %v840 = vld [vmem:[%s3 + $0xb0] sm:$0xff]
        %v841 = vld [vmem:[%s3 + $0xb8] sm:$0xff]
        %v842 = vld [vmem:[%s3 + $0xc0] sm:$0xff]
        %v843 = vld [vmem:[%s3 + $0xc8] sm:$0xff]
        %v844 = vld [vmem:[%s3 + $0xd0] sm:$0xff]
        %v845 = vld [vmem:[%s3 + $0xd8] sm:$0xff]
        %v846 = vld [vmem:[%s3 + $0xe0] sm:$0xff]
        %v847 = vld [vmem:[%s3 + $0xe8] sm:$0xff]
        %v848 = vld [vmem:[%s3 + $0xf0] sm:$0xff]
        %v849 = vld [vmem:[%s3 + $0xf8] sm:$0xff]
        %v850 = vld [vmem:[%s3 + $0x100] sm:$0xff]
        %v851 = vld [vmem:[%s3 + $0x108] sm:$0xff]
        %v852 = vld [vmem:[%s3 + $0x110] sm:$0xff]
        %v853 = vld [vmem:[%s3 + $0x118] sm:$0xff]
        %v854 = vld [vmem:[%s3 + $0x120] sm:$0xff]
        %v855 = vld [vmem:[%s3 + $0x128] sm:$0xff]
        %v856 = vld [vmem:[%s3 + $0x130] sm:$0xff]
        %v857 = vld [vmem:[%s3 + $0x138] sm:$0xff]
        %v858 = vld [vmem:[%s3 + $0x140] sm:$0xff]
        %v859 = vld [vmem:[%s3 + $0x148] sm:$0xff]
        %v860 = vld [vmem:[%s3 + $0x150] sm:$0xff]
        %v861 = vld [vmem:[%s3 + $0x158] sm:$0xff]
        %v862 = vld [vmem:[%s3 + $0x160] sm:$0xff]
        %v863 = vld [vmem:[%s3 + $0x168] sm:$0xff]
        %v864 = vld [vmem:[%s3 + $0x170] sm:$0xff]
        %v865 = vld [vmem:[%s3 + $0x178] sm:$0xff]
        %v866 = vld [vmem:[%s3 + $0x180] sm:$0xff]
        %v867 = vld [vmem:[%s3 + $0x188] sm:$0xff]
        %v868 = vld [vmem:[%s3 + $0x190] sm:$0xff]
        %v869 = vld [vmem:[%s3 + $0x198] sm:$0xff]
        %v870 = vld [vmem:[%s3 + $0x1a0] sm:$0xff]
        %v871 = vld [vmem:[%s3 + $0x1a8] sm:$0xff]
        %v872 = vld [vmem:[%s3 + $0x1b0] sm:$0xff]
        %v873 = vld [vmem:[%s3 + $0x1b8] sm:$0xff]
        %v874 = vld [vmem:[%s3 + $0x1c0] sm:$0x1]
        %v875 = vld [vmem:[%s3 + $0x1c8] sm:$0x1]
        %vm876 = vcmask 793600
        %v878 = vsel %vm876, %v817, 0
        %vm880 = vcmask 1040384
        %v882 = vsel %vm880, %v874, 0
        %v885 = vsel %vm880, %v875, 0
        %887 = vmatprep.subr.mxu0 %v819
        %888 = vmatpush1.msra.mxu0 %v818
        %889 = vmatprep.subr.mxu0 %v821
        %890 = vmatpush1.msra.mxu0 %v820
        %891 = vmatprep.subr.mxu0 %v823
        %892 = vmatpush1.msra.mxu0 %v822
        %893 = vmatprep.subr.mxu0 %v825
        %894 = vmatpush1.msra.mxu0 %v824
        %895 = vmatprep.subr.mxu0 %v827
        %896 = vmatpush1.msra.mxu0 %v826
        %897 = vmatprep.subr.mxu0 %v829
        %898 = vmatpush1.msra.mxu0 %v828
        %899 = vmatprep.subr.mxu0 %v831
        %900 = vmatpush1.msra.mxu0 %v830
        %901 = vmatprep.subr.mxu0 %v833
        %902 = vmatpush1.msra.mxu0 %v832
        %903 = vmatprep.subr.mxu0 %v835
        %904 = vmatpush1.msra.mxu0 %v834
        %905 = vmatprep.subr.mxu0 %v837
        %906 = vmatpush1.msra.mxu0 %v836
        %907 = vmatprep.subr.mxu0 %v839
        %908 = vmatpush1.msra.mxu0 %v838
        %909 = vmatprep.subr.mxu0 %v841
        %910 = vmatpush1.msra.mxu0 %v840
        %911 = vmatprep.subr.mxu0 %v843
        %912 = vmatpush1.msra.mxu0 %v842
        %913 = vmatprep.subr.mxu0 %v845
        %914 = vmatpush1.msra.mxu0 %v844
        %915 = vmatprep.subr.mxu0 %v847
        %916 = vmatpush1.msra.mxu0 %v846
        %917 = vmatprep.subr.mxu0 %v849
        %918 = vmatpush1.msra.mxu0 %v848
        %919 = vmatprep.subr.mxu0 %v851
        %920 = vmatpush1.msra.mxu0 %v850
        %921 = vmatprep.subr.mxu0 %v853
        %922 = vmatpush1.msra.mxu0 %v852
        %923 = vmatprep.subr.mxu0 %v855
        %924 = vmatpush1.msra.mxu0 %v854
        %925 = vmatprep.subr.mxu0 %v857
        %926 = vmatpush1.msra.mxu0 %v856
        %927 = vmatprep.subr.mxu0 %v859
        %928 = vmatpush1.msra.mxu0 %v858
        %929 = vmatprep.subr.mxu0 %v861
        %930 = vmatpush1.msra.mxu0 %v860
        %931 = vmatprep.subr.mxu0 %v863
        %932 = vmatpush1.msra.mxu0 %v862
        %933 = vmatprep.subr.mxu0 %v865
        %934 = vmatpush1.msra.mxu0 %v864
        %935 = vmatprep.subr.mxu0 %v867
        %936 = vmatpush1.msra.mxu0 %v866
        %937 = vmatprep.subr.mxu0 %v869
        %938 = vmatpush1.msra.mxu0 %v868
        %939 = vmatprep.subr.mxu0 %v871
        %940 = vmatpush1.msra.mxu0 %v870
        %941 = vmatprep.subr.mxu0 %v873
        %942 = vmatpush1.msra.mxu0 %v872
        %943 = vmatprep.subr.mxu0 %v885
        %944 = vmatpush1.msra.mxu0 %v882
        %945 = vmatprep.subr.mxu0 0.0
        %946 = vmatpush1.msra.mxu0 0.0
        %947 = vmatprep.subr.mxu0 0.0
        %948 = vmatpush1.msra.mxu0 0.0
        %949 = vmatprep.subr.mxu0 0.0
        %950 = vmatpush1.msra.mxu0 0.0
        %951 = vmatprep.mubr.f32.mxu0 %v878
        %952 = vmatmul.mubr.f32.gmra.mrb[0].mxu0 %v816
        %v953 = vpop.f32.mrb[0].mxu0
        %v954 = vadd.f32 0.0, %v953
        %v955 = vpop.f32.mrb[0].mxu0
        %v956 = vadd.f32 0.0, %v955
        %957 = vdwg.mxu0
        %958 = vst [vmem:[#allocation2] sm:$0xff] %v954
        %vm959 = vcmask 130048
        %960 = vst.msk [vmem:[#allocation2 + $0x8] sm:$0xff] %vm959, %v956
        %s961 = scalar_lea.vmem %s3, 464
        %v962 = vld [vmem:[%s961] sm:$0xff]
        %v963 = vld [vmem:[%s961 + $0x8] sm:$0xff]
        %v964 = vld [vmem:[%s961 + $0x10] sm:$0xff]
        %v965 = vld [vmem:[%s961 + $0x18] sm:$0xff]
        %v966 = vld [vmem:[%s961 + $0x20] sm:$0xff]
        %v967 = vld [vmem:[%s961 + $0x28] sm:$0xff]
        %v968 = vld [vmem:[%s961 + $0x30] sm:$0xff]
        %v969 = vld [vmem:[%s961 + $0x38] sm:$0xff]
        %v970 = vld [vmem:[%s961 + $0x40] sm:$0xff]
        %v971 = vld [vmem:[%s961 + $0x48] sm:$0xff]
        %v972 = vld [vmem:[%s961 + $0x50] sm:$0xff]
        %v973 = vld [vmem:[%s961 + $0x58] sm:$0xff]
        %v974 = vld [vmem:[%s961 + $0x60] sm:$0xff]
        %v975 = vld [vmem:[%s961 + $0x68] sm:$0xff]
        %v976 = vld [vmem:[%s961 + $0x70] sm:$0xff]
        %v977 = vld [vmem:[%s961 + $0x78] sm:$0xff]
        %v978 = vld [vmem:[%s961 + $0x80] sm:$0xff]
        %v979 = vld [vmem:[%s961 + $0x88] sm:$0xff]
        %v980 = vld [vmem:[%s961 + $0x90] sm:$0xff]
        %v981 = vld [vmem:[%s961 + $0x98] sm:$0xff]
        %v982 = vld [vmem:[%s961 + $0xa0] sm:$0xff]
        %v983 = vld [vmem:[%s961 + $0xa8] sm:$0xff]
        %v984 = vld [vmem:[%s961 + $0xb0] sm:$0xff]
        %v985 = vld [vmem:[%s961 + $0xb8] sm:$0xff]
        %v986 = vld [vmem:[%s961 + $0xc0] sm:$0xff]
        %v987 = vld [vmem:[%s961 + $0xc8] sm:$0xff]
        %v988 = vld [vmem:[%s961 + $0xd0] sm:$0xff]
        %v989 = vld [vmem:[%s961 + $0xd8] sm:$0xff]
        %v990 = vld [vmem:[%s961 + $0xe0] sm:$0xff]
        %v991 = vld [vmem:[%s961 + $0xe8] sm:$0xff]
        %v992 = vld [vmem:[%s961 + $0xf0] sm:$0xff]
        %v993 = vld [vmem:[%s961 + $0xf8] sm:$0xff]
        %v994 = vld [vmem:[%s961 + $0x100] sm:$0xff]
        %v995 = vld [vmem:[%s961 + $0x108] sm:$0xff]
        %v996 = vld [vmem:[%s961 + $0x110] sm:$0xff]
        %v997 = vld [vmem:[%s961 + $0x118] sm:$0xff]
        %v998 = vld [vmem:[%s961 + $0x120] sm:$0xff]
        %v999 = vld [vmem:[%s961 + $0x128] sm:$0xff]
        %v1000 = vld [vmem:[%s961 + $0x130] sm:$0xff]
        %v1001 = vld [vmem:[%s961 + $0x138] sm:$0xff]
        %v1002 = vld [vmem:[%s961 + $0x140] sm:$0xff]
        %v1003 = vld [vmem:[%s961 + $0x148] sm:$0xff]
        %v1004 = vld [vmem:[%s961 + $0x150] sm:$0xff]
        %v1005 = vld [vmem:[%s961 + $0x158] sm:$0xff]
        %v1006 = vld [vmem:[%s961 + $0x160] sm:$0xff]
        %v1007 = vld [vmem:[%s961 + $0x168] sm:$0xff]
        %v1008 = vld [vmem:[%s961 + $0x170] sm:$0xff]
        %v1009 = vld [vmem:[%s961 + $0x178] sm:$0xff]
        %v1010 = vld [vmem:[%s961 + $0x180] sm:$0xff]
        %v1011 = vld [vmem:[%s961 + $0x188] sm:$0xff]
        %v1012 = vld [vmem:[%s961 + $0x190] sm:$0xff]
        %v1013 = vld [vmem:[%s961 + $0x198] sm:$0xff]
        %v1014 = vld [vmem:[%s961 + $0x1a0] sm:$0xff]
        %v1015 = vld [vmem:[%s961 + $0x1a8] sm:$0xff]
        %v1016 = vld [vmem:[%s961 + $0x1b0] sm:$0xff]
        %v1017 = vld [vmem:[%s961 + $0x1b8] sm:$0xff]
        %v1018 = vld [vmem:[%s961 + $0x1c0] sm:$0x1]
        %v1019 = vld [vmem:[%s961 + $0x1c8] sm:$0x1]
        %v1021 = vsel %vm880, %v1018, 0
        %v1024 = vsel %vm880, %v1019, 0
        %1026 = vmatprep.subr.mxu0 %v963
        %1027 = vmatpush1.msra.mxu0 %v962
        %1028 = vmatprep.subr.mxu0 %v965
        %1029 = vmatpush1.msra.mxu0 %v964
        %1030 = vmatprep.subr.mxu0 %v967
        %1031 = vmatpush1.msra.mxu0 %v966
        %1032 = vmatprep.subr.mxu0 %v969
        %1033 = vmatpush1.msra.mxu0 %v968
        %1034 = vmatprep.subr.mxu0 %v971
        %1035 = vmatpush1.msra.mxu0 %v970
        %1036 = vmatprep.subr.mxu0 %v973
        %1037 = vmatpush1.msra.mxu0 %v972
        %1038 = vmatprep.subr.mxu0 %v975
        %1039 = vmatpush1.msra.mxu0 %v974
        %1040 = vmatprep.subr.mxu0 %v977
        %1041 = vmatpush1.msra.mxu0 %v976
        %1042 = vmatprep.subr.mxu0 %v979
        %1043 = vmatpush1.msra.mxu0 %v978
        %1044 = vmatprep.subr.mxu0 %v981
        %1045 = vmatpush1.msra.mxu0 %v980
        %1046 = vmatprep.subr.mxu0 %v983
        %1047 = vmatpush1.msra.mxu0 %v982
        %1048 = vmatprep.subr.mxu0 %v985
        %1049 = vmatpush1.msra.mxu0 %v984
        %1050 = vmatprep.subr.mxu0 %v987
        %1051 = vmatpush1.msra.mxu0 %v986
        %1052 = vmatprep.subr.mxu0 %v989
        %1053 = vmatpush1.msra.mxu0 %v988
        %1054 = vmatprep.subr.mxu0 %v991
        %1055 = vmatpush1.msra.mxu0 %v990
        %1056 = vmatprep.subr.mxu0 %v993
        %1057 = vmatpush1.msra.mxu0 %v992
        %1058 = vmatprep.subr.mxu0 %v995
        %1059 = vmatpush1.msra.mxu0 %v994
        %1060 = vmatprep.subr.mxu0 %v997
        %1061 = vmatpush1.msra.mxu0 %v996
        %1062 = vmatprep.subr.mxu0 %v999
        %1063 = vmatpush1.msra.mxu0 %v998
        %1064 = vmatprep.subr.mxu0 %v1001
        %1065 = vmatpush1.msra.mxu0 %v1000
        %1066 = vmatprep.subr.mxu0 %v1003
        %1067 = vmatpush1.msra.mxu0 %v1002
        %1068 = vmatprep.subr.mxu0 %v1005
        %1069 = vmatpush1.msra.mxu0 %v1004
        %1070 = vmatprep.subr.mxu0 %v1007
        %1071 = vmatpush1.msra.mxu0 %v1006
        %1072 = vmatprep.subr.mxu0 %v1009
        %1073 = vmatpush1.msra.mxu0 %v1008
        %1074 = vmatprep.subr.mxu0 %v1011
        %1075 = vmatpush1.msra.mxu0 %v1010
        %1076 = vmatprep.subr.mxu0 %v1013
        %1077 = vmatpush1.msra.mxu0 %v1012
        %1078 = vmatprep.subr.mxu0 %v1015
        %1079 = vmatpush1.msra.mxu0 %v1014
        %1080 = vmatprep.subr.mxu0 %v1017
        %1081 = vmatpush1.msra.mxu0 %v1016
        %1082 = vmatprep.subr.mxu0 %v1024
        %1083 = vmatpush1.msra.mxu0 %v1021
        %1084 = vmatprep.subr.mxu0 0.0
        %1085 = vmatpush1.msra.mxu0 0.0
        %1086 = vmatprep.subr.mxu0 0.0
        %1087 = vmatpush1.msra.mxu0 0.0
        %1088 = vmatprep.subr.mxu0 0.0
        %1089 = vmatpush1.msra.mxu0 0.0
        %1090 = vmatprep.mubr.f32.mxu0 %v878
        %1091 = vmatmul.mubr.f32.gmra.mrb[0].mxu0 %v816
        %v1092 = vpop.f32.mrb[0].mxu0
        %v1093 = vadd.f32 0.0, %v1092
        %v1094 = vpop.f32.mrb[0].mxu0
        %v1095 = vadd.f32 0.0, %v1094
        %1096 = vdwg.mxu0
        %1097 = vst [vmem:[#allocation2 + $0x10] sm:$0xff] %v1093
        %1098 = vst.msk [vmem:[#allocation2 + $0x18] sm:$0xff] %vm959, %v1095
        %s1099 = scalar_lea.vmem %s3, 928
        %v1100 = vld [vmem:[%s1099] sm:$0xff]
        %v1101 = vld [vmem:[%s1099 + $0x8] sm:$0xff]
        %v1102 = vld [vmem:[%s1099 + $0x10] sm:$0xff]
        %v1103 = vld [vmem:[%s1099 + $0x18] sm:$0xff]
        %v1104 = vld [vmem:[%s1099 + $0x20] sm:$0xff]
        %v1105 = vld [vmem:[%s1099 + $0x28] sm:$0xff]
        %v1106 = vld [vmem:[%s1099 + $0x30] sm:$0xff]
        %v1107 = vld [vmem:[%s1099 + $0x38] sm:$0xff]
        %v1108 = vld [vmem:[%s1099 + $0x40] sm:$0xff]
        %v1109 = vld [vmem:[%s1099 + $0x48] sm:$0xff]
        %v1110 = vld [vmem:[%s1099 + $0x50] sm:$0xff]
        %v1111 = vld [vmem:[%s1099 + $0x58] sm:$0xff]
        %v1112 = vld [vmem:[%s1099 + $0x60] sm:$0xff]
        %v1113 = vld [vmem:[%s1099 + $0x68] sm:$0xff]
        %v1114 = vld [vmem:[%s1099 + $0x70] sm:$0xff]
        %v1115 = vld [vmem:[%s1099 + $0x78] sm:$0xff]
        %v1116 = vld [vmem:[%s1099 + $0x80] sm:$0xff]
        %v1117 = vld [vmem:[%s1099 + $0x88] sm:$0xff]
        %v1118 = vld [vmem:[%s1099 + $0x90] sm:$0xff]
        %v1119 = vld [vmem:[%s1099 + $0x98] sm:$0xff]
        %v1120 = vld [vmem:[%s1099 + $0xa0] sm:$0xff]
        %v1121 = vld [vmem:[%s1099 + $0xa8] sm:$0xff]
        %v1122 = vld [vmem:[%s1099 + $0xb0] sm:$0xff]
        %v1123 = vld [vmem:[%s1099 + $0xb8] sm:$0xff]
        %v1124 = vld [vmem:[%s1099 + $0xc0] sm:$0xff]
        %v1125 = vld [vmem:[%s1099 + $0xc8] sm:$0xff]
        %v1126 = vld [vmem:[%s1099 + $0xd0] sm:$0xff]
        %v1127 = vld [vmem:[%s1099 + $0xd8] sm:$0xff]
        %v1128 = vld [vmem:[%s1099 + $0xe0] sm:$0xff]
        %v1129 = vld [vmem:[%s1099 + $0xe8] sm:$0xff]
        %v1130 = vld [vmem:[%s1099 + $0xf0] sm:$0xff]
        %v1131 = vld [vmem:[%s1099 + $0xf8] sm:$0xff]
        %v1132 = vld [vmem:[%s1099 + $0x100] sm:$0xff]
        %v1133 = vld [vmem:[%s1099 + $0x108] sm:$0xff]
        %v1134 = vld [vmem:[%s1099 + $0x110] sm:$0xff]
        %v1135 = vld [vmem:[%s1099 + $0x118] sm:$0xff]
        %v1136 = vld [vmem:[%s1099 + $0x120] sm:$0xff]
        %v1137 = vld [vmem:[%s1099 + $0x128] sm:$0xff]
        %v1138 = vld [vmem:[%s1099 + $0x130] sm:$0xff]
        %v1139 = vld [vmem:[%s1099 + $0x138] sm:$0xff]
        %v1140 = vld [vmem:[%s1099 + $0x140] sm:$0xff]
        %v1141 = vld [vmem:[%s1099 + $0x148] sm:$0xff]
        %v1142 = vld [vmem:[%s1099 + $0x150] sm:$0xff]
        %v1143 = vld [vmem:[%s1099 + $0x158] sm:$0xff]
        %v1144 = vld [vmem:[%s1099 + $0x160] sm:$0xff]
        %v1145 = vld [vmem:[%s1099 + $0x168] sm:$0xff]
        %v1146 = vld [vmem:[%s1099 + $0x170] sm:$0xff]
        %v1147 = vld [vmem:[%s1099 + $0x178] sm:$0xff]
        %v1148 = vld [vmem:[%s1099 + $0x180] sm:$0xff]
        %v1149 = vld [vmem:[%s1099 + $0x188] sm:$0xff]
        %v1150 = vld [vmem:[%s1099 + $0x190] sm:$0xff]
        %v1151 = vld [vmem:[%s1099 + $0x198] sm:$0xff]
        %v1152 = vld [vmem:[%s1099 + $0x1a0] sm:$0xff]
        %v1153 = vld [vmem:[%s1099 + $0x1a8] sm:$0xff]
        %v1154 = vld [vmem:[%s1099 + $0x1b0] sm:$0xff]
        %v1155 = vld [vmem:[%s1099 + $0x1b8] sm:$0xff]
        %v1156 = vld [vmem:[%s1099 + $0x1c0] sm:$0x1]
        %v1157 = vld [vmem:[%s1099 + $0x1c8] sm:$0x1]
        %v1159 = vsel %vm880, %v1156, 0
        %v1162 = vsel %vm880, %v1157, 0
        %1164 = vmatprep.subr.mxu0 %v1101
        %1165 = vmatpush1.msra.mxu0 %v1100
        %1166 = vmatprep.subr.mxu0 %v1103
        %1167 = vmatpush1.msra.mxu0 %v1102
        %1168 = vmatprep.subr.mxu0 %v1105
        %1169 = vmatpush1.msra.mxu0 %v1104
        %1170 = vmatprep.subr.mxu0 %v1107
        %1171 = vmatpush1.msra.mxu0 %v1106
        %1172 = vmatprep.subr.mxu0 %v1109
        %1173 = vmatpush1.msra.mxu0 %v1108
        %1174 = vmatprep.subr.mxu0 %v1111
        %1175 = vmatpush1.msra.mxu0 %v1110
        %1176 = vmatprep.subr.mxu0 %v1113
        %1177 = vmatpush1.msra.mxu0 %v1112
        %1178 = vmatprep.subr.mxu0 %v1115
        %1179 = vmatpush1.msra.mxu0 %v1114
        %1180 = vmatprep.subr.mxu0 %v1117
        %1181 = vmatpush1.msra.mxu0 %v1116
        %1182 = vmatprep.subr.mxu0 %v1119
        %1183 = vmatpush1.msra.mxu0 %v1118
        %1184 = vmatprep.subr.mxu0 %v1121
        %1185 = vmatpush1.msra.mxu0 %v1120
        %1186 = vmatprep.subr.mxu0 %v1123
        %1187 = vmatpush1.msra.mxu0 %v1122
        %1188 = vmatprep.subr.mxu0 %v1125
        %1189 = vmatpush1.msra.mxu0 %v1124
        %1190 = vmatprep.subr.mxu0 %v1127
        %1191 = vmatpush1.msra.mxu0 %v1126
        %1192 = vmatprep.subr.mxu0 %v1129
        %1193 = vmatpush1.msra.mxu0 %v1128
        %1194 = vmatprep.subr.mxu0 %v1131
        %1195 = vmatpush1.msra.mxu0 %v1130
        %1196 = vmatprep.subr.mxu0 %v1133
        %1197 = vmatpush1.msra.mxu0 %v1132
        %1198 = vmatprep.subr.mxu0 %v1135
        %1199 = vmatpush1.msra.mxu0 %v1134
        %1200 = vmatprep.subr.mxu0 %v1137
        %1201 = vmatpush1.msra.mxu0 %v1136
        %1202 = vmatprep.subr.mxu0 %v1139
        %1203 = vmatpush1.msra.mxu0 %v1138
        %1204 = vmatprep.subr.mxu0 %v1141
        %1205 = vmatpush1.msra.mxu0 %v1140
        %1206 = vmatprep.subr.mxu0 %v1143
        %1207 = vmatpush1.msra.mxu0 %v1142
        %1208 = vmatprep.subr.mxu0 %v1145
        %1209 = vmatpush1.msra.mxu0 %v1144
        %1210 = vmatprep.subr.mxu0 %v1147
        %1211 = vmatpush1.msra.mxu0 %v1146
        %1212 = vmatprep.subr.mxu0 %v1149
        %1213 = vmatpush1.msra.mxu0 %v1148
        %1214 = vmatprep.subr.mxu0 %v1151
        %1215 = vmatpush1.msra.mxu0 %v1150
        %1216 = vmatprep.subr.mxu0 %v1153
        %1217 = vmatpush1.msra.mxu0 %v1152
        %1218 = vmatprep.subr.mxu0 %v1155
        %1219 = vmatpush1.msra.mxu0 %v1154
        %1220 = vmatprep.subr.mxu0 %v1162
        %1221 = vmatpush1.msra.mxu0 %v1159
        %1222 = vmatprep.subr.mxu0 0.0
        %1223 = vmatpush1.msra.mxu0 0.0
        %1224 = vmatprep.subr.mxu0 0.0
        %1225 = vmatpush1.msra.mxu0 0.0
        %1226 = vmatprep.subr.mxu0 0.0
        %1227 = vmatpush1.msra.mxu0 0.0
        %1228 = vmatprep.mubr.f32.mxu0 %v878
        %1229 = vmatmul.mubr.f32.gmra.mrb[0].mxu0 %v816
        %v1230 = vpop.f32.mrb[0].mxu0
        %v1231 = vadd.f32 0.0, %v1230
        %v1232 = vpop.f32.mrb[0].mxu0
        %v1233 = vadd.f32 0.0, %v1232
        %1234 = vdwg.mxu0
        %1235 = vst [vmem:[#allocation2 + $0x20] sm:$0xff] %v1231
        %1236 = vst.msk [vmem:[#allocation2 + $0x28] sm:$0xff] %vm959, %v1233
        %s1237 = scalar_lea.vmem %s3, 1392
        %v1238 = vld [vmem:[%s1237] sm:$0xff]
        %v1239 = vld [vmem:[%s1237 + $0x8] sm:$0xff]
        %v1240 = vld [vmem:[%s1237 + $0x10] sm:$0xff]
        %v1241 = vld [vmem:[%s1237 + $0x18] sm:$0xff]
        %v1242 = vld [vmem:[%s1237 + $0x20] sm:$0xff]
        %v1243 = vld [vmem:[%s1237 + $0x28] sm:$0xff]
        %v1244 = vld [vmem:[%s1237 + $0x30] sm:$0xff]
        %v1245 = vld [vmem:[%s1237 + $0x38] sm:$0xff]
        %v1246 = vld [vmem:[%s1237 + $0x40] sm:$0xff]
        %v1247 = vld [vmem:[%s1237 + $0x48] sm:$0xff]
        %v1248 = vld [vmem:[%s1237 + $0x50] sm:$0xff]
        %v1249 = vld [vmem:[%s1237 + $0x58] sm:$0xff]
        %v1250 = vld [vmem:[%s1237 + $0x60] sm:$0xff]
        %v1251 = vld [vmem:[%s1237 + $0x68] sm:$0xff]
        %v1252 = vld [vmem:[%s1237 + $0x70] sm:$0xff]
        %v1253 = vld [vmem:[%s1237 + $0x78] sm:$0xff]
        %v1254 = vld [vmem:[%s1237 + $0x80] sm:$0xff]
        %v1255 = vld [vmem:[%s1237 + $0x88] sm:$0xff]
        %v1256 = vld [vmem:[%s1237 + $0x90] sm:$0xff]
        %v1257 = vld [vmem:[%s1237 + $0x98] sm:$0xff]
        %v1258 = vld [vmem:[%s1237 + $0xa0] sm:$0xff]
        %v1259 = vld [vmem:[%s1237 + $0xa8] sm:$0xff]
        %v1260 = vld [vmem:[%s1237 + $0xb0] sm:$0xff]
        %v1261 = vld [vmem:[%s1237 + $0xb8] sm:$0xff]
        %v1262 = vld [vmem:[%s1237 + $0xc0] sm:$0xff]
        %v1263 = vld [vmem:[%s1237 + $0xc8] sm:$0xff]
        %v1264 = vld [vmem:[%s1237 + $0xd0] sm:$0xff]
        %v1265 = vld [vmem:[%s1237 + $0xd8] sm:$0xff]
        %v1266 = vld [vmem:[%s1237 + $0xe0] sm:$0xff]
        %v1267 = vld [vmem:[%s1237 + $0xe8] sm:$0xff]
        %v1268 = vld [vmem:[%s1237 + $0xf0] sm:$0xff]
        %v1269 = vld [vmem:[%s1237 + $0xf8] sm:$0xff]
        %v1270 = vld [vmem:[%s1237 + $0x100] sm:$0xff]
        %v1271 = vld [vmem:[%s1237 + $0x108] sm:$0xff]
        %v1272 = vld [vmem:[%s1237 + $0x110] sm:$0xff]
        %v1273 = vld [vmem:[%s1237 + $0x118] sm:$0xff]
        %v1274 = vld [vmem:[%s1237 + $0x120] sm:$0xff]
        %v1275 = vld [vmem:[%s1237 + $0x128] sm:$0xff]
        %v1276 = vld [vmem:[%s1237 + $0x130] sm:$0xff]
        %v1277 = vld [vmem:[%s1237 + $0x138] sm:$0xff]
        %v1278 = vld [vmem:[%s1237 + $0x140] sm:$0xff]
        %v1279 = vld [vmem:[%s1237 + $0x148] sm:$0xff]
        %v1280 = vld [vmem:[%s1237 + $0x150] sm:$0xff]
        %v1281 = vld [vmem:[%s1237 + $0x158] sm:$0xff]
        %v1282 = vld [vmem:[%s1237 + $0x160] sm:$0xff]
        %v1283 = vld [vmem:[%s1237 + $0x168] sm:$0xff]
        %v1284 = vld [vmem:[%s1237 + $0x170] sm:$0xff]
        %v1285 = vld [vmem:[%s1237 + $0x178] sm:$0xff]
        %v1286 = vld [vmem:[%s1237 + $0x180] sm:$0xff]
        %v1287 = vld [vmem:[%s1237 + $0x188] sm:$0xff]
        %v1288 = vld [vmem:[%s1237 + $0x190] sm:$0xff]
        %v1289 = vld [vmem:[%s1237 + $0x198] sm:$0xff]
        %v1290 = vld [vmem:[%s1237 + $0x1a0] sm:$0xff]
        %v1291 = vld [vmem:[%s1237 + $0x1a8] sm:$0xff]
        %v1292 = vld [vmem:[%s1237 + $0x1b0] sm:$0xff]
        %v1293 = vld [vmem:[%s1237 + $0x1b8] sm:$0xff]
        %v1294 = vld [vmem:[%s1237 + $0x1c0] sm:$0x1]
        %v1295 = vld [vmem:[%s1237 + $0x1c8] sm:$0x1]
        %v1297 = vsel %vm880, %v1294, 0
        %v1300 = vsel %vm880, %v1295, 0
        %1302 = vmatprep.subr.mxu0 %v1239
        %1303 = vmatpush1.msra.mxu0 %v1238
        %1304 = vmatprep.subr.mxu0 %v1241
        %1305 = vmatpush1.msra.mxu0 %v1240
        %1306 = vmatprep.subr.mxu0 %v1243
        %1307 = vmatpush1.msra.mxu0 %v1242
        %1308 = vmatprep.subr.mxu0 %v1245
        %1309 = vmatpush1.msra.mxu0 %v1244
        %1310 = vmatprep.subr.mxu0 %v1247
        %1311 = vmatpush1.msra.mxu0 %v1246
        %1312 = vmatprep.subr.mxu0 %v1249
        %1313 = vmatpush1.msra.mxu0 %v1248
        %1314 = vmatprep.subr.mxu0 %v1251
        %1315 = vmatpush1.msra.mxu0 %v1250
        %1316 = vmatprep.subr.mxu0 %v1253
        %1317 = vmatpush1.msra.mxu0 %v1252
        %1318 = vmatprep.subr.mxu0 %v1255
        %1319 = vmatpush1.msra.mxu0 %v1254
        %1320 = vmatprep.subr.mxu0 %v1257
        %1321 = vmatpush1.msra.mxu0 %v1256
        %1322 = vmatprep.subr.mxu0 %v1259
        %1323 = vmatpush1.msra.mxu0 %v1258
        %1324 = vmatprep.subr.mxu0 %v1261
        %1325 = vmatpush1.msra.mxu0 %v1260
        %1326 = vmatprep.subr.mxu0 %v1263
        %1327 = vmatpush1.msra.mxu0 %v1262
        %1328 = vmatprep.subr.mxu0 %v1265
        %1329 = vmatpush1.msra.mxu0 %v1264
        %1330 = vmatprep.subr.mxu0 %v1267
        %1331 = vmatpush1.msra.mxu0 %v1266
        %1332 = vmatprep.subr.mxu0 %v1269
        %1333 = vmatpush1.msra.mxu0 %v1268
        %1334 = vmatprep.subr.mxu0 %v1271
        %1335 = vmatpush1.msra.mxu0 %v1270
        %1336 = vmatprep.subr.mxu0 %v1273
        %1337 = vmatpush1.msra.mxu0 %v1272
        %1338 = vmatprep.subr.mxu0 %v1275
        %1339 = vmatpush1.msra.mxu0 %v1274
        %1340 = vmatprep.subr.mxu0 %v1277
        %1341 = vmatpush1.msra.mxu0 %v1276
        %1342 = vmatprep.subr.mxu0 %v1279
        %1343 = vmatpush1.msra.mxu0 %v1278
        %1344 = vmatprep.subr.mxu0 %v1281
        %1345 = vmatpush1.msra.mxu0 %v1280
        %1346 = vmatprep.subr.mxu0 %v1283
        %1347 = vmatpush1.msra.mxu0 %v1282
        %1348 = vmatprep.subr.mxu0 %v1285
        %1349 = vmatpush1.msra.mxu0 %v1284
        %1350 = vmatprep.subr.mxu0 %v1287
        %1351 = vmatpush1.msra.mxu0 %v1286
        %1352 = vmatprep.subr.mxu0 %v1289
        %1353 = vmatpush1.msra.mxu0 %v1288
        %1354 = vmatprep.subr.mxu0 %v1291
        %1355 = vmatpush1.msra.mxu0 %v1290
        %1356 = vmatprep.subr.mxu0 %v1293
        %1357 = vmatpush1.msra.mxu0 %v1292
        %1358 = vmatprep.subr.mxu0 %v1300
        %1359 = vmatpush1.msra.mxu0 %v1297
        %1360 = vmatprep.subr.mxu0 0.0
        %1361 = vmatpush1.msra.mxu0 0.0
        %1362 = vmatprep.subr.mxu0 0.0
        %1363 = vmatpush1.msra.mxu0 0.0
        %1364 = vmatprep.subr.mxu0 0.0
        %1365 = vmatpush1.msra.mxu0 0.0
        %1366 = vmatprep.mubr.f32.mxu0 %v878
        %1367 = vmatmul.mubr.f32.gmra.mrb[0].mxu0 %v816
        %v1368 = vpop.f32.mrb[0].mxu0
        %v1369 = vadd.f32 0.0, %v1368
        %v1370 = vpop.f32.mrb[0].mxu0
        %v1371 = vadd.f32 0.0, %v1370
        %1372 = vdwg.mxu0
        %1373 = vst [vmem:[#allocation2 + $0x30] sm:$0xff] %v1369
        %1374 = vst.msk [vmem:[#allocation2 + $0x38] sm:$0xff] %vm959, %v1371
        %s1375 = scalar_lea.vmem %s3, 1856
        %v1376 = vld [vmem:[%s1375] sm:$0xff]
        %v1377 = vld [vmem:[%s1375 + $0x8] sm:$0xff]
        %v1378 = vld [vmem:[%s1375 + $0x10] sm:$0xff]
        %v1379 = vld [vmem:[%s1375 + $0x18] sm:$0xff]
        %v1380 = vld [vmem:[%s1375 + $0x20] sm:$0xff]
        %v1381 = vld [vmem:[%s1375 + $0x28] sm:$0xff]
        %v1382 = vld [vmem:[%s1375 + $0x30] sm:$0xff]
        %v1383 = vld [vmem:[%s1375 + $0x38] sm:$0xff]
        %v1384 = vld [vmem:[%s1375 + $0x40] sm:$0xff]
        %v1385 = vld [vmem:[%s1375 + $0x48] sm:$0xff]
        %v1386 = vld [vmem:[%s1375 + $0x50] sm:$0xff]
        %v1387 = vld [vmem:[%s1375 + $0x58] sm:$0xff]
        %v1388 = vld [vmem:[%s1375 + $0x60] sm:$0xff]
        %v1389 = vld [vmem:[%s1375 + $0x68] sm:$0xff]
        %v1390 = vld [vmem:[%s1375 + $0x70] sm:$0xff]
        %v1391 = vld [vmem:[%s1375 + $0x78] sm:$0xff]
        %v1392 = vld [vmem:[%s1375 + $0x80] sm:$0xff]
        %v1393 = vld [vmem:[%s1375 + $0x88] sm:$0xff]
        %v1394 = vld [vmem:[%s1375 + $0x90] sm:$0xff]
        %v1395 = vld [vmem:[%s1375 + $0x98] sm:$0xff]
        %v1396 = vld [vmem:[%s1375 + $0xa0] sm:$0xff]
        %v1397 = vld [vmem:[%s1375 + $0xa8] sm:$0xff]
        %v1398 = vld [vmem:[%s1375 + $0xb0] sm:$0xff]
        %v1399 = vld [vmem:[%s1375 + $0xb8] sm:$0xff]
        %v1400 = vld [vmem:[%s1375 + $0xc0] sm:$0xff]
        %v1401 = vld [vmem:[%s1375 + $0xc8] sm:$0xff]
        %v1402 = vld [vmem:[%s1375 + $0xd0] sm:$0xff]
        %v1403 = vld [vmem:[%s1375 + $0xd8] sm:$0xff]
        %v1404 = vld [vmem:[%s1375 + $0xe0] sm:$0xff]
        %v1405 = vld [vmem:[%s1375 + $0xe8] sm:$0xff]
        %v1406 = vld [vmem:[%s1375 + $0xf0] sm:$0xff]
        %v1407 = vld [vmem:[%s1375 + $0xf8] sm:$0xff]
        %v1408 = vld [vmem:[%s1375 + $0x100] sm:$0xff]
        %v1409 = vld [vmem:[%s1375 + $0x108] sm:$0xff]
        %v1410 = vld [vmem:[%s1375 + $0x110] sm:$0xff]
        %v1411 = vld [vmem:[%s1375 + $0x118] sm:$0xff]
        %v1412 = vld [vmem:[%s1375 + $0x120] sm:$0xff]
        %v1413 = vld [vmem:[%s1375 + $0x128] sm:$0xff]
        %v1414 = vld [vmem:[%s1375 + $0x130] sm:$0xff]
        %v1415 = vld [vmem:[%s1375 + $0x138] sm:$0xff]
        %v1416 = vld [vmem:[%s1375 + $0x140] sm:$0xff]
        %v1417 = vld [vmem:[%s1375 + $0x148] sm:$0xff]
        %v1418 = vld [vmem:[%s1375 + $0x150] sm:$0xff]
        %v1419 = vld [vmem:[%s1375 + $0x158] sm:$0xff]
        %v1420 = vld [vmem:[%s1375 + $0x160] sm:$0xff]
        %v1421 = vld [vmem:[%s1375 + $0x168] sm:$0xff]
        %v1422 = vld [vmem:[%s1375 + $0x170] sm:$0xff]
        %v1423 = vld [vmem:[%s1375 + $0x178] sm:$0xff]
        %v1424 = vld [vmem:[%s1375 + $0x180] sm:$0xff]
        %v1425 = vld [vmem:[%s1375 + $0x188] sm:$0xff]
        %v1426 = vld [vmem:[%s1375 + $0x190] sm:$0xff]
        %v1427 = vld [vmem:[%s1375 + $0x198] sm:$0xff]
        %v1428 = vld [vmem:[%s1375 + $0x1a0] sm:$0xff]
        %v1429 = vld [vmem:[%s1375 + $0x1a8] sm:$0xff]
        %v1430 = vld [vmem:[%s1375 + $0x1b0] sm:$0xff]
        %v1431 = vld [vmem:[%s1375 + $0x1b8] sm:$0xff]
        %v1432 = vld [vmem:[%s1375 + $0x1c0] sm:$0x1]
        %v1433 = vld [vmem:[%s1375 + $0x1c8] sm:$0x1]
        %v1435 = vsel %vm880, %v1432, 0
        %v1438 = vsel %vm880, %v1433, 0
        %1440 = vmatprep.subr.mxu0 %v1377
        %1441 = vmatpush1.msra.mxu0 %v1376
        %1442 = vmatprep.subr.mxu0 %v1379
        %1443 = vmatpush1.msra.mxu0 %v1378
        %1444 = vmatprep.subr.mxu0 %v1381
        %1445 = vmatpush1.msra.mxu0 %v1380
        %1446 = vmatprep.subr.mxu0 %v1383
        %1447 = vmatpush1.msra.mxu0 %v1382
        %1448 = vmatprep.subr.mxu0 %v1385
        %1449 = vmatpush1.msra.mxu0 %v1384
        %1450 = vmatprep.subr.mxu0 %v1387
        %1451 = vmatpush1.msra.mxu0 %v1386
        %1452 = vmatprep.subr.mxu0 %v1389
        %1453 = vmatpush1.msra.mxu0 %v1388
        %1454 = vmatprep.subr.mxu0 %v1391
        %1455 = vmatpush1.msra.mxu0 %v1390
        %1456 = vmatprep.subr.mxu0 %v1393
        %1457 = vmatpush1.msra.mxu0 %v1392
        %1458 = vmatprep.subr.mxu0 %v1395
        %1459 = vmatpush1.msra.mxu0 %v1394
        %1460 = vmatprep.subr.mxu0 %v1397
        %1461 = vmatpush1.msra.mxu0 %v1396
        %1462 = vmatprep.subr.mxu0 %v1399
        %1463 = vmatpush1.msra.mxu0 %v1398
        %1464 = vmatprep.subr.mxu0 %v1401
        %1465 = vmatpush1.msra.mxu0 %v1400
        %1466 = vmatprep.subr.mxu0 %v1403
        %1467 = vmatpush1.msra.mxu0 %v1402
        %1468 = vmatprep.subr.mxu0 %v1405
        %1469 = vmatpush1.msra.mxu0 %v1404
        %1470 = vmatprep.subr.mxu0 %v1407
        %1471 = vmatpush1.msra.mxu0 %v1406
        %1472 = vmatprep.subr.mxu0 %v1409
        %1473 = vmatpush1.msra.mxu0 %v1408
        %1474 = vmatprep.subr.mxu0 %v1411
        %1475 = vmatpush1.msra.mxu0 %v1410
        %1476 = vmatprep.subr.mxu0 %v1413
        %1477 = vmatpush1.msra.mxu0 %v1412
        %1478 = vmatprep.subr.mxu0 %v1415
        %1479 = vmatpush1.msra.mxu0 %v1414
        %1480 = vmatprep.subr.mxu0 %v1417
        %1481 = vmatpush1.msra.mxu0 %v1416
        %1482 = vmatprep.subr.mxu0 %v1419
        %1483 = vmatpush1.msra.mxu0 %v1418
        %1484 = vmatprep.subr.mxu0 %v1421
        %1485 = vmatpush1.msra.mxu0 %v1420
        %1486 = vmatprep.subr.mxu0 %v1423
        %1487 = vmatpush1.msra.mxu0 %v1422
        %1488 = vmatprep.subr.mxu0 %v1425
        %1489 = vmatpush1.msra.mxu0 %v1424
        %1490 = vmatprep.subr.mxu0 %v1427
        %1491 = vmatpush1.msra.mxu0 %v1426
        %1492 = vmatprep.subr.mxu0 %v1429
        %1493 = vmatpush1.msra.mxu0 %v1428
        %1494 = vmatprep.subr.mxu0 %v1431
        %1495 = vmatpush1.msra.mxu0 %v1430
        %1496 = vmatprep.subr.mxu0 %v1438
        %1497 = vmatpush1.msra.mxu0 %v1435
        %1498 = vmatprep.subr.mxu0 0.0
        %1499 = vmatpush1.msra.mxu0 0.0
        %1500 = vmatprep.subr.mxu0 0.0
        %1501 = vmatpush1.msra.mxu0 0.0
        %1502 = vmatprep.subr.mxu0 0.0
        %1503 = vmatpush1.msra.mxu0 0.0
        %1504 = vmatprep.mubr.f32.mxu0 %v878
        %1505 = vmatmul.mubr.f32.gmra.mrb[0].mxu0 %v816
        %v1506 = vpop.f32.mrb[0].mxu0
        %v1507 = vadd.f32 0.0, %v1506
        %v1508 = vpop.f32.mrb[0].mxu0
        %v1509 = vadd.f32 0.0, %v1508
        %1510 = vdwg.mxu0
        %1511 = vst [vmem:[#allocation2 + $0x40] sm:$0xff] %v1507
        %1512 = vst.msk [vmem:[#allocation2 + $0x48] sm:$0xff] %vm959, %v1509
        %s1513 = scalar_lea.vmem %s3, 2320
        %v1514 = vld [vmem:[%s1513] sm:$0xff]
        %v1515 = vld [vmem:[%s1513 + $0x8] sm:$0xff]
        %v1516 = vld [vmem:[%s1513 + $0x10] sm:$0xff]
        %v1517 = vld [vmem:[%s1513 + $0x18] sm:$0xff]
        %v1518 = vld [vmem:[%s1513 + $0x20] sm:$0xff]
        %v1519 = vld [vmem:[%s1513 + $0x28] sm:$0xff]
        %v1520 = vld [vmem:[%s1513 + $0x30] sm:$0xff]
        %v1521 = vld [vmem:[%s1513 + $0x38] sm:$0xff]
        %v1522 = vld [vmem:[%s1513 + $0x40] sm:$0xff]
        %v1523 = vld [vmem:[%s1513 + $0x48] sm:$0xff]
        %v1524 = vld [vmem:[%s1513 + $0x50] sm:$0xff]
        %v1525 = vld [vmem:[%s1513 + $0x58] sm:$0xff]
        %v1526 = vld [vmem:[%s1513 + $0x60] sm:$0xff]
        %v1527 = vld [vmem:[%s1513 + $0x68] sm:$0xff]
        %v1528 = vld [vmem:[%s1513 + $0x70] sm:$0xff]
        %v1529 = vld [vmem:[%s1513 + $0x78] sm:$0xff]
        %v1530 = vld [vmem:[%s1513 + $0x80] sm:$0xff]
        %v1531 = vld [vmem:[%s1513 + $0x88] sm:$0xff]
        %v1532 = vld [vmem:[%s1513 + $0x90] sm:$0xff]
        %v1533 = vld [vmem:[%s1513 + $0x98] sm:$0xff]
        %v1534 = vld [vmem:[%s1513 + $0xa0] sm:$0xff]
        %v1535 = vld [vmem:[%s1513 + $0xa8] sm:$0xff]
        %v1536 = vld [vmem:[%s1513 + $0xb0] sm:$0xff]
        %v1537 = vld [vmem:[%s1513 + $0xb8] sm:$0xff]
        %v1538 = vld [vmem:[%s1513 + $0xc0] sm:$0xff]
        %v1539 = vld [vmem:[%s1513 + $0xc8] sm:$0xff]
        %v1540 = vld [vmem:[%s1513 + $0xd0] sm:$0xff]
        %v1541 = vld [vmem:[%s1513 + $0xd8] sm:$0xff]
        %v1542 = vld [vmem:[%s1513 + $0xe0] sm:$0xff]
        %v1543 = vld [vmem:[%s1513 + $0xe8] sm:$0xff]
        %v1544 = vld [vmem:[%s1513 + $0xf0] sm:$0xff]
        %v1545 = vld [vmem:[%s1513 + $0xf8] sm:$0xff]
        %v1546 = vld [vmem:[%s1513 + $0x100] sm:$0xff]
        %v1547 = vld [vmem:[%s1513 + $0x108] sm:$0xff]
        %v1548 = vld [vmem:[%s1513 + $0x110] sm:$0xff]
        %v1549 = vld [vmem:[%s1513 + $0x118] sm:$0xff]
        %v1550 = vld [vmem:[%s1513 + $0x120] sm:$0xff]
        %v1551 = vld [vmem:[%s1513 + $0x128] sm:$0xff]
        %v1552 = vld [vmem:[%s1513 + $0x130] sm:$0xff]
        %v1553 = vld [vmem:[%s1513 + $0x138] sm:$0xff]
        %v1554 = vld [vmem:[%s1513 + $0x140] sm:$0xff]
        %v1555 = vld [vmem:[%s1513 + $0x148] sm:$0xff]
        %v1556 = vld [vmem:[%s1513 + $0x150] sm:$0xff]
        %v1557 = vld [vmem:[%s1513 + $0x158] sm:$0xff]
        %v1558 = vld [vmem:[%s1513 + $0x160] sm:$0xff]
        %v1559 = vld [vmem:[%s1513 + $0x168] sm:$0xff]
        %v1560 = vld [vmem:[%s1513 + $0x170] sm:$0xff]
        %v1561 = vld [vmem:[%s1513 + $0x178] sm:$0xff]
        %v1562 = vld [vmem:[%s1513 + $0x180] sm:$0xff]
        %v1563 = vld [vmem:[%s1513 + $0x188] sm:$0xff]
        %v1564 = vld [vmem:[%s1513 + $0x190] sm:$0xff]
        %v1565 = vld [vmem:[%s1513 + $0x198] sm:$0xff]
        %v1566 = vld [vmem:[%s1513 + $0x1a0] sm:$0xff]
        %v1567 = vld [vmem:[%s1513 + $0x1a8] sm:$0xff]
        %v1568 = vld [vmem:[%s1513 + $0x1b0] sm:$0xff]
        %v1569 = vld [vmem:[%s1513 + $0x1b8] sm:$0xff]
        %v1570 = vld [vmem:[%s1513 + $0x1c0] sm:$0x1]
        %v1571 = vld [vmem:[%s1513 + $0x1c8] sm:$0x1]
        %v1573 = vsel %vm880, %v1570, 0
        %v1576 = vsel %vm880, %v1571, 0
        %1578 = vmatprep.subr.mxu0 %v1515
        %1579 = vmatpush1.msra.mxu0 %v1514
        %1580 = vmatprep.subr.mxu0 %v1517
        %1581 = vmatpush1.msra.mxu0 %v1516
        %1582 = vmatprep.subr.mxu0 %v1519
        %1583 = vmatpush1.msra.mxu0 %v1518
        %1584 = vmatprep.subr.mxu0 %v1521
        %1585 = vmatpush1.msra.mxu0 %v1520
        %1586 = vmatprep.subr.mxu0 %v1523
        %1587 = vmatpush1.msra.mxu0 %v1522
        %1588 = vmatprep.subr.mxu0 %v1525
        %1589 = vmatpush1.msra.mxu0 %v1524
        %1590 = vmatprep.subr.mxu0 %v1527
        %1591 = vmatpush1.msra.mxu0 %v1526
        %1592 = vmatprep.subr.mxu0 %v1529
        %1593 = vmatpush1.msra.mxu0 %v1528
        %1594 = vmatprep.subr.mxu0 %v1531
        %1595 = vmatpush1.msra.mxu0 %v1530
        %1596 = vmatprep.subr.mxu0 %v1533
        %1597 = vmatpush1.msra.mxu0 %v1532
        %1598 = vmatprep.subr.mxu0 %v1535
        %1599 = vmatpush1.msra.mxu0 %v1534
        %1600 = vmatprep.subr.mxu0 %v1537
        %1601 = vmatpush1.msra.mxu0 %v1536
        %1602 = vmatprep.subr.mxu0 %v1539
        %1603 = vmatpush1.msra.mxu0 %v1538
        %1604 = vmatprep.subr.mxu0 %v1541
        %1605 = vmatpush1.msra.mxu0 %v1540
        %1606 = vmatprep.subr.mxu0 %v1543
        %1607 = vmatpush1.msra.mxu0 %v1542
        %1608 = vmatprep.subr.mxu0 %v1545
        %1609 = vmatpush1.msra.mxu0 %v1544
        %1610 = vmatprep.subr.mxu0 %v1547
        %1611 = vmatpush1.msra.mxu0 %v1546
        %1612 = vmatprep.subr.mxu0 %v1549
        %1613 = vmatpush1.msra.mxu0 %v1548
        %1614 = vmatprep.subr.mxu0 %v1551
        %1615 = vmatpush1.msra.mxu0 %v1550
        %1616 = vmatprep.subr.mxu0 %v1553
        %1617 = vmatpush1.msra.mxu0 %v1552
        %1618 = vmatprep.subr.mxu0 %v1555
        %1619 = vmatpush1.msra.mxu0 %v1554
        %1620 = vmatprep.subr.mxu0 %v1557
        %1621 = vmatpush1.msra.mxu0 %v1556
        %1622 = vmatprep.subr.mxu0 %v1559
        %1623 = vmatpush1.msra.mxu0 %v1558
        %1624 = vmatprep.subr.mxu0 %v1561
        %1625 = vmatpush1.msra.mxu0 %v1560
        %1626 = vmatprep.subr.mxu0 %v1563
        %1627 = vmatpush1.msra.mxu0 %v1562
        %1628 = vmatprep.subr.mxu0 %v1565
        %1629 = vmatpush1.msra.mxu0 %v1564
        %1630 = vmatprep.subr.mxu0 %v1567
        %1631 = vmatpush1.msra.mxu0 %v1566
        %1632 = vmatprep.subr.mxu0 %v1569
        %1633 = vmatpush1.msra.mxu0 %v1568
        %1634 = vmatprep.subr.mxu0 %v1576
        %1635 = vmatpush1.msra.mxu0 %v1573
        %1636 = vmatprep.subr.mxu0 0.0
        %1637 = vmatpush1.msra.mxu0 0.0
        %1638 = vmatprep.subr.mxu0 0.0
        %1639 = vmatpush1.msra.mxu0 0.0
        %1640 = vmatprep.subr.mxu0 0.0
        %1641 = vmatpush1.msra.mxu0 0.0
        %1642 = vmatprep.mubr.f32.mxu0 %v878
        %1643 = vmatmul.mubr.f32.gmra.mrb[0].mxu0 %v816
        %v1644 = vpop.f32.mrb[0].mxu0
        %v1645 = vadd.f32 0.0, %v1644
        %v1646 = vpop.f32.mrb[0].mxu0
        %v1647 = vadd.f32 0.0, %v1646
        %1648 = vdwg.mxu0
        %1649 = vst [vmem:[#allocation2 + $0x50] sm:$0xff] %v1645
        %1650 = vst.msk [vmem:[#allocation2 + $0x58] sm:$0xff] %vm959, %v1647
        %s1651 = scalar_lea.vmem %s3, 2784
        %v1652 = vld [vmem:[%s1651] sm:$0xff]
        %v1653 = vld [vmem:[%s1651 + $0x8] sm:$0xff]
        %v1654 = vld [vmem:[%s1651 + $0x10] sm:$0xff]
        %v1655 = vld [vmem:[%s1651 + $0x18] sm:$0xff]
        %v1656 = vld [vmem:[%s1651 + $0x20] sm:$0xff]
        %v1657 = vld [vmem:[%s1651 + $0x28] sm:$0xff]
        %v1658 = vld [vmem:[%s1651 + $0x30] sm:$0xff]
        %v1659 = vld [vmem:[%s1651 + $0x38] sm:$0xff]
        %v1660 = vld [vmem:[%s1651 + $0x40] sm:$0xff]
        %v1661 = vld [vmem:[%s1651 + $0x48] sm:$0xff]
        %v1662 = vld [vmem:[%s1651 + $0x50] sm:$0xff]
        %v1663 = vld [vmem:[%s1651 + $0x58] sm:$0xff]
        %v1664 = vld [vmem:[%s1651 + $0x60] sm:$0xff]
        %v1665 = vld [vmem:[%s1651 + $0x68] sm:$0xff]
        %v1666 = vld [vmem:[%s1651 + $0x70] sm:$0xff]
        %v1667 = vld [vmem:[%s1651 + $0x78] sm:$0xff]
        %v1668 = vld [vmem:[%s1651 + $0x80] sm:$0xff]
        %v1669 = vld [vmem:[%s1651 + $0x88] sm:$0xff]
        %v1670 = vld [vmem:[%s1651 + $0x90] sm:$0xff]
        %v1671 = vld [vmem:[%s1651 + $0x98] sm:$0xff]
        %v1672 = vld [vmem:[%s1651 + $0xa0] sm:$0xff]
        %v1673 = vld [vmem:[%s1651 + $0xa8] sm:$0xff]
        %v1674 = vld [vmem:[%s1651 + $0xb0] sm:$0xff]
        %v1675 = vld [vmem:[%s1651 + $0xb8] sm:$0xff]
        %v1676 = vld [vmem:[%s1651 + $0xc0] sm:$0xff]
        %v1677 = vld [vmem:[%s1651 + $0xc8] sm:$0xff]
        %v1678 = vld [vmem:[%s1651 + $0xd0] sm:$0xff]
        %v1679 = vld [vmem:[%s1651 + $0xd8] sm:$0xff]
        %v1680 = vld [vmem:[%s1651 + $0xe0] sm:$0xff]
        %v1681 = vld [vmem:[%s1651 + $0xe8] sm:$0xff]
        %v1682 = vld [vmem:[%s1651 + $0xf0] sm:$0xff]
        %v1683 = vld [vmem:[%s1651 + $0xf8] sm:$0xff]
        %v1684 = vld [vmem:[%s1651 + $0x100] sm:$0xff]
        %v1685 = vld [vmem:[%s1651 + $0x108] sm:$0xff]
        %v1686 = vld [vmem:[%s1651 + $0x110] sm:$0xff]
        %v1687 = vld [vmem:[%s1651 + $0x118] sm:$0xff]
        %v1688 = vld [vmem:[%s1651 + $0x120] sm:$0xff]
        %v1689 = vld [vmem:[%s1651 + $0x128] sm:$0xff]
        %v1690 = vld [vmem:[%s1651 + $0x130] sm:$0xff]
        %v1691 = vld [vmem:[%s1651 + $0x138] sm:$0xff]
        %v1692 = vld [vmem:[%s1651 + $0x140] sm:$0xff]
        %v1693 = vld [vmem:[%s1651 + $0x148] sm:$0xff]
        %v1694 = vld [vmem:[%s1651 + $0x150] sm:$0xff]
        %v1695 = vld [vmem:[%s1651 + $0x158] sm:$0xff]
        %v1696 = vld [vmem:[%s1651 + $0x160] sm:$0xff]
        %v1697 = vld [vmem:[%s1651 + $0x168] sm:$0xff]
        %v1698 = vld [vmem:[%s1651 + $0x170] sm:$0xff]
        %v1699 = vld [vmem:[%s1651 + $0x178] sm:$0xff]
        %v1700 = vld [vmem:[%s1651 + $0x180] sm:$0xff]
        %v1701 = vld [vmem:[%s1651 + $0x188] sm:$0xff]
        %v1702 = vld [vmem:[%s1651 + $0x190] sm:$0xff]
        %v1703 = vld [vmem:[%s1651 + $0x198] sm:$0xff]
        %v1704 = vld [vmem:[%s1651 + $0x1a0] sm:$0xff]
        %v1705 = vld [vmem:[%s1651 + $0x1a8] sm:$0xff]
        %v1706 = vld [vmem:[%s1651 + $0x1b0] sm:$0xff]
        %v1707 = vld [vmem:[%s1651 + $0x1b8] sm:$0xff]
        %v1708 = vld [vmem:[%s1651 + $0x1c0] sm:$0x1]
        %v1709 = vld [vmem:[%s1651 + $0x1c8] sm:$0x1]
        %v1711 = vsel %vm880, %v1708, 0
        %v1714 = vsel %vm880, %v1709, 0
        %1716 = vmatprep.subr.mxu0 %v1653
        %1717 = vmatpush1.msra.mxu0 %v1652
        %1718 = vmatprep.subr.mxu0 %v1655
        %1719 = vmatpush1.msra.mxu0 %v1654
        %1720 = vmatprep.subr.mxu0 %v1657
        %1721 = vmatpush1.msra.mxu0 %v1656
        %1722 = vmatprep.subr.mxu0 %v1659
        %1723 = vmatpush1.msra.mxu0 %v1658
        %1724 = vmatprep.subr.mxu0 %v1661
        %1725 = vmatpush1.msra.mxu0 %v1660
        %1726 = vmatprep.subr.mxu0 %v1663
        %1727 = vmatpush1.msra.mxu0 %v1662
        %1728 = vmatprep.subr.mxu0 %v1665
        %1729 = vmatpush1.msra.mxu0 %v1664
        %1730 = vmatprep.subr.mxu0 %v1667
        %1731 = vmatpush1.msra.mxu0 %v1666
        %1732 = vmatprep.subr.mxu0 %v1669
        %1733 = vmatpush1.msra.mxu0 %v1668
        %1734 = vmatprep.subr.mxu0 %v1671
        %1735 = vmatpush1.msra.mxu0 %v1670
        %1736 = vmatprep.subr.mxu0 %v1673
        %1737 = vmatpush1.msra.mxu0 %v1672
        %1738 = vmatprep.subr.mxu0 %v1675
        %1739 = vmatpush1.msra.mxu0 %v1674
        %1740 = vmatprep.subr.mxu0 %v1677
        %1741 = vmatpush1.msra.mxu0 %v1676
        %1742 = vmatprep.subr.mxu0 %v1679
        %1743 = vmatpush1.msra.mxu0 %v1678
        %1744 = vmatprep.subr.mxu0 %v1681
        %1745 = vmatpush1.msra.mxu0 %v1680
        %1746 = vmatprep.subr.mxu0 %v1683
        %1747 = vmatpush1.msra.mxu0 %v1682
        %1748 = vmatprep.subr.mxu0 %v1685
        %1749 = vmatpush1.msra.mxu0 %v1684
        %1750 = vmatprep.subr.mxu0 %v1687
        %1751 = vmatpush1.msra.mxu0 %v1686
        %1752 = vmatprep.subr.mxu0 %v1689
        %1753 = vmatpush1.msra.mxu0 %v1688
        %1754 = vmatprep.subr.mxu0 %v1691
        %1755 = vmatpush1.msra.mxu0 %v1690
        %1756 = vmatprep.subr.mxu0 %v1693
        %1757 = vmatpush1.msra.mxu0 %v1692
        %1758 = vmatprep.subr.mxu0 %v1695
        %1759 = vmatpush1.msra.mxu0 %v1694
        %1760 = vmatprep.subr.mxu0 %v1697
        %1761 = vmatpush1.msra.mxu0 %v1696
        %1762 = vmatprep.subr.mxu0 %v1699
        %1763 = vmatpush1.msra.mxu0 %v1698
        %1764 = vmatprep.subr.mxu0 %v1701
        %1765 = vmatpush1.msra.mxu0 %v1700
        %1766 = vmatprep.subr.mxu0 %v1703
        %1767 = vmatpush1.msra.mxu0 %v1702
        %1768 = vmatprep.subr.mxu0 %v1705
        %1769 = vmatpush1.msra.mxu0 %v1704
        %1770 = vmatprep.subr.mxu0 %v1707
        %1771 = vmatpush1.msra.mxu0 %v1706
        %1772 = vmatprep.subr.mxu0 %v1714
        %1773 = vmatpush1.msra.mxu0 %v1711
        %1774 = vmatprep.subr.mxu0 0.0
        %1775 = vmatpush1.msra.mxu0 0.0
        %1776 = vmatprep.subr.mxu0 0.0
        %1777 = vmatpush1.msra.mxu0 0.0
        %1778 = vmatprep.subr.mxu0 0.0
        %1779 = vmatpush1.msra.mxu0 0.0
        %1780 = vmatprep.mubr.f32.mxu0 %v878
        %1781 = vmatmul.mubr.f32.gmra.mrb[0].mxu0 %v816
        %v1782 = vpop.f32.mrb[0].mxu0
        %v1783 = vadd.f32 0.0, %v1782
        %v1784 = vpop.f32.mrb[0].mxu0
        %v1785 = vadd.f32 0.0, %v1784
        %1786 = vdwg.mxu0
        %1787 = vst [vmem:[#allocation2 + $0x60] sm:$0xff] %v1783
        %1788 = vst.msk [vmem:[#allocation2 + $0x68] sm:$0xff] %vm959, %v1785
        %s1789 = scalar_lea.vmem %s3, 3248
        %v1790 = vld [vmem:[%s1789] sm:$0xff]
        %v1791 = vld [vmem:[%s1789 + $0x8] sm:$0xff]
        %v1792 = vld [vmem:[%s1789 + $0x10] sm:$0xff]
        %v1793 = vld [vmem:[%s1789 + $0x18] sm:$0xff]
        %v1794 = vld [vmem:[%s1789 + $0x20] sm:$0xff]
        %v1795 = vld [vmem:[%s1789 + $0x28] sm:$0xff]
        %v1796 = vld [vmem:[%s1789 + $0x30] sm:$0xff]
        %v1797 = vld [vmem:[%s1789 + $0x38] sm:$0xff]
        %v1798 = vld [vmem:[%s1789 + $0x40] sm:$0xff]
        %v1799 = vld [vmem:[%s1789 + $0x48] sm:$0xff]
        %v1800 = vld [vmem:[%s1789 + $0x50] sm:$0xff]
        %v1801 = vld [vmem:[%s1789 + $0x58] sm:$0xff]
        %v1802 = vld [vmem:[%s1789 + $0x60] sm:$0xff]
        %v1803 = vld [vmem:[%s1789 + $0x68] sm:$0xff]
        %v1804 = vld [vmem:[%s1789 + $0x70] sm:$0xff]
        %v1805 = vld [vmem:[%s1789 + $0x78] sm:$0xff]
        %v1806 = vld [vmem:[%s1789 + $0x80] sm:$0xff]
        %v1807 = vld [vmem:[%s1789 + $0x88] sm:$0xff]
        %v1808 = vld [vmem:[%s1789 + $0x90] sm:$0xff]
        %v1809 = vld [vmem:[%s1789 + $0x98] sm:$0xff]
        %v1810 = vld [vmem:[%s1789 + $0xa0] sm:$0xff]
        %v1811 = vld [vmem:[%s1789 + $0xa8] sm:$0xff]
        %v1812 = vld [vmem:[%s1789 + $0xb0] sm:$0xff]
        %v1813 = vld [vmem:[%s1789 + $0xb8] sm:$0xff]
        %v1814 = vld [vmem:[%s1789 + $0xc0] sm:$0xff]
        %v1815 = vld [vmem:[%s1789 + $0xc8] sm:$0xff]
        %v1816 = vld [vmem:[%s1789 + $0xd0] sm:$0xff]
        %v1817 = vld [vmem:[%s1789 + $0xd8] sm:$0xff]
        %v1818 = vld [vmem:[%s1789 + $0xe0] sm:$0xff]
        %v1819 = vld [vmem:[%s1789 + $0xe8] sm:$0xff]
        %v1820 = vld [vmem:[%s1789 + $0xf0] sm:$0xff]
        %v1821 = vld [vmem:[%s1789 + $0xf8] sm:$0xff]
        %v1822 = vld [vmem:[%s1789 + $0x100] sm:$0xff]
        %v1823 = vld [vmem:[%s1789 + $0x108] sm:$0xff]
        %v1824 = vld [vmem:[%s1789 + $0x110] sm:$0xff]
        %v1825 = vld [vmem:[%s1789 + $0x118] sm:$0xff]
        %v1826 = vld [vmem:[%s1789 + $0x120] sm:$0xff]
        %v1827 = vld [vmem:[%s1789 + $0x128] sm:$0xff]
        %v1828 = vld [vmem:[%s1789 + $0x130] sm:$0xff]
        %v1829 = vld [vmem:[%s1789 + $0x138] sm:$0xff]
        %v1830 = vld [vmem:[%s1789 + $0x140] sm:$0xff]
        %v1831 = vld [vmem:[%s1789 + $0x148] sm:$0xff]
        %v1832 = vld [vmem:[%s1789 + $0x150] sm:$0xff]
        %v1833 = vld [vmem:[%s1789 + $0x158] sm:$0xff]
        %v1834 = vld [vmem:[%s1789 + $0x160] sm:$0xff]
        %v1835 = vld [vmem:[%s1789 + $0x168] sm:$0xff]
        %v1836 = vld [vmem:[%s1789 + $0x170] sm:$0xff]
        %v1837 = vld [vmem:[%s1789 + $0x178] sm:$0xff]
        %v1838 = vld [vmem:[%s1789 + $0x180] sm:$0xff]
        %v1839 = vld [vmem:[%s1789 + $0x188] sm:$0xff]
        %v1840 = vld [vmem:[%s1789 + $0x190] sm:$0xff]
        %v1841 = vld [vmem:[%s1789 + $0x198] sm:$0xff]
        %v1842 = vld [vmem:[%s1789 + $0x1a0] sm:$0xff]
        %v1843 = vld [vmem:[%s1789 + $0x1a8] sm:$0xff]
        %v1844 = vld [vmem:[%s1789 + $0x1b0] sm:$0xff]
        %v1845 = vld [vmem:[%s1789 + $0x1b8] sm:$0xff]
        %v1846 = vld [vmem:[%s1789 + $0x1c0] sm:$0x1]
        %v1847 = vld [vmem:[%s1789 + $0x1c8] sm:$0x1]
        %v1849 = vsel %vm880, %v1846, 0
        %v1852 = vsel %vm880, %v1847, 0
        %1854 = vmatprep.subr.mxu0 %v1791
        %1855 = vmatpush1.msra.mxu0 %v1790
        %1856 = vmatprep.subr.mxu0 %v1793
        %1857 = vmatpush1.msra.mxu0 %v1792
        %1858 = vmatprep.subr.mxu0 %v1795
        %1859 = vmatpush1.msra.mxu0 %v1794
        %1860 = vmatprep.subr.mxu0 %v1797
        %1861 = vmatpush1.msra.mxu0 %v1796
        %1862 = vmatprep.subr.mxu0 %v1799
        %1863 = vmatpush1.msra.mxu0 %v1798
        %1864 = vmatprep.subr.mxu0 %v1801
        %1865 = vmatpush1.msra.mxu0 %v1800
        %1866 = vmatprep.subr.mxu0 %v1803
        %1867 = vmatpush1.msra.mxu0 %v1802
        %1868 = vmatprep.subr.mxu0 %v1805
        %1869 = vmatpush1.msra.mxu0 %v1804
        %1870 = vmatprep.subr.mxu0 %v1807
        %1871 = vmatpush1.msra.mxu0 %v1806
        %1872 = vmatprep.subr.mxu0 %v1809
        %1873 = vmatpush1.msra.mxu0 %v1808
        %1874 = vmatprep.subr.mxu0 %v1811
        %1875 = vmatpush1.msra.mxu0 %v1810
        %1876 = vmatprep.subr.mxu0 %v1813
        %1877 = vmatpush1.msra.mxu0 %v1812
        %1878 = vmatprep.subr.mxu0 %v1815
        %1879 = vmatpush1.msra.mxu0 %v1814
        %1880 = vmatprep.subr.mxu0 %v1817
        %1881 = vmatpush1.msra.mxu0 %v1816
        %1882 = vmatprep.subr.mxu0 %v1819
        %1883 = vmatpush1.msra.mxu0 %v1818
        %1884 = vmatprep.subr.mxu0 %v1821
        %1885 = vmatpush1.msra.mxu0 %v1820
        %1886 = vmatprep.subr.mxu0 %v1823
        %1887 = vmatpush1.msra.mxu0 %v1822
        %1888 = vmatprep.subr.mxu0 %v1825
        %1889 = vmatpush1.msra.mxu0 %v1824
        %1890 = vmatprep.subr.mxu0 %v1827
        %1891 = vmatpush1.msra.mxu0 %v1826
        %1892 = vmatprep.subr.mxu0 %v1829
        %1893 = vmatpush1.msra.mxu0 %v1828
        %1894 = vmatprep.subr.mxu0 %v1831
        %1895 = vmatpush1.msra.mxu0 %v1830
        %1896 = vmatprep.subr.mxu0 %v1833
        %1897 = vmatpush1.msra.mxu0 %v1832
        %1898 = vmatprep.subr.mxu0 %v1835
        %1899 = vmatpush1.msra.mxu0 %v1834
        %1900 = vmatprep.subr.mxu0 %v1837
        %1901 = vmatpush1.msra.mxu0 %v1836
        %1902 = vmatprep.subr.mxu0 %v1839
        %1903 = vmatpush1.msra.mxu0 %v1838
        %1904 = vmatprep.subr.mxu0 %v1841
        %1905 = vmatpush1.msra.mxu0 %v1840
        %1906 = vmatprep.subr.mxu0 %v1843
        %1907 = vmatpush1.msra.mxu0 %v1842
        %1908 = vmatprep.subr.mxu0 %v1845
        %1909 = vmatpush1.msra.mxu0 %v1844
        %1910 = vmatprep.subr.mxu0 %v1852
        %1911 = vmatpush1.msra.mxu0 %v1849
        %1912 = vmatprep.subr.mxu0 0.0
        %1913 = vmatpush1.msra.mxu0 0.0
        %1914 = vmatprep.subr.mxu0 0.0
        %1915 = vmatpush1.msra.mxu0 0.0
        %1916 = vmatprep.subr.mxu0 0.0
        %1917 = vmatpush1.msra.mxu0 0.0
        %1918 = vmatprep.mubr.f32.mxu0 %v878
        %1919 = vmatmul.mubr.f32.gmra.mrb[0].mxu0 %v816
        %v1920 = vpop.f32.mrb[0].mxu0
        %v1921 = vadd.f32 0.0, %v1920
        %v1922 = vpop.f32.mrb[0].mxu0
        %v1923 = vadd.f32 0.0, %v1922
        %1924 = vdwg.mxu0
        %1925 = vst [vmem:[#allocation2 + $0x70] sm:$0xff] %v1921
        %1926 = vst.msk [vmem:[#allocation2 + $0x78] sm:$0xff] %vm959, %v1923
        %s1927 = scalar_lea.vmem %s3, 3712
        %v1928 = vld [vmem:[%s1927] sm:$0xff]
        %v1929 = vld [vmem:[%s1927 + $0x8] sm:$0xff]
        %v1930 = vld [vmem:[%s1927 + $0x10] sm:$0xff]
        %v1931 = vld [vmem:[%s1927 + $0x18] sm:$0xff]
        %v1932 = vld [vmem:[%s1927 + $0x20] sm:$0xff]
        %v1933 = vld [vmem:[%s1927 + $0x28] sm:$0xff]
        %v1934 = vld [vmem:[%s1927 + $0x30] sm:$0xff]
        %v1935 = vld [vmem:[%s1927 + $0x38] sm:$0xff]
        %v1936 = vld [vmem:[%s1927 + $0x40] sm:$0xff]
        %v1937 = vld [vmem:[%s1927 + $0x48] sm:$0xff]
        %v1938 = vld [vmem:[%s1927 + $0x50] sm:$0xff]
        %v1939 = vld [vmem:[%s1927 + $0x58] sm:$0xff]
        %v1940 = vld [vmem:[%s1927 + $0x60] sm:$0xff]
        %v1941 = vld [vmem:[%s1927 + $0x68] sm:$0xff]
        %v1942 = vld [vmem:[%s1927 + $0x70] sm:$0xff]
        %v1943 = vld [vmem:[%s1927 + $0x78] sm:$0xff]
        %v1944 = vld [vmem:[%s1927 + $0x80] sm:$0xff]
        %v1945 = vld [vmem:[%s1927 + $0x88] sm:$0xff]
        %v1946 = vld [vmem:[%s1927 + $0x90] sm:$0xff]
        %v1947 = vld [vmem:[%s1927 + $0x98] sm:$0xff]
        %v1948 = vld [vmem:[%s1927 + $0xa0] sm:$0xff]
        %v1949 = vld [vmem:[%s1927 + $0xa8] sm:$0xff]
        %v1950 = vld [vmem:[%s1927 + $0xb0] sm:$0xff]
        %v1951 = vld [vmem:[%s1927 + $0xb8] sm:$0xff]
        %v1952 = vld [vmem:[%s1927 + $0xc0] sm:$0xff]
        %v1953 = vld [vmem:[%s1927 + $0xc8] sm:$0xff]
        %v1954 = vld [vmem:[%s1927 + $0xd0] sm:$0xff]
        %v1955 = vld [vmem:[%s1927 + $0xd8] sm:$0xff]
        %v1956 = vld [vmem:[%s1927 + $0xe0] sm:$0xff]
        %v1957 = vld [vmem:[%s1927 + $0xe8] sm:$0xff]
        %v1958 = vld [vmem:[%s1927 + $0xf0] sm:$0xff]
        %v1959 = vld [vmem:[%s1927 + $0xf8] sm:$0xff]
        %v1960 = vld [vmem:[%s1927 + $0x100] sm:$0xff]
        %v1961 = vld [vmem:[%s1927 + $0x108] sm:$0xff]
        %v1962 = vld [vmem:[%s1927 + $0x110] sm:$0xff]
        %v1963 = vld [vmem:[%s1927 + $0x118] sm:$0xff]
        %v1964 = vld [vmem:[%s1927 + $0x120] sm:$0xff]
        %v1965 = vld [vmem:[%s1927 + $0x128] sm:$0xff]
        %v1966 = vld [vmem:[%s1927 + $0x130] sm:$0xff]
        %v1967 = vld [vmem:[%s1927 + $0x138] sm:$0xff]
        %v1968 = vld [vmem:[%s1927 + $0x140] sm:$0xff]
        %v1969 = vld [vmem:[%s1927 + $0x148] sm:$0xff]
        %v1970 = vld [vmem:[%s1927 + $0x150] sm:$0xff]
        %v1971 = vld [vmem:[%s1927 + $0x158] sm:$0xff]
        %v1972 = vld [vmem:[%s1927 + $0x160] sm:$0xff]
        %v1973 = vld [vmem:[%s1927 + $0x168] sm:$0xff]
        %v1974 = vld [vmem:[%s1927 + $0x170] sm:$0xff]
        %v1975 = vld [vmem:[%s1927 + $0x178] sm:$0xff]
        %v1976 = vld [vmem:[%s1927 + $0x180] sm:$0xff]
        %v1977 = vld [vmem:[%s1927 + $0x188] sm:$0xff]
        %v1978 = vld [vmem:[%s1927 + $0x190] sm:$0xff]
        %v1979 = vld [vmem:[%s1927 + $0x198] sm:$0xff]
        %v1980 = vld [vmem:[%s1927 + $0x1a0] sm:$0xff]
        %v1981 = vld [vmem:[%s1927 + $0x1a8] sm:$0xff]
        %v1982 = vld [vmem:[%s1927 + $0x1b0] sm:$0xff]
        %v1983 = vld [vmem:[%s1927 + $0x1b8] sm:$0xff]
        %v1984 = vld [vmem:[%s1927 + $0x1c0] sm:$0x1]
        %v1985 = vld [vmem:[%s1927 + $0x1c8] sm:$0x1]
        %v1987 = vsel %vm880, %v1984, 0
        %v1990 = vsel %vm880, %v1985, 0
        %1992 = vmatprep.subr.mxu0 %v1929
        %1993 = vmatpush1.msra.mxu0 %v1928
        %1994 = vmatprep.subr.mxu0 %v1931
        %1995 = vmatpush1.msra.mxu0 %v1930
        %1996 = vmatprep.subr.mxu0 %v1933
        %1997 = vmatpush1.msra.mxu0 %v1932
        %1998 = vmatprep.subr.mxu0 %v1935
        %1999 = vmatpush1.msra.mxu0 %v1934
        %2000 = vmatprep.subr.mxu0 %v1937
        %2001 = vmatpush1.msra.mxu0 %v1936
        %2002 = vmatprep.subr.mxu0 %v1939
        %2003 = vmatpush1.msra.mxu0 %v1938
        %2004 = vmatprep.subr.mxu0 %v1941
        %2005 = vmatpush1.msra.mxu0 %v1940
        %2006 = vmatprep.subr.mxu0 %v1943
        %2007 = vmatpush1.msra.mxu0 %v1942
        %2008 = vmatprep.subr.mxu0 %v1945
        %2009 = vmatpush1.msra.mxu0 %v1944
        %2010 = vmatprep.subr.mxu0 %v1947
        %2011 = vmatpush1.msra.mxu0 %v1946
        %2012 = vmatprep.subr.mxu0 %v1949
        %2013 = vmatpush1.msra.mxu0 %v1948
        %2014 = vmatprep.subr.mxu0 %v1951
        %2015 = vmatpush1.msra.mxu0 %v1950
        %2016 = vmatprep.subr.mxu0 %v1953
        %2017 = vmatpush1.msra.mxu0 %v1952
        %2018 = vmatprep.subr.mxu0 %v1955
        %2019 = vmatpush1.msra.mxu0 %v1954
        %2020 = vmatprep.subr.mxu0 %v1957
        %2021 = vmatpush1.msra.mxu0 %v1956
        %2022 = vmatprep.subr.mxu0 %v1959
        %2023 = vmatpush1.msra.mxu0 %v1958
        %2024 = vmatprep.subr.mxu0 %v1961
        %2025 = vmatpush1.msra.mxu0 %v1960
        %2026 = vmatprep.subr.mxu0 %v1963
        %2027 = vmatpush1.msra.mxu0 %v1962
        %2028 = vmatprep.subr.mxu0 %v1965
        %2029 = vmatpush1.msra.mxu0 %v1964
        %2030 = vmatprep.subr.mxu0 %v1967
        %2031 = vmatpush1.msra.mxu0 %v1966
        %2032 = vmatprep.subr.mxu0 %v1969
        %2033 = vmatpush1.msra.mxu0 %v1968
        %2034 = vmatprep.subr.mxu0 %v1971
        %2035 = vmatpush1.msra.mxu0 %v1970
        %2036 = vmatprep.subr.mxu0 %v1973
        %2037 = vmatpush1.msra.mxu0 %v1972
        %2038 = vmatprep.subr.mxu0 %v1975
        %2039 = vmatpush1.msra.mxu0 %v1974
        %2040 = vmatprep.subr.mxu0 %v1977
        %2041 = vmatpush1.msra.mxu0 %v1976
        %2042 = vmatprep.subr.mxu0 %v1979
        %2043 = vmatpush1.msra.mxu0 %v1978
        %2044 = vmatprep.subr.mxu0 %v1981
        %2045 = vmatpush1.msra.mxu0 %v1980
        %2046 = vmatprep.subr.mxu0 %v1983
        %2047 = vmatpush1.msra.mxu0 %v1982
        %2048 = vmatprep.subr.mxu0 %v1990
        %2049 = vmatpush1.msra.mxu0 %v1987
        %2050 = vmatprep.subr.mxu0 0.0
        %2051 = vmatpush1.msra.mxu0 0.0
        %2052 = vmatprep.subr.mxu0 0.0
        %2053 = vmatpush1.msra.mxu0 0.0
        %2054 = vmatprep.subr.mxu0 0.0
        %2055 = vmatpush1.msra.mxu0 0.0
        %2056 = vmatprep.mubr.f32.mxu0 %v878
        %2057 = vmatmul.mubr.f32.gmra.mrb[0].mxu0 %v816
        %v2058 = vpop.f32.mrb[0].mxu0
        %v2059 = vadd.f32 0.0, %v2058
        %v2060 = vpop.f32.mrb[0].mxu0
        %v2061 = vadd.f32 0.0, %v2060
        %2062 = vdwg.mxu0
        %2063 = vst [vmem:[#allocation2 + $0x80] sm:$0xff] %v2059
        %2064 = vst.msk [vmem:[#allocation2 + $0x88] sm:$0xff] %vm959, %v2061
        %s2065 = scalar_lea.vmem %s3, 4176
        %v2066 = vld [vmem:[%s2065] sm:$0xff]
        %v2067 = vld [vmem:[%s2065 + $0x8] sm:$0xff]
        %v2068 = vld [vmem:[%s2065 + $0x10] sm:$0xff]
        %v2069 = vld [vmem:[%s2065 + $0x18] sm:$0xff]
        %v2070 = vld [vmem:[%s2065 + $0x20] sm:$0xff]
        %v2071 = vld [vmem:[%s2065 + $0x28] sm:$0xff]
        %v2072 = vld [vmem:[%s2065 + $0x30] sm:$0xff]
        %v2073 = vld [vmem:[%s2065 + $0x38] sm:$0xff]
        %v2074 = vld [vmem:[%s2065 + $0x40] sm:$0xff]
        %v2075 = vld [vmem:[%s2065 + $0x48] sm:$0xff]
        %v2076 = vld [vmem:[%s2065 + $0x50] sm:$0xff]
        %v2077 = vld [vmem:[%s2065 + $0x58] sm:$0xff]
        %v2078 = vld [vmem:[%s2065 + $0x60] sm:$0xff]
        %v2079 = vld [vmem:[%s2065 + $0x68] sm:$0xff]
        %v2080 = vld [vmem:[%s2065 + $0x70] sm:$0xff]
        %v2081 = vld [vmem:[%s2065 + $0x78] sm:$0xff]
        %v2082 = vld [vmem:[%s2065 + $0x80] sm:$0xff]
        %v2083 = vld [vmem:[%s2065 + $0x88] sm:$0xff]
        %v2084 = vld [vmem:[%s2065 + $0x90] sm:$0xff]
        %v2085 = vld [vmem:[%s2065 + $0x98] sm:$0xff]
        %v2086 = vld [vmem:[%s2065 + $0xa0] sm:$0xff]
        %v2087 = vld [vmem:[%s2065 + $0xa8] sm:$0xff]
        %v2088 = vld [vmem:[%s2065 + $0xb0] sm:$0xff]
        %v2089 = vld [vmem:[%s2065 + $0xb8] sm:$0xff]
        %v2090 = vld [vmem:[%s2065 + $0xc0] sm:$0xff]
        %v2091 = vld [vmem:[%s2065 + $0xc8] sm:$0xff]
        %v2092 = vld [vmem:[%s2065 + $0xd0] sm:$0xff]
        %v2093 = vld [vmem:[%s2065 + $0xd8] sm:$0xff]
        %v2094 = vld [vmem:[%s2065 + $0xe0] sm:$0xff]
        %v2095 = vld [vmem:[%s2065 + $0xe8] sm:$0xff]
        %v2096 = vld [vmem:[%s2065 + $0xf0] sm:$0xff]
        %v2097 = vld [vmem:[%s2065 + $0xf8] sm:$0xff]
        %v2098 = vld [vmem:[%s2065 + $0x100] sm:$0xff]
        %v2099 = vld [vmem:[%s2065 + $0x108] sm:$0xff]
        %v2100 = vld [vmem:[%s2065 + $0x110] sm:$0xff]
        %v2101 = vld [vmem:[%s2065 + $0x118] sm:$0xff]
        %v2102 = vld [vmem:[%s2065 + $0x120] sm:$0xff]
        %v2103 = vld [vmem:[%s2065 + $0x128] sm:$0xff]
        %v2104 = vld [vmem:[%s2065 + $0x130] sm:$0xff]
        %v2105 = vld [vmem:[%s2065 + $0x138] sm:$0xff]
        %v2106 = vld [vmem:[%s2065 + $0x140] sm:$0xff]
        %v2107 = vld [vmem:[%s2065 + $0x148] sm:$0xff]
        %v2108 = vld [vmem:[%s2065 + $0x150] sm:$0xff]
        %v2109 = vld [vmem:[%s2065 + $0x158] sm:$0xff]
        %v2110 = vld [vmem:[%s2065 + $0x160] sm:$0xff]
        %v2111 = vld [vmem:[%s2065 + $0x168] sm:$0xff]
        %v2112 = vld [vmem:[%s2065 + $0x170] sm:$0xff]
        %v2113 = vld [vmem:[%s2065 + $0x178] sm:$0xff]
        %v2114 = vld [vmem:[%s2065 + $0x180] sm:$0xff]
        %v2115 = vld [vmem:[%s2065 + $0x188] sm:$0xff]
        %v2116 = vld [vmem:[%s2065 + $0x190] sm:$0xff]
        %v2117 = vld [vmem:[%s2065 + $0x198] sm:$0xff]
        %v2118 = vld [vmem:[%s2065 + $0x1a0] sm:$0xff]
        %v2119 = vld [vmem:[%s2065 + $0x1a8] sm:$0xff]
        %v2120 = vld [vmem:[%s2065 + $0x1b0] sm:$0xff]
        %v2121 = vld [vmem:[%s2065 + $0x1b8] sm:$0xff]
        %v2122 = vld [vmem:[%s2065 + $0x1c0] sm:$0x1]
        %v2123 = vld [vmem:[%s2065 + $0x1c8] sm:$0x1]
        %v2125 = vsel %vm880, %v2122, 0
        %v2128 = vsel %vm880, %v2123, 0
        %2130 = vmatprep.subr.mxu0 %v2067
        %2131 = vmatpush1.msra.mxu0 %v2066
        %2132 = vmatprep.subr.mxu0 %v2069
        %2133 = vmatpush1.msra.mxu0 %v2068
        %2134 = vmatprep.subr.mxu0 %v2071
        %2135 = vmatpush1.msra.mxu0 %v2070
        %2136 = vmatprep.subr.mxu0 %v2073
        %2137 = vmatpush1.msra.mxu0 %v2072
        %2138 = vmatprep.subr.mxu0 %v2075
        %2139 = vmatpush1.msra.mxu0 %v2074
        %2140 = vmatprep.subr.mxu0 %v2077
        %2141 = vmatpush1.msra.mxu0 %v2076
        %2142 = vmatprep.subr.mxu0 %v2079
        %2143 = vmatpush1.msra.mxu0 %v2078
        %2144 = vmatprep.subr.mxu0 %v2081
        %2145 = vmatpush1.msra.mxu0 %v2080
        %2146 = vmatprep.subr.mxu0 %v2083
        %2147 = vmatpush1.msra.mxu0 %v2082
        %2148 = vmatprep.subr.mxu0 %v2085
        %2149 = vmatpush1.msra.mxu0 %v2084
        %2150 = vmatprep.subr.mxu0 %v2087
        %2151 = vmatpush1.msra.mxu0 %v2086
        %2152 = vmatprep.subr.mxu0 %v2089
        %2153 = vmatpush1.msra.mxu0 %v2088
        %2154 = vmatprep.subr.mxu0 %v2091
        %2155 = vmatpush1.msra.mxu0 %v2090
        %2156 = vmatprep.subr.mxu0 %v2093
        %2157 = vmatpush1.msra.mxu0 %v2092
        %2158 = vmatprep.subr.mxu0 %v2095
        %2159 = vmatpush1.msra.mxu0 %v2094
        %2160 = vmatprep.subr.mxu0 %v2097
        %2161 = vmatpush1.msra.mxu0 %v2096
        %2162 = vmatprep.subr.mxu0 %v2099
        %2163 = vmatpush1.msra.mxu0 %v2098
        %2164 = vmatprep.subr.mxu0 %v2101
        %2165 = vmatpush1.msra.mxu0 %v2100
        %2166 = vmatprep.subr.mxu0 %v2103
        %2167 = vmatpush1.msra.mxu0 %v2102
        %2168 = vmatprep.subr.mxu0 %v2105
        %2169 = vmatpush1.msra.mxu0 %v2104
        %2170 = vmatprep.subr.mxu0 %v2107
        %2171 = vmatpush1.msra.mxu0 %v2106
        %2172 = vmatprep.subr.mxu0 %v2109
        %2173 = vmatpush1.msra.mxu0 %v2108
        %2174 = vmatprep.subr.mxu0 %v2111
        %2175 = vmatpush1.msra.mxu0 %v2110
        %2176 = vmatprep.subr.mxu0 %v2113
        %2177 = vmatpush1.msra.mxu0 %v2112
        %2178 = vmatprep.subr.mxu0 %v2115
        %2179 = vmatpush1.msra.mxu0 %v2114
        %2180 = vmatprep.subr.mxu0 %v2117
        %2181 = vmatpush1.msra.mxu0 %v2116
        %2182 = vmatprep.subr.mxu0 %v2119
        %2183 = vmatpush1.msra.mxu0 %v2118
        %2184 = vmatprep.subr.mxu0 %v2121
        %2185 = vmatpush1.msra.mxu0 %v2120
        %2186 = vmatprep.subr.mxu0 %v2128
        %2187 = vmatpush1.msra.mxu0 %v2125
        %2188 = vmatprep.subr.mxu0 0.0
        %2189 = vmatpush1.msra.mxu0 0.0
        %2190 = vmatprep.subr.mxu0 0.0
        %2191 = vmatpush1.msra.mxu0 0.0
        %2192 = vmatprep.subr.mxu0 0.0
        %2193 = vmatpush1.msra.mxu0 0.0
        %2194 = vmatprep.mubr.f32.mxu0 %v878
        %2195 = vmatmul.mubr.f32.gmra.mrb[0].mxu0 %v816
        %v2196 = vpop.f32.mrb[0].mxu0
        %v2197 = vadd.f32 0.0, %v2196
        %v2198 = vpop.f32.mrb[0].mxu0
        %v2199 = vadd.f32 0.0, %v2198
        %2200 = vdwg.mxu0
        %2201 = vst [vmem:[#allocation2 + $0x90] sm:$0xff] %v2197
        %2202 = vst.msk [vmem:[#allocation2 + $0x98] sm:$0xff] %vm959, %v2199
        %s2203 = scalar_lea.vmem %s3, 4640
        %v2204 = vld [vmem:[%s2203] sm:$0xff]
        %v2205 = vld [vmem:[%s2203 + $0x8] sm:$0xff]
        %v2206 = vld [vmem:[%s2203 + $0x10] sm:$0xff]
        %v2207 = vld [vmem:[%s2203 + $0x18] sm:$0xff]
        %v2208 = vld [vmem:[%s2203 + $0x20] sm:$0xff]
        %v2209 = vld [vmem:[%s2203 + $0x28] sm:$0xff]
        %v2210 = vld [vmem:[%s2203 + $0x30] sm:$0xff]
        %v2211 = vld [vmem:[%s2203 + $0x38] sm:$0xff]
        %v2212 = vld [vmem:[%s2203 + $0x40] sm:$0xff]
        %v2213 = vld [vmem:[%s2203 + $0x48] sm:$0xff]
        %v2214 = vld [vmem:[%s2203 + $0x50] sm:$0xff]
        %v2215 = vld [vmem:[%s2203 + $0x58] sm:$0xff]
        %v2216 = vld [vmem:[%s2203 + $0x60] sm:$0xff]
        %v2217 = vld [vmem:[%s2203 + $0x68] sm:$0xff]
        %v2218 = vld [vmem:[%s2203 + $0x70] sm:$0xff]
        %v2219 = vld [vmem:[%s2203 + $0x78] sm:$0xff]
        %v2220 = vld [vmem:[%s2203 + $0x80] sm:$0xff]
        %v2221 = vld [vmem:[%s2203 + $0x88] sm:$0xff]
        %v2222 = vld [vmem:[%s2203 + $0x90] sm:$0xff]
        %v2223 = vld [vmem:[%s2203 + $0x98] sm:$0xff]
        %v2224 = vld [vmem:[%s2203 + $0xa0] sm:$0xff]
        %v2225 = vld [vmem:[%s2203 + $0xa8] sm:$0xff]
        %v2226 = vld [vmem:[%s2203 + $0xb0] sm:$0xff]
        %v2227 = vld [vmem:[%s2203 + $0xb8] sm:$0xff]
        %v2228 = vld [vmem:[%s2203 + $0xc0] sm:$0xff]
        %v2229 = vld [vmem:[%s2203 + $0xc8] sm:$0xff]
        %v2230 = vld [vmem:[%s2203 + $0xd0] sm:$0xff]
        %v2231 = vld [vmem:[%s2203 + $0xd8] sm:$0xff]
        %v2232 = vld [vmem:[%s2203 + $0xe0] sm:$0xff]
        %v2233 = vld [vmem:[%s2203 + $0xe8] sm:$0xff]
        %v2234 = vld [vmem:[%s2203 + $0xf0] sm:$0xff]
        %v2235 = vld [vmem:[%s2203 + $0xf8] sm:$0xff]
        %v2236 = vld [vmem:[%s2203 + $0x100] sm:$0xff]
        %v2237 = vld [vmem:[%s2203 + $0x108] sm:$0xff]
        %v2238 = vld [vmem:[%s2203 + $0x110] sm:$0xff]
        %v2239 = vld [vmem:[%s2203 + $0x118] sm:$0xff]
        %v2240 = vld [vmem:[%s2203 + $0x120] sm:$0xff]
        %v2241 = vld [vmem:[%s2203 + $0x128] sm:$0xff]
        %v2242 = vld [vmem:[%s2203 + $0x130] sm:$0xff]
        %v2243 = vld [vmem:[%s2203 + $0x138] sm:$0xff]
        %v2244 = vld [vmem:[%s2203 + $0x140] sm:$0xff]
        %v2245 = vld [vmem:[%s2203 + $0x148] sm:$0xff]
        %v2246 = vld [vmem:[%s2203 + $0x150] sm:$0xff]
        %v2247 = vld [vmem:[%s2203 + $0x158] sm:$0xff]
        %v2248 = vld [vmem:[%s2203 + $0x160] sm:$0xff]
        %v2249 = vld [vmem:[%s2203 + $0x168] sm:$0xff]
        %v2250 = vld [vmem:[%s2203 + $0x170] sm:$0xff]
        %v2251 = vld [vmem:[%s2203 + $0x178] sm:$0xff]
        %v2252 = vld [vmem:[%s2203 + $0x180] sm:$0xff]
        %v2253 = vld [vmem:[%s2203 + $0x188] sm:$0xff]
        %v2254 = vld [vmem:[%s2203 + $0x190] sm:$0xff]
        %v2255 = vld [vmem:[%s2203 + $0x198] sm:$0xff]
        %v2256 = vld [vmem:[%s2203 + $0x1a0] sm:$0xff]
        %v2257 = vld [vmem:[%s2203 + $0x1a8] sm:$0xff]
        %v2258 = vld [vmem:[%s2203 + $0x1b0] sm:$0xff]
        %v2259 = vld [vmem:[%s2203 + $0x1b8] sm:$0xff]
        %v2260 = vld [vmem:[%s2203 + $0x1c0] sm:$0x1]
        %v2261 = vld [vmem:[%s2203 + $0x1c8] sm:$0x1]
        %v2263 = vsel %vm880, %v2260, 0
        %v2266 = vsel %vm880, %v2261, 0
        %2268 = vmatprep.subr.mxu0 %v2205
        %2269 = vmatpush1.msra.mxu0 %v2204
        %2270 = vmatprep.subr.mxu0 %v2207
        %2271 = vmatpush1.msra.mxu0 %v2206
        %2272 = vmatprep.subr.mxu0 %v2209
        %2273 = vmatpush1.msra.mxu0 %v2208
        %2274 = vmatprep.subr.mxu0 %v2211
        %2275 = vmatpush1.msra.mxu0 %v2210
        %2276 = vmatprep.subr.mxu0 %v2213
        %2277 = vmatpush1.msra.mxu0 %v2212
        %2278 = vmatprep.subr.mxu0 %v2215
        %2279 = vmatpush1.msra.mxu0 %v2214
        %2280 = vmatprep.subr.mxu0 %v2217
        %2281 = vmatpush1.msra.mxu0 %v2216
        %2282 = vmatprep.subr.mxu0 %v2219
        %2283 = vmatpush1.msra.mxu0 %v2218
        %2284 = vmatprep.subr.mxu0 %v2221
        %2285 = vmatpush1.msra.mxu0 %v2220
        %2286 = vmatprep.subr.mxu0 %v2223
        %2287 = vmatpush1.msra.mxu0 %v2222
        %2288 = vmatprep.subr.mxu0 %v2225
        %2289 = vmatpush1.msra.mxu0 %v2224
        %2290 = vmatprep.subr.mxu0 %v2227
        %2291 = vmatpush1.msra.mxu0 %v2226
        %2292 = vmatprep.subr.mxu0 %v2229
        %2293 = vmatpush1.msra.mxu0 %v2228
        %2294 = vmatprep.subr.mxu0 %v2231
        %2295 = vmatpush1.msra.mxu0 %v2230
        %2296 = vmatprep.subr.mxu0 %v2233
        %2297 = vmatpush1.msra.mxu0 %v2232
        %2298 = vmatprep.subr.mxu0 %v2235
        %2299 = vmatpush1.msra.mxu0 %v2234
        %2300 = vmatprep.subr.mxu0 %v2237
        %2301 = vmatpush1.msra.mxu0 %v2236
        %2302 = vmatprep.subr.mxu0 %v2239
        %2303 = vmatpush1.msra.mxu0 %v2238
        %2304 = vmatprep.subr.mxu0 %v2241
        %2305 = vmatpush1.msra.mxu0 %v2240
        %2306 = vmatprep.subr.mxu0 %v2243
        %2307 = vmatpush1.msra.mxu0 %v2242
        %2308 = vmatprep.subr.mxu0 %v2245
        %2309 = vmatpush1.msra.mxu0 %v2244
        %2310 = vmatprep.subr.mxu0 %v2247
        %2311 = vmatpush1.msra.mxu0 %v2246
        %2312 = vmatprep.subr.mxu0 %v2249
        %2313 = vmatpush1.msra.mxu0 %v2248
        %2314 = vmatprep.subr.mxu0 %v2251
        %2315 = vmatpush1.msra.mxu0 %v2250
        %2316 = vmatprep.subr.mxu0 %v2253
        %2317 = vmatpush1.msra.mxu0 %v2252
        %2318 = vmatprep.subr.mxu0 %v2255
        %2319 = vmatpush1.msra.mxu0 %v2254
        %2320 = vmatprep.subr.mxu0 %v2257
        %2321 = vmatpush1.msra.mxu0 %v2256
        %2322 = vmatprep.subr.mxu0 %v2259
        %2323 = vmatpush1.msra.mxu0 %v2258
        %2324 = vmatprep.subr.mxu0 %v2266
        %2325 = vmatpush1.msra.mxu0 %v2263
        %2326 = vmatprep.subr.mxu0 0.0
        %2327 = vmatpush1.msra.mxu0 0.0
        %2328 = vmatprep.subr.mxu0 0.0
        %2329 = vmatpush1.msra.mxu0 0.0
        %2330 = vmatprep.subr.mxu0 0.0
        %2331 = vmatpush1.msra.mxu0 0.0
        %2332 = vmatprep.mubr.f32.mxu0 %v878
        %2333 = vmatmul.mubr.f32.gmra.mrb[0].mxu0 %v816
        %v2334 = vpop.f32.mrb[0].mxu0
        %v2335 = vadd.f32 0.0, %v2334
        %v2336 = vpop.f32.mrb[0].mxu0
        %v2337 = vadd.f32 0.0, %v2336
        %2338 = vdwg.mxu0
        %2339 = vst [vmem:[#allocation2 + $0xa0] sm:$0xff] %v2335
        %2340 = vst.msk [vmem:[#allocation2 + $0xa8] sm:$0xff] %vm959, %v2337
        %s2341 = scalar_lea.vmem %s3, 5104
        %v2342 = vld [vmem:[%s2341] sm:$0xff]
        %v2343 = vld [vmem:[%s2341 + $0x8] sm:$0xff]
        %v2344 = vld [vmem:[%s2341 + $0x10] sm:$0xff]
        %v2345 = vld [vmem:[%s2341 + $0x18] sm:$0xff]
        %v2346 = vld [vmem:[%s2341 + $0x20] sm:$0xff]
        %v2347 = vld [vmem:[%s2341 + $0x28] sm:$0xff]
        %v2348 = vld [vmem:[%s2341 + $0x30] sm:$0xff]
        %v2349 = vld [vmem:[%s2341 + $0x38] sm:$0xff]
        %v2350 = vld [vmem:[%s2341 + $0x40] sm:$0xff]
        %v2351 = vld [vmem:[%s2341 + $0x48] sm:$0xff]
        %v2352 = vld [vmem:[%s2341 + $0x50] sm:$0xff]
        %v2353 = vld [vmem:[%s2341 + $0x58] sm:$0xff]
        %v2354 = vld [vmem:[%s2341 + $0x60] sm:$0xff]
        %v2355 = vld [vmem:[%s2341 + $0x68] sm:$0xff]
        %v2356 = vld [vmem:[%s2341 + $0x70] sm:$0xff]
        %v2357 = vld [vmem:[%s2341 + $0x78] sm:$0xff]
        %v2358 = vld [vmem:[%s2341 + $0x80] sm:$0xff]
        %v2359 = vld [vmem:[%s2341 + $0x88] sm:$0xff]
        %v2360 = vld [vmem:[%s2341 + $0x90] sm:$0xff]
        %v2361 = vld [vmem:[%s2341 + $0x98] sm:$0xff]
        %v2362 = vld [vmem:[%s2341 + $0xa0] sm:$0xff]
        %v2363 = vld [vmem:[%s2341 + $0xa8] sm:$0xff]
        %v2364 = vld [vmem:[%s2341 + $0xb0] sm:$0xff]
        %v2365 = vld [vmem:[%s2341 + $0xb8] sm:$0xff]
        %v2366 = vld [vmem:[%s2341 + $0xc0] sm:$0xff]
        %v2367 = vld [vmem:[%s2341 + $0xc8] sm:$0xff]
        %v2368 = vld [vmem:[%s2341 + $0xd0] sm:$0xff]
        %v2369 = vld [vmem:[%s2341 + $0xd8] sm:$0xff]
        %v2370 = vld [vmem:[%s2341 + $0xe0] sm:$0xff]
        %v2371 = vld [vmem:[%s2341 + $0xe8] sm:$0xff]
        %v2372 = vld [vmem:[%s2341 + $0xf0] sm:$0xff]
        %v2373 = vld [vmem:[%s2341 + $0xf8] sm:$0xff]
        %v2374 = vld [vmem:[%s2341 + $0x100] sm:$0xff]
        %v2375 = vld [vmem:[%s2341 + $0x108] sm:$0xff]
        %v2376 = vld [vmem:[%s2341 + $0x110] sm:$0xff]
        %v2377 = vld [vmem:[%s2341 + $0x118] sm:$0xff]
        %v2378 = vld [vmem:[%s2341 + $0x120] sm:$0xff]
        %v2379 = vld [vmem:[%s2341 + $0x128] sm:$0xff]
        %v2380 = vld [vmem:[%s2341 + $0x130] sm:$0xff]
        %v2381 = vld [vmem:[%s2341 + $0x138] sm:$0xff]
        %v2382 = vld [vmem:[%s2341 + $0x140] sm:$0xff]
        %v2383 = vld [vmem:[%s2341 + $0x148] sm:$0xff]
        %v2384 = vld [vmem:[%s2341 + $0x150] sm:$0xff]
        %v2385 = vld [vmem:[%s2341 + $0x158] sm:$0xff]
        %v2386 = vld [vmem:[%s2341 + $0x160] sm:$0xff]
        %v2387 = vld [vmem:[%s2341 + $0x168] sm:$0xff]
        %v2388 = vld [vmem:[%s2341 + $0x170] sm:$0xff]
        %v2389 = vld [vmem:[%s2341 + $0x178] sm:$0xff]
        %v2390 = vld [vmem:[%s2341 + $0x180] sm:$0xff]
        %v2391 = vld [vmem:[%s2341 + $0x188] sm:$0xff]
        %v2392 = vld [vmem:[%s2341 + $0x190] sm:$0xff]
        %v2393 = vld [vmem:[%s2341 + $0x198] sm:$0xff]
        %v2394 = vld [vmem:[%s2341 + $0x1a0] sm:$0xff]
        %v2395 = vld [vmem:[%s2341 + $0x1a8] sm:$0xff]
        %v2396 = vld [vmem:[%s2341 + $0x1b0] sm:$0xff]
        %v2397 = vld [vmem:[%s2341 + $0x1b8] sm:$0xff]
        %v2398 = vld [vmem:[%s2341 + $0x1c0] sm:$0x1]
        %v2399 = vld [vmem:[%s2341 + $0x1c8] sm:$0x1]
        %v2401 = vsel %vm880, %v2398, 0
        %v2404 = vsel %vm880, %v2399, 0
        %2406 = vmatprep.subr.mxu0 %v2343
        %2407 = vmatpush1.msra.mxu0 %v2342
        %2408 = vmatprep.subr.mxu0 %v2345
        %2409 = vmatpush1.msra.mxu0 %v2344
        %2410 = vmatprep.subr.mxu0 %v2347
        %2411 = vmatpush1.msra.mxu0 %v2346
        %2412 = vmatprep.subr.mxu0 %v2349
        %2413 = vmatpush1.msra.mxu0 %v2348
        %2414 = vmatprep.subr.mxu0 %v2351
        %2415 = vmatpush1.msra.mxu0 %v2350
        %2416 = vmatprep.subr.mxu0 %v2353
        %2417 = vmatpush1.msra.mxu0 %v2352
        %2418 = vmatprep.subr.mxu0 %v2355
        %2419 = vmatpush1.msra.mxu0 %v2354
        %2420 = vmatprep.subr.mxu0 %v2357
        %2421 = vmatpush1.msra.mxu0 %v2356
        %2422 = vmatprep.subr.mxu0 %v2359
        %2423 = vmatpush1.msra.mxu0 %v2358
        %2424 = vmatprep.subr.mxu0 %v2361
        %2425 = vmatpush1.msra.mxu0 %v2360
        %2426 = vmatprep.subr.mxu0 %v2363
        %2427 = vmatpush1.msra.mxu0 %v2362
        %2428 = vmatprep.subr.mxu0 %v2365
        %2429 = vmatpush1.msra.mxu0 %v2364
        %2430 = vmatprep.subr.mxu0 %v2367
        %2431 = vmatpush1.msra.mxu0 %v2366
        %2432 = vmatprep.subr.mxu0 %v2369
        %2433 = vmatpush1.msra.mxu0 %v2368
        %2434 = vmatprep.subr.mxu0 %v2371
        %2435 = vmatpush1.msra.mxu0 %v2370
        %2436 = vmatprep.subr.mxu0 %v2373
        %2437 = vmatpush1.msra.mxu0 %v2372
        %2438 = vmatprep.subr.mxu0 %v2375
        %2439 = vmatpush1.msra.mxu0 %v2374
        %2440 = vmatprep.subr.mxu0 %v2377
        %2441 = vmatpush1.msra.mxu0 %v2376
        %2442 = vmatprep.subr.mxu0 %v2379
        %2443 = vmatpush1.msra.mxu0 %v2378
        %2444 = vmatprep.subr.mxu0 %v2381
        %2445 = vmatpush1.msra.mxu0 %v2380
        %2446 = vmatprep.subr.mxu0 %v2383
        %2447 = vmatpush1.msra.mxu0 %v2382
        %2448 = vmatprep.subr.mxu0 %v2385
        %2449 = vmatpush1.msra.mxu0 %v2384
        %2450 = vmatprep.subr.mxu0 %v2387
        %2451 = vmatpush1.msra.mxu0 %v2386
        %2452 = vmatprep.subr.mxu0 %v2389
        %2453 = vmatpush1.msra.mxu0 %v2388
        %2454 = vmatprep.subr.mxu0 %v2391
        %2455 = vmatpush1.msra.mxu0 %v2390
        %2456 = vmatprep.subr.mxu0 %v2393
        %2457 = vmatpush1.msra.mxu0 %v2392
        %2458 = vmatprep.subr.mxu0 %v2395
        %2459 = vmatpush1.msra.mxu0 %v2394
        %2460 = vmatprep.subr.mxu0 %v2397
        %2461 = vmatpush1.msra.mxu0 %v2396
        %2462 = vmatprep.subr.mxu0 %v2404
        %2463 = vmatpush1.msra.mxu0 %v2401
        %2464 = vmatprep.subr.mxu0 0.0
        %2465 = vmatpush1.msra.mxu0 0.0
        %2466 = vmatprep.subr.mxu0 0.0
        %2467 = vmatpush1.msra.mxu0 0.0
        %2468 = vmatprep.subr.mxu0 0.0
        %2469 = vmatpush1.msra.mxu0 0.0
        %2470 = vmatprep.mubr.f32.mxu0 %v878
        %2471 = vmatmul.mubr.f32.gmra.mrb[0].mxu0 %v816
        %v2472 = vpop.f32.mrb[0].mxu0
        %v2473 = vadd.f32 0.0, %v2472
        %v2474 = vpop.f32.mrb[0].mxu0
        %v2475 = vadd.f32 0.0, %v2474
        %2476 = vdwg.mxu0
        %2477 = vst [vmem:[#allocation2 + $0xb0] sm:$0xff] %v2473
        %2478 = vst.msk [vmem:[#allocation2 + $0xb8] sm:$0xff] %vm959, %v2475
        %s2479 = scalar_lea.vmem %s3, 5568
        %v2480 = vld [vmem:[%s2479] sm:$0xff]
        %v2481 = vld [vmem:[%s2479 + $0x8] sm:$0xff]
        %v2482 = vld [vmem:[%s2479 + $0x10] sm:$0xff]
        %v2483 = vld [vmem:[%s2479 + $0x18] sm:$0xff]
        %v2484 = vld [vmem:[%s2479 + $0x20] sm:$0xff]
        %v2485 = vld [vmem:[%s2479 + $0x28] sm:$0xff]
        %v2486 = vld [vmem:[%s2479 + $0x30] sm:$0xff]
        %v2487 = vld [vmem:[%s2479 + $0x38] sm:$0xff]
        %v2488 = vld [vmem:[%s2479 + $0x40] sm:$0xff]
        %v2489 = vld [vmem:[%s2479 + $0x48] sm:$0xff]
        %v2490 = vld [vmem:[%s2479 + $0x50] sm:$0xff]
        %v2491 = vld [vmem:[%s2479 + $0x58] sm:$0xff]
        %v2492 = vld [vmem:[%s2479 + $0x60] sm:$0xff]
        %v2493 = vld [vmem:[%s2479 + $0x68] sm:$0xff]
        %v2494 = vld [vmem:[%s2479 + $0x70] sm:$0xff]
        %v2495 = vld [vmem:[%s2479 + $0x78] sm:$0xff]
        %v2496 = vld [vmem:[%s2479 + $0x80] sm:$0xff]
        %v2497 = vld [vmem:[%s2479 + $0x88] sm:$0xff]
        %v2498 = vld [vmem:[%s2479 + $0x90] sm:$0xff]
        %v2499 = vld [vmem:[%s2479 + $0x98] sm:$0xff]
        %v2500 = vld [vmem:[%s2479 + $0xa0] sm:$0xff]
        %v2501 = vld [vmem:[%s2479 + $0xa8] sm:$0xff]
        %v2502 = vld [vmem:[%s2479 + $0xb0] sm:$0xff]
        %v2503 = vld [vmem:[%s2479 + $0xb8] sm:$0xff]
        %v2504 = vld [vmem:[%s2479 + $0xc0] sm:$0xff]
        %v2505 = vld [vmem:[%s2479 + $0xc8] sm:$0xff]
        %v2506 = vld [vmem:[%s2479 + $0xd0] sm:$0xff]
        %v2507 = vld [vmem:[%s2479 + $0xd8] sm:$0xff]
        %v2508 = vld [vmem:[%s2479 + $0xe0] sm:$0xff]
        %v2509 = vld [vmem:[%s2479 + $0xe8] sm:$0xff]
        %v2510 = vld [vmem:[%s2479 + $0xf0] sm:$0xff]
        %v2511 = vld [vmem:[%s2479 + $0xf8] sm:$0xff]
        %v2512 = vld [vmem:[%s2479 + $0x100] sm:$0xff]
        %v2513 = vld [vmem:[%s2479 + $0x108] sm:$0xff]
        %v2514 = vld [vmem:[%s2479 + $0x110] sm:$0xff]
        %v2515 = vld [vmem:[%s2479 + $0x118] sm:$0xff]
        %v2516 = vld [vmem:[%s2479 + $0x120] sm:$0xff]
        %v2517 = vld [vmem:[%s2479 + $0x128] sm:$0xff]
        %v2518 = vld [vmem:[%s2479 + $0x130] sm:$0xff]
        %v2519 = vld [vmem:[%s2479 + $0x138] sm:$0xff]
        %v2520 = vld [vmem:[%s2479 + $0x140] sm:$0xff]
        %v2521 = vld [vmem:[%s2479 + $0x148] sm:$0xff]
        %v2522 = vld [vmem:[%s2479 + $0x150] sm:$0xff]
        %v2523 = vld [vmem:[%s2479 + $0x158] sm:$0xff]
        %v2524 = vld [vmem:[%s2479 + $0x160] sm:$0xff]
        %v2525 = vld [vmem:[%s2479 + $0x168] sm:$0xff]
        %v2526 = vld [vmem:[%s2479 + $0x170] sm:$0xff]
        %v2527 = vld [vmem:[%s2479 + $0x178] sm:$0xff]
        %v2528 = vld [vmem:[%s2479 + $0x180] sm:$0xff]
        %v2529 = vld [vmem:[%s2479 + $0x188] sm:$0xff]
        %v2530 = vld [vmem:[%s2479 + $0x190] sm:$0xff]
        %v2531 = vld [vmem:[%s2479 + $0x198] sm:$0xff]
        %v2532 = vld [vmem:[%s2479 + $0x1a0] sm:$0xff]
        %v2533 = vld [vmem:[%s2479 + $0x1a8] sm:$0xff]
        %v2534 = vld [vmem:[%s2479 + $0x1b0] sm:$0xff]
        %v2535 = vld [vmem:[%s2479 + $0x1b8] sm:$0xff]
        %v2536 = vld [vmem:[%s2479 + $0x1c0] sm:$0x1]
        %v2537 = vld [vmem:[%s2479 + $0x1c8] sm:$0x1]
        %v2539 = vsel %vm880, %v2536, 0
        %v2542 = vsel %vm880, %v2537, 0
        %2544 = vmatprep.subr.mxu0 %v2481
        %2545 = vmatpush1.msra.mxu0 %v2480
        %2546 = vmatprep.subr.mxu0 %v2483
        %2547 = vmatpush1.msra.mxu0 %v2482
        %2548 = vmatprep.subr.mxu0 %v2485
        %2549 = vmatpush1.msra.mxu0 %v2484
        %2550 = vmatprep.subr.mxu0 %v2487
        %2551 = vmatpush1.msra.mxu0 %v2486
        %2552 = vmatprep.subr.mxu0 %v2489
        %2553 = vmatpush1.msra.mxu0 %v2488
        %2554 = vmatprep.subr.mxu0 %v2491
        %2555 = vmatpush1.msra.mxu0 %v2490
        %2556 = vmatprep.subr.mxu0 %v2493
        %2557 = vmatpush1.msra.mxu0 %v2492
        %2558 = vmatprep.subr.mxu0 %v2495
        %2559 = vmatpush1.msra.mxu0 %v2494
        %2560 = vmatprep.subr.mxu0 %v2497
        %2561 = vmatpush1.msra.mxu0 %v2496
        %2562 = vmatprep.subr.mxu0 %v2499
        %2563 = vmatpush1.msra.mxu0 %v2498
        %2564 = vmatprep.subr.mxu0 %v2501
        %2565 = vmatpush1.msra.mxu0 %v2500
        %2566 = vmatprep.subr.mxu0 %v2503
        %2567 = vmatpush1.msra.mxu0 %v2502
        %2568 = vmatprep.subr.mxu0 %v2505
        %2569 = vmatpush1.msra.mxu0 %v2504
        %2570 = vmatprep.subr.mxu0 %v2507
        %2571 = vmatpush1.msra.mxu0 %v2506
        %2572 = vmatprep.subr.mxu0 %v2509
        %2573 = vmatpush1.msra.mxu0 %v2508
        %2574 = vmatprep.subr.mxu0 %v2511
        %2575 = vmatpush1.msra.mxu0 %v2510
        %2576 = vmatprep.subr.mxu0 %v2513
        %2577 = vmatpush1.msra.mxu0 %v2512
        %2578 = vmatprep.subr.mxu0 %v2515
        %2579 = vmatpush1.msra.mxu0 %v2514
        %2580 = vmatprep.subr.mxu0 %v2517
        %2581 = vmatpush1.msra.mxu0 %v2516
        %2582 = vmatprep.subr.mxu0 %v2519
        %2583 = vmatpush1.msra.mxu0 %v2518
        %2584 = vmatprep.subr.mxu0 %v2521
        %2585 = vmatpush1.msra.mxu0 %v2520
        %2586 = vmatprep.subr.mxu0 %v2523
        %2587 = vmatpush1.msra.mxu0 %v2522
        %2588 = vmatprep.subr.mxu0 %v2525
        %2589 = vmatpush1.msra.mxu0 %v2524
        %2590 = vmatprep.subr.mxu0 %v2527
        %2591 = vmatpush1.msra.mxu0 %v2526
        %2592 = vmatprep.subr.mxu0 %v2529
        %2593 = vmatpush1.msra.mxu0 %v2528
        %2594 = vmatprep.subr.mxu0 %v2531
        %2595 = vmatpush1.msra.mxu0 %v2530
        %2596 = vmatprep.subr.mxu0 %v2533
        %2597 = vmatpush1.msra.mxu0 %v2532
        %2598 = vmatprep.subr.mxu0 %v2535
        %2599 = vmatpush1.msra.mxu0 %v2534
        %2600 = vmatprep.subr.mxu0 %v2542
        %2601 = vmatpush1.msra.mxu0 %v2539
        %2602 = vmatprep.subr.mxu0 0.0
        %2603 = vmatpush1.msra.mxu0 0.0
        %2604 = vmatprep.subr.mxu0 0.0
        %2605 = vmatpush1.msra.mxu0 0.0
        %2606 = vmatprep.subr.mxu0 0.0
        %2607 = vmatpush1.msra.mxu0 0.0
        %2608 = vmatprep.mubr.f32.mxu0 %v878
        %2609 = vmatmul.mubr.f32.gmra.mrb[0].mxu0 %v816
        %v2610 = vpop.f32.mrb[0].mxu0
        %v2611 = vadd.f32 0.0, %v2610
        %v2612 = vpop.f32.mrb[0].mxu0
        %v2613 = vadd.f32 0.0, %v2612
        %2614 = vdwg.mxu0
        %2615 = vst [vmem:[#allocation2 + $0xc0] sm:$0xff] %v2611
        %2616 = vst.msk [vmem:[#allocation2 + $0xc8] sm:$0xff] %vm959, %v2613
        %s2617 = scalar_lea.vmem %s3, 6032
        %v2618 = vld [vmem:[%s2617] sm:$0xff]
        %v2619 = vld [vmem:[%s2617 + $0x8] sm:$0xff]
        %v2620 = vld [vmem:[%s2617 + $0x10] sm:$0xff]
        %v2621 = vld [vmem:[%s2617 + $0x18] sm:$0xff]
        %v2622 = vld [vmem:[%s2617 + $0x20] sm:$0xff]
        %v2623 = vld [vmem:[%s2617 + $0x28] sm:$0xff]
        %v2624 = vld [vmem:[%s2617 + $0x30] sm:$0xff]
        %v2625 = vld [vmem:[%s2617 + $0x38] sm:$0xff]
        %v2626 = vld [vmem:[%s2617 + $0x40] sm:$0xff]
        %v2627 = vld [vmem:[%s2617 + $0x48] sm:$0xff]
        %v2628 = vld [vmem:[%s2617 + $0x50] sm:$0xff]
        %v2629 = vld [vmem:[%s2617 + $0x58] sm:$0xff]
        %v2630 = vld [vmem:[%s2617 + $0x60] sm:$0xff]
        %v2631 = vld [vmem:[%s2617 + $0x68] sm:$0xff]
        %v2632 = vld [vmem:[%s2617 + $0x70] sm:$0xff]
        %v2633 = vld [vmem:[%s2617 + $0x78] sm:$0xff]
        %v2634 = vld [vmem:[%s2617 + $0x80] sm:$0xff]
        %v2635 = vld [vmem:[%s2617 + $0x88] sm:$0xff]
        %v2636 = vld [vmem:[%s2617 + $0x90] sm:$0xff]
        %v2637 = vld [vmem:[%s2617 + $0x98] sm:$0xff]
        %v2638 = vld [vmem:[%s2617 + $0xa0] sm:$0xff]
        %v2639 = vld [vmem:[%s2617 + $0xa8] sm:$0xff]
        %v2640 = vld [vmem:[%s2617 + $0xb0] sm:$0xff]
        %v2641 = vld [vmem:[%s2617 + $0xb8] sm:$0xff]
        %v2642 = vld [vmem:[%s2617 + $0xc0] sm:$0xff]
        %v2643 = vld [vmem:[%s2617 + $0xc8] sm:$0xff]
        %v2644 = vld [vmem:[%s2617 + $0xd0] sm:$0xff]
        %v2645 = vld [vmem:[%s2617 + $0xd8] sm:$0xff]
        %v2646 = vld [vmem:[%s2617 + $0xe0] sm:$0xff]
        %v2647 = vld [vmem:[%s2617 + $0xe8] sm:$0xff]
        %v2648 = vld [vmem:[%s2617 + $0xf0] sm:$0xff]
        %v2649 = vld [vmem:[%s2617 + $0xf8] sm:$0xff]
        %v2650 = vld [vmem:[%s2617 + $0x100] sm:$0xff]
        %v2651 = vld [vmem:[%s2617 + $0x108] sm:$0xff]
        %v2652 = vld [vmem:[%s2617 + $0x110] sm:$0xff]
        %v2653 = vld [vmem:[%s2617 + $0x118] sm:$0xff]
        %v2654 = vld [vmem:[%s2617 + $0x120] sm:$0xff]
        %v2655 = vld [vmem:[%s2617 + $0x128] sm:$0xff]
        %v2656 = vld [vmem:[%s2617 + $0x130] sm:$0xff]
        %v2657 = vld [vmem:[%s2617 + $0x138] sm:$0xff]
        %v2658 = vld [vmem:[%s2617 + $0x140] sm:$0xff]
        %v2659 = vld [vmem:[%s2617 + $0x148] sm:$0xff]
        %v2660 = vld [vmem:[%s2617 + $0x150] sm:$0xff]
        %v2661 = vld [vmem:[%s2617 + $0x158] sm:$0xff]
        %v2662 = vld [vmem:[%s2617 + $0x160] sm:$0xff]
        %v2663 = vld [vmem:[%s2617 + $0x168] sm:$0xff]
        %v2664 = vld [vmem:[%s2617 + $0x170] sm:$0xff]
        %v2665 = vld [vmem:[%s2617 + $0x178] sm:$0xff]
        %v2666 = vld [vmem:[%s2617 + $0x180] sm:$0xff]
        %v2667 = vld [vmem:[%s2617 + $0x188] sm:$0xff]
        %v2668 = vld [vmem:[%s2617 + $0x190] sm:$0xff]
        %v2669 = vld [vmem:[%s2617 + $0x198] sm:$0xff]
        %v2670 = vld [vmem:[%s2617 + $0x1a0] sm:$0xff]
        %v2671 = vld [vmem:[%s2617 + $0x1a8] sm:$0xff]
        %v2672 = vld [vmem:[%s2617 + $0x1b0] sm:$0xff]
        %v2673 = vld [vmem:[%s2617 + $0x1b8] sm:$0xff]
        %v2674 = vld [vmem:[%s2617 + $0x1c0] sm:$0x1]
        %v2675 = vld [vmem:[%s2617 + $0x1c8] sm:$0x1]
        %v2677 = vsel %vm880, %v2674, 0
        %v2680 = vsel %vm880, %v2675, 0
        %2682 = vmatprep.subr.mxu0 %v2619
        %2683 = vmatpush1.msra.mxu0 %v2618
        %2684 = vmatprep.subr.mxu0 %v2621
        %2685 = vmatpush1.msra.mxu0 %v2620
        %2686 = vmatprep.subr.mxu0 %v2623
        %2687 = vmatpush1.msra.mxu0 %v2622
        %2688 = vmatprep.subr.mxu0 %v2625
        %2689 = vmatpush1.msra.mxu0 %v2624
        %2690 = vmatprep.subr.mxu0 %v2627
        %2691 = vmatpush1.msra.mxu0 %v2626
        %2692 = vmatprep.subr.mxu0 %v2629
        %2693 = vmatpush1.msra.mxu0 %v2628
        %2694 = vmatprep.subr.mxu0 %v2631
        %2695 = vmatpush1.msra.mxu0 %v2630
        %2696 = vmatprep.subr.mxu0 %v2633
        %2697 = vmatpush1.msra.mxu0 %v2632
        %2698 = vmatprep.subr.mxu0 %v2635
        %2699 = vmatpush1.msra.mxu0 %v2634
        %2700 = vmatprep.subr.mxu0 %v2637
        %2701 = vmatpush1.msra.mxu0 %v2636
        %2702 = vmatprep.subr.mxu0 %v2639
        %2703 = vmatpush1.msra.mxu0 %v2638
        %2704 = vmatprep.subr.mxu0 %v2641
        %2705 = vmatpush1.msra.mxu0 %v2640
        %2706 = vmatprep.subr.mxu0 %v2643
        %2707 = vmatpush1.msra.mxu0 %v2642
        %2708 = vmatprep.subr.mxu0 %v2645
        %2709 = vmatpush1.msra.mxu0 %v2644
        %2710 = vmatprep.subr.mxu0 %v2647
        %2711 = vmatpush1.msra.mxu0 %v2646
        %2712 = vmatprep.subr.mxu0 %v2649
        %2713 = vmatpush1.msra.mxu0 %v2648
        %2714 = vmatprep.subr.mxu0 %v2651
        %2715 = vmatpush1.msra.mxu0 %v2650
        %2716 = vmatprep.subr.mxu0 %v2653
        %2717 = vmatpush1.msra.mxu0 %v2652
        %2718 = vmatprep.subr.mxu0 %v2655
        %2719 = vmatpush1.msra.mxu0 %v2654
        %2720 = vmatprep.subr.mxu0 %v2657
        %2721 = vmatpush1.msra.mxu0 %v2656
        %2722 = vmatprep.subr.mxu0 %v2659
        %2723 = vmatpush1.msra.mxu0 %v2658
        %2724 = vmatprep.subr.mxu0 %v2661
        %2725 = vmatpush1.msra.mxu0 %v2660
        %2726 = vmatprep.subr.mxu0 %v2663
        %2727 = vmatpush1.msra.mxu0 %v2662
        %2728 = vmatprep.subr.mxu0 %v2665
        %2729 = vmatpush1.msra.mxu0 %v2664
        %2730 = vmatprep.subr.mxu0 %v2667
        %2731 = vmatpush1.msra.mxu0 %v2666
        %2732 = vmatprep.subr.mxu0 %v2669
        %2733 = vmatpush1.msra.mxu0 %v2668
        %2734 = vmatprep.subr.mxu0 %v2671
        %2735 = vmatpush1.msra.mxu0 %v2670
        %2736 = vmatprep.subr.mxu0 %v2673
        %2737 = vmatpush1.msra.mxu0 %v2672
        %2738 = vmatprep.subr.mxu0 %v2680
        %2739 = vmatpush1.msra.mxu0 %v2677
        %2740 = vmatprep.subr.mxu0 0.0
        %2741 = vmatpush1.msra.mxu0 0.0
        %2742 = vmatprep.subr.mxu0 0.0
        %2743 = vmatpush1.msra.mxu0 0.0
        %2744 = vmatprep.subr.mxu0 0.0
        %2745 = vmatpush1.msra.mxu0 0.0
        %2746 = vmatprep.mubr.f32.mxu0 %v878
        %2747 = vmatmul.mubr.f32.gmra.mrb[0].mxu0 %v816
        %v2748 = vpop.f32.mrb[0].mxu0
        %v2749 = vadd.f32 0.0, %v2748
        %v2750 = vpop.f32.mrb[0].mxu0
        %v2751 = vadd.f32 0.0, %v2750
        %2752 = vdwg.mxu0
        %2753 = vst [vmem:[#allocation2 + $0xd0] sm:$0xff] %v2749
        %2754 = vst.msk [vmem:[#allocation2 + $0xd8] sm:$0xff] %vm959, %v2751
        %s2755 = scalar_lea.vmem %s3, 6496
        %v2756 = vld [vmem:[%s2755] sm:$0xff]
        %v2757 = vld [vmem:[%s2755 + $0x8] sm:$0xff]
        %v2758 = vld [vmem:[%s2755 + $0x10] sm:$0xff]
        %v2759 = vld [vmem:[%s2755 + $0x18] sm:$0xff]
        %v2760 = vld [vmem:[%s2755 + $0x20] sm:$0xff]
        %v2761 = vld [vmem:[%s2755 + $0x28] sm:$0xff]
        %v2762 = vld [vmem:[%s2755 + $0x30] sm:$0xff]
        %v2763 = vld [vmem:[%s2755 + $0x38] sm:$0xff]
        %v2764 = vld [vmem:[%s2755 + $0x40] sm:$0xff]
        %v2765 = vld [vmem:[%s2755 + $0x48] sm:$0xff]
        %v2766 = vld [vmem:[%s2755 + $0x50] sm:$0xff]
        %v2767 = vld [vmem:[%s2755 + $0x58] sm:$0xff]
        %v2768 = vld [vmem:[%s2755 + $0x60] sm:$0xff]
        %v2769 = vld [vmem:[%s2755 + $0x68] sm:$0xff]
        %v2770 = vld [vmem:[%s2755 + $0x70] sm:$0xff]
        %v2771 = vld [vmem:[%s2755 + $0x78] sm:$0xff]
        %v2772 = vld [vmem:[%s2755 + $0x80] sm:$0xff]
        %v2773 = vld [vmem:[%s2755 + $0x88] sm:$0xff]
        %v2774 = vld [vmem:[%s2755 + $0x90] sm:$0xff]
        %v2775 = vld [vmem:[%s2755 + $0x98] sm:$0xff]
        %v2776 = vld [vmem:[%s2755 + $0xa0] sm:$0xff]
        %v2777 = vld [vmem:[%s2755 + $0xa8] sm:$0xff]
        %v2778 = vld [vmem:[%s2755 + $0xb0] sm:$0xff]
        %v2779 = vld [vmem:[%s2755 + $0xb8] sm:$0xff]
        %v2780 = vld [vmem:[%s2755 + $0xc0] sm:$0xff]
        %v2781 = vld [vmem:[%s2755 + $0xc8] sm:$0xff]
        %v2782 = vld [vmem:[%s2755 + $0xd0] sm:$0xff]
        %v2783 = vld [vmem:[%s2755 + $0xd8] sm:$0xff]
        %v2784 = vld [vmem:[%s2755 + $0xe0] sm:$0xff]
        %v2785 = vld [vmem:[%s2755 + $0xe8] sm:$0xff]
        %v2786 = vld [vmem:[%s2755 + $0xf0] sm:$0xff]
        %v2787 = vld [vmem:[%s2755 + $0xf8] sm:$0xff]
        %v2788 = vld [vmem:[%s2755 + $0x100] sm:$0xff]
        %v2789 = vld [vmem:[%s2755 + $0x108] sm:$0xff]
        %v2790 = vld [vmem:[%s2755 + $0x110] sm:$0xff]
        %v2791 = vld [vmem:[%s2755 + $0x118] sm:$0xff]
        %v2792 = vld [vmem:[%s2755 + $0x120] sm:$0xff]
        %v2793 = vld [vmem:[%s2755 + $0x128] sm:$0xff]
        %v2794 = vld [vmem:[%s2755 + $0x130] sm:$0xff]
        %v2795 = vld [vmem:[%s2755 + $0x138] sm:$0xff]
        %v2796 = vld [vmem:[%s2755 + $0x140] sm:$0xff]
        %v2797 = vld [vmem:[%s2755 + $0x148] sm:$0xff]
        %v2798 = vld [vmem:[%s2755 + $0x150] sm:$0xff]
        %v2799 = vld [vmem:[%s2755 + $0x158] sm:$0xff]
        %v2800 = vld [vmem:[%s2755 + $0x160] sm:$0xff]
        %v2801 = vld [vmem:[%s2755 + $0x168] sm:$0xff]
        %v2802 = vld [vmem:[%s2755 + $0x170] sm:$0xff]
        %v2803 = vld [vmem:[%s2755 + $0x178] sm:$0xff]
        %v2804 = vld [vmem:[%s2755 + $0x180] sm:$0xff]
        %v2805 = vld [vmem:[%s2755 + $0x188] sm:$0xff]
        %v2806 = vld [vmem:[%s2755 + $0x190] sm:$0xff]
        %v2807 = vld [vmem:[%s2755 + $0x198] sm:$0xff]
        %v2808 = vld [vmem:[%s2755 + $0x1a0] sm:$0xff]
        %v2809 = vld [vmem:[%s2755 + $0x1a8] sm:$0xff]
        %v2810 = vld [vmem:[%s2755 + $0x1b0] sm:$0xff]
        %v2811 = vld [vmem:[%s2755 + $0x1b8] sm:$0xff]
        %v2812 = vld [vmem:[%s2755 + $0x1c0] sm:$0x1]
        %v2813 = vld [vmem:[%s2755 + $0x1c8] sm:$0x1]
        %v2815 = vsel %vm880, %v2812, 0
        %v2818 = vsel %vm880, %v2813, 0
        %2820 = vmatprep.subr.mxu0 %v2757
        %2821 = vmatpush1.msra.mxu0 %v2756
        %2822 = vmatprep.subr.mxu0 %v2759
        %2823 = vmatpush1.msra.mxu0 %v2758
        %2824 = vmatprep.subr.mxu0 %v2761
        %2825 = vmatpush1.msra.mxu0 %v2760
        %2826 = vmatprep.subr.mxu0 %v2763
        %2827 = vmatpush1.msra.mxu0 %v2762
        %2828 = vmatprep.subr.mxu0 %v2765
        %2829 = vmatpush1.msra.mxu0 %v2764
        %2830 = vmatprep.subr.mxu0 %v2767
        %2831 = vmatpush1.msra.mxu0 %v2766
        %2832 = vmatprep.subr.mxu0 %v2769
        %2833 = vmatpush1.msra.mxu0 %v2768
        %2834 = vmatprep.subr.mxu0 %v2771
        %2835 = vmatpush1.msra.mxu0 %v2770
        %2836 = vmatprep.subr.mxu0 %v2773
        %2837 = vmatpush1.msra.mxu0 %v2772
        %2838 = vmatprep.subr.mxu0 %v2775
        %2839 = vmatpush1.msra.mxu0 %v2774
        %2840 = vmatprep.subr.mxu0 %v2777
        %2841 = vmatpush1.msra.mxu0 %v2776
        %2842 = vmatprep.subr.mxu0 %v2779
        %2843 = vmatpush1.msra.mxu0 %v2778
        %2844 = vmatprep.subr.mxu0 %v2781
        %2845 = vmatpush1.msra.mxu0 %v2780
        %2846 = vmatprep.subr.mxu0 %v2783
        %2847 = vmatpush1.msra.mxu0 %v2782
        %2848 = vmatprep.subr.mxu0 %v2785
        %2849 = vmatpush1.msra.mxu0 %v2784
        %2850 = vmatprep.subr.mxu0 %v2787
        %2851 = vmatpush1.msra.mxu0 %v2786
        %2852 = vmatprep.subr.mxu0 %v2789
        %2853 = vmatpush1.msra.mxu0 %v2788
        %2854 = vmatprep.subr.mxu0 %v2791
        %2855 = vmatpush1.msra.mxu0 %v2790
        %2856 = vmatprep.subr.mxu0 %v2793
        %2857 = vmatpush1.msra.mxu0 %v2792
        %2858 = vmatprep.subr.mxu0 %v2795
        %2859 = vmatpush1.msra.mxu0 %v2794
        %2860 = vmatprep.subr.mxu0 %v2797
        %2861 = vmatpush1.msra.mxu0 %v2796
        %2862 = vmatprep.subr.mxu0 %v2799
        %2863 = vmatpush1.msra.mxu0 %v2798
        %2864 = vmatprep.subr.mxu0 %v2801
        %2865 = vmatpush1.msra.mxu0 %v2800
        %2866 = vmatprep.subr.mxu0 %v2803
        %2867 = vmatpush1.msra.mxu0 %v2802
        %2868 = vmatprep.subr.mxu0 %v2805
        %2869 = vmatpush1.msra.mxu0 %v2804
        %2870 = vmatprep.subr.mxu0 %v2807
        %2871 = vmatpush1.msra.mxu0 %v2806
        %2872 = vmatprep.subr.mxu0 %v2809
        %2873 = vmatpush1.msra.mxu0 %v2808
        %2874 = vmatprep.subr.mxu0 %v2811
        %2875 = vmatpush1.msra.mxu0 %v2810
        %2876 = vmatprep.subr.mxu0 %v2818
        %2877 = vmatpush1.msra.mxu0 %v2815
        %2878 = vmatprep.subr.mxu0 0.0
        %2879 = vmatpush1.msra.mxu0 0.0
        %2880 = vmatprep.subr.mxu0 0.0
        %2881 = vmatpush1.msra.mxu0 0.0
        %2882 = vmatprep.subr.mxu0 0.0
        %2883 = vmatpush1.msra.mxu0 0.0
        %2884 = vmatprep.mubr.f32.mxu0 %v878
        %2885 = vmatmul.mubr.f32.gmra.mrb[0].mxu0 %v816
        %v2886 = vpop.f32.mrb[0].mxu0
        %v2887 = vadd.f32 0.0, %v2886
        %v2888 = vpop.f32.mrb[0].mxu0
        %v2889 = vadd.f32 0.0, %v2888
        %2890 = vdwg.mxu0
        %2891 = vst [vmem:[#allocation2 + $0xe0] sm:$0xff] %v2887
        %2892 = vst.msk [vmem:[#allocation2 + $0xe8] sm:$0xff] %vm959, %v2889
        %s2893 = scalar_lea.vmem %s3, 6960
        %v2894 = vld [vmem:[%s2893] sm:$0xff]
        %v2895 = vld [vmem:[%s2893 + $0x8] sm:$0xff]
        %v2896 = vld [vmem:[%s2893 + $0x10] sm:$0xff]
        %v2897 = vld [vmem:[%s2893 + $0x18] sm:$0xff]
        %v2898 = vld [vmem:[%s2893 + $0x20] sm:$0xff]
        %v2899 = vld [vmem:[%s2893 + $0x28] sm:$0xff]
        %v2900 = vld [vmem:[%s2893 + $0x30] sm:$0xff]
        %v2901 = vld [vmem:[%s2893 + $0x38] sm:$0xff]
        %v2902 = vld [vmem:[%s2893 + $0x40] sm:$0xff]
        %v2903 = vld [vmem:[%s2893 + $0x48] sm:$0xff]
        %v2904 = vld [vmem:[%s2893 + $0x50] sm:$0xff]
        %v2905 = vld [vmem:[%s2893 + $0x58] sm:$0xff]
        %v2906 = vld [vmem:[%s2893 + $0x60] sm:$0xff]
        %v2907 = vld [vmem:[%s2893 + $0x68] sm:$0xff]
        %v2908 = vld [vmem:[%s2893 + $0x70] sm:$0xff]
        %v2909 = vld [vmem:[%s2893 + $0x78] sm:$0xff]
        %v2910 = vld [vmem:[%s2893 + $0x80] sm:$0xff]
        %v2911 = vld [vmem:[%s2893 + $0x88] sm:$0xff]
        %v2912 = vld [vmem:[%s2893 + $0x90] sm:$0xff]
        %v2913 = vld [vmem:[%s2893 + $0x98] sm:$0xff]
        %v2914 = vld [vmem:[%s2893 + $0xa0] sm:$0xff]
        %v2915 = vld [vmem:[%s2893 + $0xa8] sm:$0xff]
        %v2916 = vld [vmem:[%s2893 + $0xb0] sm:$0xff]
        %v2917 = vld [vmem:[%s2893 + $0xb8] sm:$0xff]
        %v2918 = vld [vmem:[%s2893 + $0xc0] sm:$0xff]
        %v2919 = vld [vmem:[%s2893 + $0xc8] sm:$0xff]
        %v2920 = vld [vmem:[%s2893 + $0xd0] sm:$0xff]
        %v2921 = vld [vmem:[%s2893 + $0xd8] sm:$0xff]
        %v2922 = vld [vmem:[%s2893 + $0xe0] sm:$0xff]
        %v2923 = vld [vmem:[%s2893 + $0xe8] sm:$0xff]
        %v2924 = vld [vmem:[%s2893 + $0xf0] sm:$0xff]
        %v2925 = vld [vmem:[%s2893 + $0xf8] sm:$0xff]
        %v2926 = vld [vmem:[%s2893 + $0x100] sm:$0xff]
        %v2927 = vld [vmem:[%s2893 + $0x108] sm:$0xff]
        %v2928 = vld [vmem:[%s2893 + $0x110] sm:$0xff]
        %v2929 = vld [vmem:[%s2893 + $0x118] sm:$0xff]
        %v2930 = vld [vmem:[%s2893 + $0x120] sm:$0xff]
        %v2931 = vld [vmem:[%s2893 + $0x128] sm:$0xff]
        %v2932 = vld [vmem:[%s2893 + $0x130] sm:$0xff]
        %v2933 = vld [vmem:[%s2893 + $0x138] sm:$0xff]
        %v2934 = vld [vmem:[%s2893 + $0x140] sm:$0xff]
        %v2935 = vld [vmem:[%s2893 + $0x148] sm:$0xff]
        %v2936 = vld [vmem:[%s2893 + $0x150] sm:$0xff]
        %v2937 = vld [vmem:[%s2893 + $0x158] sm:$0xff]
        %v2938 = vld [vmem:[%s2893 + $0x160] sm:$0xff]
        %v2939 = vld [vmem:[%s2893 + $0x168] sm:$0xff]
        %v2940 = vld [vmem:[%s2893 + $0x170] sm:$0xff]
        %v2941 = vld [vmem:[%s2893 + $0x178] sm:$0xff]
        %v2942 = vld [vmem:[%s2893 + $0x180] sm:$0xff]
        %v2943 = vld [vmem:[%s2893 + $0x188] sm:$0xff]
        %v2944 = vld [vmem:[%s2893 + $0x190] sm:$0xff]
        %v2945 = vld [vmem:[%s2893 + $0x198] sm:$0xff]
        %v2946 = vld [vmem:[%s2893 + $0x1a0] sm:$0xff]
        %v2947 = vld [vmem:[%s2893 + $0x1a8] sm:$0xff]
        %v2948 = vld [vmem:[%s2893 + $0x1b0] sm:$0xff]
        %v2949 = vld [vmem:[%s2893 + $0x1b8] sm:$0xff]
        %v2950 = vld [vmem:[%s2893 + $0x1c0] sm:$0x1]
        %v2951 = vld [vmem:[%s2893 + $0x1c8] sm:$0x1]
        %v2953 = vsel %vm880, %v2950, 0
        %v2956 = vsel %vm880, %v2951, 0
        %2958 = vmatprep.subr.mxu0 %v2895
        %2959 = vmatpush1.msra.mxu0 %v2894
        %2960 = vmatprep.subr.mxu0 %v2897
        %2961 = vmatpush1.msra.mxu0 %v2896
        %2962 = vmatprep.subr.mxu0 %v2899
        %2963 = vmatpush1.msra.mxu0 %v2898
        %2964 = vmatprep.subr.mxu0 %v2901
        %2965 = vmatpush1.msra.mxu0 %v2900
        %2966 = vmatprep.subr.mxu0 %v2903
        %2967 = vmatpush1.msra.mxu0 %v2902
        %2968 = vmatprep.subr.mxu0 %v2905
        %2969 = vmatpush1.msra.mxu0 %v2904
        %2970 = vmatprep.subr.mxu0 %v2907
        %2971 = vmatpush1.msra.mxu0 %v2906
        %2972 = vmatprep.subr.mxu0 %v2909
        %2973 = vmatpush1.msra.mxu0 %v2908
        %2974 = vmatprep.subr.mxu0 %v2911
        %2975 = vmatpush1.msra.mxu0 %v2910
        %2976 = vmatprep.subr.mxu0 %v2913
        %2977 = vmatpush1.msra.mxu0 %v2912
        %2978 = vmatprep.subr.mxu0 %v2915
        %2979 = vmatpush1.msra.mxu0 %v2914
        %2980 = vmatprep.subr.mxu0 %v2917
        %2981 = vmatpush1.msra.mxu0 %v2916
        %2982 = vmatprep.subr.mxu0 %v2919
        %2983 = vmatpush1.msra.mxu0 %v2918
        %2984 = vmatprep.subr.mxu0 %v2921
        %2985 = vmatpush1.msra.mxu0 %v2920
        %2986 = vmatprep.subr.mxu0 %v2923
        %2987 = vmatpush1.msra.mxu0 %v2922
        %2988 = vmatprep.subr.mxu0 %v2925
        %2989 = vmatpush1.msra.mxu0 %v2924
        %2990 = vmatprep.subr.mxu0 %v2927
        %2991 = vmatpush1.msra.mxu0 %v2926
        %2992 = vmatprep.subr.mxu0 %v2929
        %2993 = vmatpush1.msra.mxu0 %v2928
        %2994 = vmatprep.subr.mxu0 %v2931
        %2995 = vmatpush1.msra.mxu0 %v2930
        %2996 = vmatprep.subr.mxu0 %v2933
        %2997 = vmatpush1.msra.mxu0 %v2932
        %2998 = vmatprep.subr.mxu0 %v2935
        %2999 = vmatpush1.msra.mxu0 %v2934
        %3000 = vmatprep.subr.mxu0 %v2937
        %3001 = vmatpush1.msra.mxu0 %v2936
        %3002 = vmatprep.subr.mxu0 %v2939
        %3003 = vmatpush1.msra.mxu0 %v2938
        %3004 = vmatprep.subr.mxu0 %v2941
        %3005 = vmatpush1.msra.mxu0 %v2940
        %3006 = vmatprep.subr.mxu0 %v2943
        %3007 = vmatpush1.msra.mxu0 %v2942
        %3008 = vmatprep.subr.mxu0 %v2945
        %3009 = vmatpush1.msra.mxu0 %v2944
        %3010 = vmatprep.subr.mxu0 %v2947
        %3011 = vmatpush1.msra.mxu0 %v2946
        %3012 = vmatprep.subr.mxu0 %v2949
        %3013 = vmatpush1.msra.mxu0 %v2948
        %3014 = vmatprep.subr.mxu0 %v2956
        %3015 = vmatpush1.msra.mxu0 %v2953
        %3016 = vmatprep.subr.mxu0 0.0
        %3017 = vmatpush1.msra.mxu0 0.0
        %3018 = vmatprep.subr.mxu0 0.0
        %3019 = vmatpush1.msra.mxu0 0.0
        %3020 = vmatprep.subr.mxu0 0.0
        %3021 = vmatpush1.msra.mxu0 0.0
        %3022 = vmatprep.mubr.f32.mxu0 %v878
        %3023 = vmatmul.mubr.f32.gmra.mrb[0].mxu0 %v816
        %v3024 = vpop.f32.mrb[0].mxu0
        %v3025 = vadd.f32 0.0, %v3024
        %v3026 = vpop.f32.mrb[0].mxu0
        %v3027 = vadd.f32 0.0, %v3026
        %3028 = vdwg.mxu0
        %3029 = vst [vmem:[#allocation2 + $0xf0] sm:$0xff] %v3025
        %3030 = vst.msk [vmem:[#allocation2 + $0xf8] sm:$0xff] %vm959, %v3027
        %v3031 = vld [vmem:[%s4] sm:$0xff]
        %v3032 = vld [vmem:[%s4 + $0x8] sm:$0xf]
        %v3033 = vld [vmem:[#allocation2] sm:$0xff]
        %v3034 = vld [vmem:[#allocation2 + $0x8] sm:$0xff]
        %v3035 = vld [vmem:[#allocation2 + $0x10] sm:$0xff]
        %v3036 = vld [vmem:[#allocation2 + $0x18] sm:$0xff]
        %v3037 = vld [vmem:[#allocation2 + $0x20] sm:$0xff]
        %v3038 = vld [vmem:[#allocation2 + $0x28] sm:$0xff]
        %v3039 = vld [vmem:[#allocation2 + $0x30] sm:$0xff]
        %v3040 = vld [vmem:[#allocation2 + $0x38] sm:$0xff]
        %v3041 = vld [vmem:[#allocation2 + $0x40] sm:$0xff]
        %v3042 = vld [vmem:[#allocation2 + $0x48] sm:$0xff]
        %v3043 = vld [vmem:[#allocation2 + $0x50] sm:$0xff]
        %v3044 = vld [vmem:[#allocation2 + $0x58] sm:$0xff]
        %v3045 = vld [vmem:[#allocation2 + $0x60] sm:$0xff]
        %v3046 = vld [vmem:[#allocation2 + $0x68] sm:$0xff]
        %v3047 = vld [vmem:[#allocation2 + $0x70] sm:$0xff]
        %v3048 = vld [vmem:[#allocation2 + $0x78] sm:$0xff]
        %v3049 = vld [vmem:[#allocation2 + $0x80] sm:$0xff]
        %v3050 = vld [vmem:[#allocation2 + $0x88] sm:$0xff]
        %v3051 = vld [vmem:[#allocation2 + $0x90] sm:$0xff]
        %v3052 = vld [vmem:[#allocation2 + $0x98] sm:$0xff]
        %v3053 = vld [vmem:[#allocation2 + $0xa0] sm:$0xff]
        %v3054 = vld [vmem:[#allocation2 + $0xa8] sm:$0xff]
        %v3055 = vld [vmem:[#allocation2 + $0xb0] sm:$0xff]
        %v3056 = vld [vmem:[#allocation2 + $0xb8] sm:$0xff]
        %v3057 = vld [vmem:[#allocation2 + $0xc0] sm:$0xff]
        %v3058 = vld [vmem:[#allocation2 + $0xc8] sm:$0xff]
        %v3059 = vld [vmem:[#allocation2 + $0xd0] sm:$0xff]
        %v3060 = vld [vmem:[#allocation2 + $0xd8] sm:$0xff]
        %v3061 = vld [vmem:[#allocation2 + $0xe0] sm:$0xff]
        %v3062 = vld [vmem:[#allocation2 + $0xe8] sm:$0xff]
        %v3063 = vld [vmem:[#allocation2 + $0xf0] sm:$0xff]
        %v3064 = vld [vmem:[#allocation2 + $0xf8] sm:$0xff]
        %3065 = vmatprep.subr.mxu0 %v3034
        %3066 = vmatpush1.msra.mxu0 %v3033
        %3067 = vmatprep.subr.mxu0 %v3036
        %3068 = vmatpush1.msra.mxu0 %v3035
        %3069 = vmatprep.subr.mxu0 %v3038
        %3070 = vmatpush1.msra.mxu0 %v3037
        %3071 = vmatprep.subr.mxu0 %v3040
        %3072 = vmatpush1.msra.mxu0 %v3039
        %3073 = vmatprep.subr.mxu0 %v3042
        %3074 = vmatpush1.msra.mxu0 %v3041
        %3075 = vmatprep.subr.mxu0 %v3044
        %3076 = vmatpush1.msra.mxu0 %v3043
        %3077 = vmatprep.subr.mxu0 %v3046
        %3078 = vmatpush1.msra.mxu0 %v3045
        %3079 = vmatprep.subr.mxu0 %v3048
        %3080 = vmatpush1.msra.mxu0 %v3047
        %3081 = vmatprep.subr.mxu0 %v3050
        %3082 = vmatpush1.msra.mxu0 %v3049
        %3083 = vmatprep.subr.mxu0 %v3052
        %3084 = vmatpush1.msra.mxu0 %v3051
        %3085 = vmatprep.subr.mxu0 %v3054
        %3086 = vmatpush1.msra.mxu0 %v3053
        %3087 = vmatprep.subr.mxu0 %v3056
        %3088 = vmatpush1.msra.mxu0 %v3055
        %3089 = vmatprep.subr.mxu0 %v3058
        %3090 = vmatpush1.msra.mxu0 %v3057
        %3091 = vmatprep.subr.mxu0 %v3060
        %3092 = vmatpush1.msra.mxu0 %v3059
        %3093 = vmatprep.subr.mxu0 %v3062
        %3094 = vmatpush1.msra.mxu0 %v3061
        %3095 = vmatprep.subr.mxu0 %v3064
        %3096 = vmatpush1.msra.mxu0 %v3063
        %3097 = vmatprep.subr.mxu0 0.0
        %3098 = vmatpush1.msra.mxu0 0.0
        %3099 = vmatprep.subr.mxu0 0.0
        %3100 = vmatpush1.msra.mxu0 0.0
        %3101 = vmatprep.subr.mxu0 0.0
        %3102 = vmatpush1.msra.mxu0 0.0
        %3103 = vmatprep.subr.mxu0 0.0
        %3104 = vmatpush1.msra.mxu0 0.0
        %3105 = vmatprep.subr.mxu0 0.0
        %3106 = vmatpush1.msra.mxu0 0.0
        %3107 = vmatprep.subr.mxu0 0.0
        %3108 = vmatpush1.msra.mxu0 0.0
        %3109 = vmatprep.subr.mxu0 0.0
        %3110 = vmatpush1.msra.mxu0 0.0
        %3111 = vmatprep.subr.mxu0 0.0
        %3112 = vmatpush1.msra.mxu0 0.0
        %3113 = vmatprep.subr.mxu0 0.0
        %3114 = vmatpush1.msra.mxu0 0.0
        %3115 = vmatprep.subr.mxu0 0.0
        %3116 = vmatpush1.msra.mxu0 0.0
        %3117 = vmatprep.subr.mxu0 0.0
        %3118 = vmatpush1.msra.mxu0 0.0
        %3119 = vmatprep.subr.mxu0 0.0
        %3120 = vmatpush1.msra.mxu0 0.0
        %3121 = vmatprep.subr.mxu0 0.0
        %3122 = vmatpush1.msra.mxu0 0.0
        %3123 = vmatprep.subr.mxu0 0.0
        %3124 = vmatpush1.msra.mxu0 0.0
        %3125 = vmatprep.subr.mxu0 0.0
        %3126 = vmatpush1.msra.mxu0 0.0
        %3127 = vmatprep.subr.mxu0 0.0
        %3128 = vmatpush1.msra.mxu0 0.0
        %3129 = vmatprep.mubr.f32.mxu0 0.0
        %3130 = vmatmul.mubr.f32.gmra.mrb[0].mxu0 %v3031
        %v3131 = vpop.f32.mrb[0].mxu0
        %v3132 = vadd.f32 0.0, %v3131
        %v3133 = vpop.f32.mrb[0].mxu0
        %v3134 = vadd.f32 0.0, %v3133
        %3135 = vmatprep.mubr.f32.mxu0 0.0
        %3136 = vmatmul.mubr.f32.gmra.mrb[0].mxu0 %v3032
        %v3137 = vpop.f32.mrb[0].mxu0
        %v3138 = vadd.f32 0.0, %v3137
        %v3139 = vpop.f32.mrb[0].mxu0
        %v3140 = vadd.f32 0.0, %v3139
        %3141 = vdwg.mxu0
        %3144 = vrot.lane.b32.xlu0 %v3132, 92
        %v3145 = vpop.permute.xlu0 %3144
        %3146 = vrot.lane.b32.xlu0 %v3138, 92
        %v3147 = vpop.permute.xlu0 %3146
        %v3150 = vmax.f32 %v3132, %v3145
        %v3151 = vmax.f32 %v3138, %v3147
        %3154 = vrot.lane.b32.xlu0 %v3134, 92
        %v3155 = vpop.permute.xlu0 %3154
        %3156 = vrot.lane.b32.xlu0 %v3140, 92
        %v3157 = vpop.permute.xlu0 %3156
        %vm3158 = vcmask 752640
        %v3159 = vsel %vm3158, %v3145, %v3155
        %v3160 = vsel %vm3158, %v3147, %v3157
        %v3163 = vmax.f32 %v3132, %v3159
        %v3164 = vmax.f32 %v3138, %v3160
        %3167 = vrot.lane.b32.xlu0 %v3163, 56
        %v3168 = vpop.permute.xlu0 %3167
        %3169 = vrot.lane.b32.xlu0 %v3164, 56
        %v3170 = vpop.permute.xlu0 %3169
        %v3173 = vmax.f32 %v3150, %v3168
        %v3174 = vmax.f32 %v3151, %v3170
        %v3175 = vld [vmem:[%s5] sm:$0xff]
        %v3176 = vld [vmem:[%s5 + $0x8] sm:$0xf]
        %3178 = vset.pattern.permute.xlu0 0
        %3179 = vperm.xlu0 %3178, %v3175
        %v3180 = vpop.permute.xlu0 %3179
        %3183 = vset.pattern.permute.xlu0 0
        %3184 = vperm.xlu0 %3183, %v3176
        %v3185 = vpop.permute.xlu0 %3184
        %v3187 = vadd.f32 %v3173, %v3180
        %v3188 = vadd.f32 %v3174, %v3185
        %v3189 = vmax.f32 %v3187, 0.0
        %v3190 = vmax.f32 %v3188, 0.0
        %v3191 = vld [vmem:[%s7] sm:$0x3]
        %v3192 = vld [vmem:[%s6] sm:$0xff]
        %v3193 = vld [vmem:[%s6 + $0x8] sm:$0xff]
        %v3194 = vld [vmem:[%s6 + $0x10] sm:$0xff]
        %v3195 = vld [vmem:[%s6 + $0x18] sm:$0xff]
        %v3196 = vld [vmem:[%s6 + $0x20] sm:$0xff]
        %v3197 = vld [vmem:[%s6 + $0x28] sm:$0xff]
        %v3198 = vld [vmem:[%s6 + $0x30] sm:$0xff]
        %v3199 = vld [vmem:[%s6 + $0x38] sm:$0xff]
        %v3200 = vld [vmem:[%s6 + $0x40] sm:$0xf]
        %v3201 = vld [vmem:[%s6 + $0x48] sm:$0xf]
        %vm3202 = vcmask 293888
        %v3204 = vsel %vm3202, %v3189, 0
        %vm3206 = vcmask 1043456
        %v3208 = vsel %vm3206, %v3200, 0
        %v3211 = vsel %vm3206, %v3201, 0
        %3213 = vmatprep.subr.mxu0 %v3193
        %3214 = vmatpush1.msra.mxu0 %v3192
        %3215 = vmatprep.subr.mxu0 %v3195
        %3216 = vmatpush1.msra.mxu0 %v3194
        %3217 = vmatprep.subr.mxu0 %v3197
        %3218 = vmatpush1.msra.mxu0 %v3196
        %3219 = vmatprep.subr.mxu0 %v3199
        %3220 = vmatpush1.msra.mxu0 %v3198
        %3221 = vmatprep.subr.mxu0 %v3211
        %3222 = vmatpush1.msra.mxu0 %v3208
        %3223 = vmatprep.subr.mxu0 0.0
        %3224 = vmatpush1.msra.mxu0 0.0
        %3225 = vmatprep.subr.mxu0 0.0
        %3226 = vmatpush1.msra.mxu0 0.0
        %3227 = vmatprep.subr.mxu0 0.0
        %3228 = vmatpush1.msra.mxu0 0.0
        %3229 = vmatprep.subr.mxu0 0.0
        %3230 = vmatpush1.msra.mxu0 0.0
        %3231 = vmatprep.subr.mxu0 0.0
        %3232 = vmatpush1.msra.mxu0 0.0
        %3233 = vmatprep.subr.mxu0 0.0
        %3234 = vmatpush1.msra.mxu0 0.0
        %3235 = vmatprep.subr.mxu0 0.0
        %3236 = vmatpush1.msra.mxu0 0.0
        %3237 = vmatprep.subr.mxu0 0.0
        %3238 = vmatpush1.msra.mxu0 0.0
        %3239 = vmatprep.subr.mxu0 0.0
        %3240 = vmatpush1.msra.mxu0 0.0
        %3241 = vmatprep.subr.mxu0 0.0
        %3242 = vmatpush1.msra.mxu0 0.0
        %3243 = vmatprep.subr.mxu0 0.0
        %3244 = vmatpush1.msra.mxu0 0.0
        %3245 = vmatprep.subr.mxu0 0.0
        %3246 = vmatpush1.msra.mxu0 0.0
        %3247 = vmatprep.subr.mxu0 0.0
        %3248 = vmatpush1.msra.mxu0 0.0
        %3249 = vmatprep.subr.mxu0 0.0
        %3250 = vmatpush1.msra.mxu0 0.0
        %3251 = vmatprep.subr.mxu0 0.0
        %3252 = vmatpush1.msra.mxu0 0.0
        %3253 = vmatprep.subr.mxu0 0.0
        %3254 = vmatpush1.msra.mxu0 0.0
        %3255 = vmatprep.subr.mxu0 0.0
        %3256 = vmatpush1.msra.mxu0 0.0
        %3257 = vmatprep.subr.mxu0 0.0
        %3258 = vmatpush1.msra.mxu0 0.0
        %3259 = vmatprep.subr.mxu0 0.0
        %3260 = vmatpush1.msra.mxu0 0.0
        %3261 = vmatprep.subr.mxu0 0.0
        %3262 = vmatpush1.msra.mxu0 0.0
        %3263 = vmatprep.subr.mxu0 0.0
        %3264 = vmatpush1.msra.mxu0 0.0
        %3265 = vmatprep.subr.mxu0 0.0
        %3266 = vmatpush1.msra.mxu0 0.0
        %3267 = vmatprep.subr.mxu0 0.0
        %3268 = vmatpush1.msra.mxu0 0.0
        %3269 = vmatprep.subr.mxu0 0.0
        %3270 = vmatpush1.msra.mxu0 0.0
        %3271 = vmatprep.subr.mxu0 0.0
        %3272 = vmatpush1.msra.mxu0 0.0
        %3273 = vmatprep.subr.mxu0 0.0
        %3274 = vmatpush1.msra.mxu0 0.0
        %3275 = vmatprep.subr.mxu0 0.0
        %3276 = vmatpush1.msra.mxu0 0.0
        %3277 = vmatprep.mubr.f32.mxu0 0.0
        %3278 = vmatmul.mubr.f32.gmra.mrb[0].mxu0 %v3204
        %v3279 = vpop.f32.mrb[0].mxu0
        %v3280 = vadd.f32 0.0, %v3279
        %v3281 = vpop.f32.mrb[0].mxu0
        %v3282 = vadd.f32 0.0, %v3281
        %3283 = vdwg.mxu0
        %v3286 = vcombine.low %v3280, %v3282
        %v3288 = vunpack.c.l.s4 1966171168
        %v3289 = vunpack.c.0.s8 %v3288
        %v3290 = vlaneseq
        %v3291 = vshrl.u32 %v3290, 7
        %v3292 = vsub.s32 %v3289, %v3291
        %v3293 = vrot.slane %v3286, %v3292
        %v3295 = vunpack.c.l.s4 1966171168
        %v3296 = vunpack.c.0.s8 %v3295
        %v3297 = vlaneseq
        %v3298 = vshrl.u32 %v3297, 7
        %v3299 = vsub.s32 %v3296, %v3298
        %v3300 = vrot.slane %v3293, %v3299
        %v3302 = vadd.f32 %v3191, %v3300
        %s3303 = scalar_lea.vmem %s6, 80
        %v3304 = vld [vmem:[%s3303] sm:$0xff]
        %v3305 = vld [vmem:[%s3303 + $0x8] sm:$0xff]
        %v3306 = vld [vmem:[%s3303 + $0x10] sm:$0xff]
        %v3307 = vld [vmem:[%s3303 + $0x18] sm:$0xff]
        %v3308 = vld [vmem:[%s3303 + $0x20] sm:$0xff]
        %v3309 = vld [vmem:[%s3303 + $0x28] sm:$0xff]
        %v3310 = vld [vmem:[%s3303 + $0x30] sm:$0xff]
        %v3311 = vld [vmem:[%s3303 + $0x38] sm:$0xff]
        %v3312 = vld [vmem:[%s3303 + $0x40] sm:$0xf]
        %v3313 = vld [vmem:[%s3303 + $0x48] sm:$0xf]
        %v3314 = vrot.slane %v3189, 1
        %v3315 = vsel %vm3202, %v3314, 0
        %v3318 = vsel %vm3206, %v3312, 0
        %v3321 = vsel %vm3206, %v3313, 0
        %3323 = vmatprep.subr.mxu0 %v3305
        %3324 = vmatpush1.msra.mxu0 %v3304
        %3325 = vmatprep.subr.mxu0 %v3307
        %3326 = vmatpush1.msra.mxu0 %v3306
        %3327 = vmatprep.subr.mxu0 %v3309
        %3328 = vmatpush1.msra.mxu0 %v3308
        %3329 = vmatprep.subr.mxu0 %v3311
        %3330 = vmatpush1.msra.mxu0 %v3310
        %3331 = vmatprep.subr.mxu0 %v3321
        %3332 = vmatpush1.msra.mxu0 %v3318
        %3333 = vmatprep.subr.mxu0 0.0
        %3334 = vmatpush1.msra.mxu0 0.0
        %3335 = vmatprep.subr.mxu0 0.0
        %3336 = vmatpush1.msra.mxu0 0.0
        %3337 = vmatprep.subr.mxu0 0.0
        %3338 = vmatpush1.msra.mxu0 0.0
        %3339 = vmatprep.subr.mxu0 0.0
        %3340 = vmatpush1.msra.mxu0 0.0
        %3341 = vmatprep.subr.mxu0 0.0
        %3342 = vmatpush1.msra.mxu0 0.0
        %3343 = vmatprep.subr.mxu0 0.0
        %3344 = vmatpush1.msra.mxu0 0.0
        %3345 = vmatprep.subr.mxu0 0.0
        %3346 = vmatpush1.msra.mxu0 0.0
        %3347 = vmatprep.subr.mxu0 0.0
        %3348 = vmatpush1.msra.mxu0 0.0
        %3349 = vmatprep.subr.mxu0 0.0
        %3350 = vmatpush1.msra.mxu0 0.0
        %3351 = vmatprep.subr.mxu0 0.0
        %3352 = vmatpush1.msra.mxu0 0.0
        %3353 = vmatprep.subr.mxu0 0.0
        %3354 = vmatpush1.msra.mxu0 0.0
        %3355 = vmatprep.subr.mxu0 0.0
        %3356 = vmatpush1.msra.mxu0 0.0
        %3357 = vmatprep.subr.mxu0 0.0
        %3358 = vmatpush1.msra.mxu0 0.0
        %3359 = vmatprep.subr.mxu0 0.0
        %3360 = vmatpush1.msra.mxu0 0.0
        %3361 = vmatprep.subr.mxu0 0.0
        %3362 = vmatpush1.msra.mxu0 0.0
        %3363 = vmatprep.subr.mxu0 0.0
        %3364 = vmatpush1.msra.mxu0 0.0
        %3365 = vmatprep.subr.mxu0 0.0
        %3366 = vmatpush1.msra.mxu0 0.0
        %3367 = vmatprep.subr.mxu0 0.0
        %3368 = vmatpush1.msra.mxu0 0.0
        %3369 = vmatprep.subr.mxu0 0.0
        %3370 = vmatpush1.msra.mxu0 0.0
        %3371 = vmatprep.subr.mxu0 0.0
        %3372 = vmatpush1.msra.mxu0 0.0
        %3373 = vmatprep.subr.mxu0 0.0
        %3374 = vmatpush1.msra.mxu0 0.0
        %3375 = vmatprep.subr.mxu0 0.0
        %3376 = vmatpush1.msra.mxu0 0.0
        %3377 = vmatprep.subr.mxu0 0.0
        %3378 = vmatpush1.msra.mxu0 0.0
        %3379 = vmatprep.subr.mxu0 0.0
        %3380 = vmatpush1.msra.mxu0 0.0
        %3381 = vmatprep.subr.mxu0 0.0
        %3382 = vmatpush1.msra.mxu0 0.0
        %3383 = vmatprep.subr.mxu0 0.0
        %3384 = vmatpush1.msra.mxu0 0.0
        %3385 = vmatprep.subr.mxu0 0.0
        %3386 = vmatpush1.msra.mxu0 0.0
        %3387 = vmatprep.mubr.f32.mxu0 0.0
        %3388 = vmatmul.mubr.f32.gmra.mrb[0].mxu0 %v3315
        %v3389 = vpop.f32.mrb[0].mxu0
        %v3390 = vadd.f32 0.0, %v3389
        %v3391 = vpop.f32.mrb[0].mxu0
        %v3392 = vadd.f32 0.0, %v3391
        %3393 = vdwg.mxu0
        %v3396 = vcombine.low %v3390, %v3392
        %v3398 = vunpack.c.l.s4 1966171168
        %v3399 = vunpack.c.0.s8 %v3398
        %v3400 = vlaneseq
        %v3401 = vshrl.u32 %v3400, 7
        %v3402 = vsub.s32 %v3399, %v3401
        %v3403 = vrot.slane %v3396, %v3402
        %v3405 = vunpack.c.l.s4 1966171168
        %v3406 = vunpack.c.0.s8 %v3405
        %v3407 = vlaneseq
        %v3408 = vshrl.u32 %v3407, 7
        %v3409 = vsub.s32 %v3406, %v3408
        %v3410 = vrot.slane %v3403, %v3409
        %v3412 = vadd.f32 %v3302, %v3410
        %s3413 = scalar_lea.vmem %s6, 160
        %v3414 = vld [vmem:[%s3413] sm:$0xff]
        %v3415 = vld [vmem:[%s3413 + $0x8] sm:$0xff]
        %v3416 = vld [vmem:[%s3413 + $0x10] sm:$0xff]
        %v3417 = vld [vmem:[%s3413 + $0x18] sm:$0xff]
        %v3418 = vld [vmem:[%s3413 + $0x20] sm:$0xff]
        %v3419 = vld [vmem:[%s3413 + $0x28] sm:$0xff]
        %v3420 = vld [vmem:[%s3413 + $0x30] sm:$0xff]
        %v3421 = vld [vmem:[%s3413 + $0x38] sm:$0xff]
        %v3422 = vld [vmem:[%s3413 + $0x40] sm:$0xf]
        %v3423 = vld [vmem:[%s3413 + $0x48] sm:$0xf]
        %v3424 = vrot.slane %v3189, 2
        %v3425 = vsel %vm3202, %v3424, 0
        %v3428 = vsel %vm3206, %v3422, 0
        %v3431 = vsel %vm3206, %v3423, 0
        %3433 = vmatprep.subr.mxu0 %v3415
        %3434 = vmatpush1.msra.mxu0 %v3414
        %3435 = vmatprep.subr.mxu0 %v3417
        %3436 = vmatpush1.msra.mxu0 %v3416
        %3437 = vmatprep.subr.mxu0 %v3419
        %3438 = vmatpush1.msra.mxu0 %v3418
        %3439 = vmatprep.subr.mxu0 %v3421
        %3440 = vmatpush1.msra.mxu0 %v3420
        %3441 = vmatprep.subr.mxu0 %v3431
        %3442 = vmatpush1.msra.mxu0 %v3428
        %3443 = vmatprep.subr.mxu0 0.0
        %3444 = vmatpush1.msra.mxu0 0.0
        %3445 = vmatprep.subr.mxu0 0.0
        %3446 = vmatpush1.msra.mxu0 0.0
        %3447 = vmatprep.subr.mxu0 0.0
        %3448 = vmatpush1.msra.mxu0 0.0
        %3449 = vmatprep.subr.mxu0 0.0
        %3450 = vmatpush1.msra.mxu0 0.0
        %3451 = vmatprep.subr.mxu0 0.0
        %3452 = vmatpush1.msra.mxu0 0.0
        %3453 = vmatprep.subr.mxu0 0.0
        %3454 = vmatpush1.msra.mxu0 0.0
        %3455 = vmatprep.subr.mxu0 0.0
        %3456 = vmatpush1.msra.mxu0 0.0
        %3457 = vmatprep.subr.mxu0 0.0
        %3458 = vmatpush1.msra.mxu0 0.0
        %3459 = vmatprep.subr.mxu0 0.0
        %3460 = vmatpush1.msra.mxu0 0.0
        %3461 = vmatprep.subr.mxu0 0.0
        %3462 = vmatpush1.msra.mxu0 0.0
        %3463 = vmatprep.subr.mxu0 0.0
        %3464 = vmatpush1.msra.mxu0 0.0
        %3465 = vmatprep.subr.mxu0 0.0
        %3466 = vmatpush1.msra.mxu0 0.0
        %3467 = vmatprep.subr.mxu0 0.0
        %3468 = vmatpush1.msra.mxu0 0.0
        %3469 = vmatprep.subr.mxu0 0.0
        %3470 = vmatpush1.msra.mxu0 0.0
        %3471 = vmatprep.subr.mxu0 0.0
        %3472 = vmatpush1.msra.mxu0 0.0
        %3473 = vmatprep.subr.mxu0 0.0
        %3474 = vmatpush1.msra.mxu0 0.0
        %3475 = vmatprep.subr.mxu0 0.0
        %3476 = vmatpush1.msra.mxu0 0.0
        %3477 = vmatprep.subr.mxu0 0.0
        %3478 = vmatpush1.msra.mxu0 0.0
        %3479 = vmatprep.subr.mxu0 0.0
        %3480 = vmatpush1.msra.mxu0 0.0
        %3481 = vmatprep.subr.mxu0 0.0
        %3482 = vmatpush1.msra.mxu0 0.0
        %3483 = vmatprep.subr.mxu0 0.0
        %3484 = vmatpush1.msra.mxu0 0.0
        %3485 = vmatprep.subr.mxu0 0.0
        %3486 = vmatpush1.msra.mxu0 0.0
        %3487 = vmatprep.subr.mxu0 0.0
        %3488 = vmatpush1.msra.mxu0 0.0
        %3489 = vmatprep.subr.mxu0 0.0
        %3490 = vmatpush1.msra.mxu0 0.0
        %3491 = vmatprep.subr.mxu0 0.0
        %3492 = vmatpush1.msra.mxu0 0.0
        %3493 = vmatprep.subr.mxu0 0.0
        %3494 = vmatpush1.msra.mxu0 0.0
        %3495 = vmatprep.subr.mxu0 0.0
        %3496 = vmatpush1.msra.mxu0 0.0
        %3497 = vmatprep.mubr.f32.mxu0 0.0
        %3498 = vmatmul.mubr.f32.gmra.mrb[0].mxu0 %v3425
        %v3499 = vpop.f32.mrb[0].mxu0
        %v3500 = vadd.f32 0.0, %v3499
        %v3501 = vpop.f32.mrb[0].mxu0
        %v3502 = vadd.f32 0.0, %v3501
        %3503 = vdwg.mxu0
        %v3506 = vcombine.low %v3500, %v3502
        %v3508 = vunpack.c.l.s4 1966171168
        %v3509 = vunpack.c.0.s8 %v3508
        %v3510 = vlaneseq
        %v3511 = vshrl.u32 %v3510, 7
        %v3512 = vsub.s32 %v3509, %v3511
        %v3513 = vrot.slane %v3506, %v3512
        %v3515 = vunpack.c.l.s4 1966171168
        %v3516 = vunpack.c.0.s8 %v3515
        %v3517 = vlaneseq
        %v3518 = vshrl.u32 %v3517, 7
        %v3519 = vsub.s32 %v3516, %v3518
        %v3520 = vrot.slane %v3513, %v3519
        %v3522 = vadd.f32 %v3412, %v3520
        %s3523 = scalar_lea.vmem %s6, 240
        %v3524 = vld [vmem:[%s3523] sm:$0xff]
        %v3525 = vld [vmem:[%s3523 + $0x8] sm:$0xff]
        %v3526 = vld [vmem:[%s3523 + $0x10] sm:$0xff]
        %v3527 = vld [vmem:[%s3523 + $0x18] sm:$0xff]
        %v3528 = vld [vmem:[%s3523 + $0x20] sm:$0xff]
        %v3529 = vld [vmem:[%s3523 + $0x28] sm:$0xff]
        %v3530 = vld [vmem:[%s3523 + $0x30] sm:$0xff]
        %v3531 = vld [vmem:[%s3523 + $0x38] sm:$0xff]
        %v3532 = vld [vmem:[%s3523 + $0x40] sm:$0xf]
        %v3533 = vld [vmem:[%s3523 + $0x48] sm:$0xf]
        %v3534 = vrot.slane %v3189, 3
        %v3535 = vsel %vm3202, %v3534, 0
        %v3538 = vsel %vm3206, %v3532, 0
        %v3541 = vsel %vm3206, %v3533, 0
        %3543 = vmatprep.subr.mxu0 %v3525
        %3544 = vmatpush1.msra.mxu0 %v3524
        %3545 = vmatprep.subr.mxu0 %v3527
        %3546 = vmatpush1.msra.mxu0 %v3526
        %3547 = vmatprep.subr.mxu0 %v3529
        %3548 = vmatpush1.msra.mxu0 %v3528
        %3549 = vmatprep.subr.mxu0 %v3531
        %3550 = vmatpush1.msra.mxu0 %v3530
        %3551 = vmatprep.subr.mxu0 %v3541
        %3552 = vmatpush1.msra.mxu0 %v3538
        %3553 = vmatprep.subr.mxu0 0.0
        %3554 = vmatpush1.msra.mxu0 0.0
        %3555 = vmatprep.subr.mxu0 0.0
        %3556 = vmatpush1.msra.mxu0 0.0
        %3557 = vmatprep.subr.mxu0 0.0
        %3558 = vmatpush1.msra.mxu0 0.0
        %3559 = vmatprep.subr.mxu0 0.0
        %3560 = vmatpush1.msra.mxu0 0.0
        %3561 = vmatprep.subr.mxu0 0.0
        %3562 = vmatpush1.msra.mxu0 0.0
        %3563 = vmatprep.subr.mxu0 0.0
        %3564 = vmatpush1.msra.mxu0 0.0
        %3565 = vmatprep.subr.mxu0 0.0
        %3566 = vmatpush1.msra.mxu0 0.0
        %3567 = vmatprep.subr.mxu0 0.0
        %3568 = vmatpush1.msra.mxu0 0.0
        %3569 = vmatprep.subr.mxu0 0.0
        %3570 = vmatpush1.msra.mxu0 0.0
        %3571 = vmatprep.subr.mxu0 0.0
        %3572 = vmatpush1.msra.mxu0 0.0
        %3573 = vmatprep.subr.mxu0 0.0
        %3574 = vmatpush1.msra.mxu0 0.0
        %3575 = vmatprep.subr.mxu0 0.0
        %3576 = vmatpush1.msra.mxu0 0.0
        %3577 = vmatprep.subr.mxu0 0.0
        %3578 = vmatpush1.msra.mxu0 0.0
        %3579 = vmatprep.subr.mxu0 0.0
        %3580 = vmatpush1.msra.mxu0 0.0
        %3581 = vmatprep.subr.mxu0 0.0
        %3582 = vmatpush1.msra.mxu0 0.0
        %3583 = vmatprep.subr.mxu0 0.0
        %3584 = vmatpush1.msra.mxu0 0.0
        %3585 = vmatprep.subr.mxu0 0.0
        %3586 = vmatpush1.msra.mxu0 0.0
        %3587 = vmatprep.subr.mxu0 0.0
        %3588 = vmatpush1.msra.mxu0 0.0
        %3589 = vmatprep.subr.mxu0 0.0
        %3590 = vmatpush1.msra.mxu0 0.0
        %3591 = vmatprep.subr.mxu0 0.0
        %3592 = vmatpush1.msra.mxu0 0.0
        %3593 = vmatprep.subr.mxu0 0.0
        %3594 = vmatpush1.msra.mxu0 0.0
        %3595 = vmatprep.subr.mxu0 0.0
        %3596 = vmatpush1.msra.mxu0 0.0
        %3597 = vmatprep.subr.mxu0 0.0
        %3598 = vmatpush1.msra.mxu0 0.0
        %3599 = vmatprep.subr.mxu0 0.0
        %3600 = vmatpush1.msra.mxu0 0.0
        %3601 = vmatprep.subr.mxu0 0.0
        %3602 = vmatpush1.msra.mxu0 0.0
        %3603 = vmatprep.subr.mxu0 0.0
        %3604 = vmatpush1.msra.mxu0 0.0
        %3605 = vmatprep.subr.mxu0 0.0
        %3606 = vmatpush1.msra.mxu0 0.0
        %3607 = vmatprep.mubr.f32.mxu0 0.0
        %3608 = vmatmul.mubr.f32.gmra.mrb[0].mxu0 %v3535
        %v3609 = vpop.f32.mrb[0].mxu0
        %v3610 = vadd.f32 0.0, %v3609
        %v3611 = vpop.f32.mrb[0].mxu0
        %v3612 = vadd.f32 0.0, %v3611
        %3613 = vdwg.mxu0
        %v3616 = vcombine.low %v3610, %v3612
        %v3618 = vunpack.c.l.s4 1966171168
        %v3619 = vunpack.c.0.s8 %v3618
        %v3620 = vlaneseq
        %v3621 = vshrl.u32 %v3620, 7
        %v3622 = vsub.s32 %v3619, %v3621
        %v3623 = vrot.slane %v3616, %v3622
        %v3625 = vunpack.c.l.s4 1966171168
        %v3626 = vunpack.c.0.s8 %v3625
        %v3627 = vlaneseq
        %v3628 = vshrl.u32 %v3627, 7
        %v3629 = vsub.s32 %v3626, %v3628
        %v3630 = vrot.slane %v3623, %v3629
        %v3632 = vadd.f32 %v3522, %v3630
        %s3633 = scalar_lea.vmem %s6, 320
        %v3634 = vld [vmem:[%s3633] sm:$0xff]
        %v3635 = vld [vmem:[%s3633 + $0x8] sm:$0xff]
        %v3636 = vld [vmem:[%s3633 + $0x10] sm:$0xff]
        %v3637 = vld [vmem:[%s3633 + $0x18] sm:$0xff]
        %v3638 = vld [vmem:[%s3633 + $0x20] sm:$0xff]
        %v3639 = vld [vmem:[%s3633 + $0x28] sm:$0xff]
        %v3640 = vld [vmem:[%s3633 + $0x30] sm:$0xff]
        %v3641 = vld [vmem:[%s3633 + $0x38] sm:$0xff]
        %v3642 = vld [vmem:[%s3633 + $0x40] sm:$0xf]
        %v3643 = vld [vmem:[%s3633 + $0x48] sm:$0xf]
        %v3644 = vrot.slane %v3189, 4
        %v3645 = vsel %vm3202, %v3644, 0
        %v3648 = vsel %vm3206, %v3642, 0
        %v3651 = vsel %vm3206, %v3643, 0
        %3653 = vmatprep.subr.mxu0 %v3635
        %3654 = vmatpush1.msra.mxu0 %v3634
        %3655 = vmatprep.subr.mxu0 %v3637
        %3656 = vmatpush1.msra.mxu0 %v3636
        %3657 = vmatprep.subr.mxu0 %v3639
        %3658 = vmatpush1.msra.mxu0 %v3638
        %3659 = vmatprep.subr.mxu0 %v3641
        %3660 = vmatpush1.msra.mxu0 %v3640
        %3661 = vmatprep.subr.mxu0 %v3651
        %3662 = vmatpush1.msra.mxu0 %v3648
        %3663 = vmatprep.subr.mxu0 0.0
        %3664 = vmatpush1.msra.mxu0 0.0
        %3665 = vmatprep.subr.mxu0 0.0
        %3666 = vmatpush1.msra.mxu0 0.0
        %3667 = vmatprep.subr.mxu0 0.0
        %3668 = vmatpush1.msra.mxu0 0.0
        %3669 = vmatprep.subr.mxu0 0.0
        %3670 = vmatpush1.msra.mxu0 0.0
        %3671 = vmatprep.subr.mxu0 0.0
        %3672 = vmatpush1.msra.mxu0 0.0
        %3673 = vmatprep.subr.mxu0 0.0
        %3674 = vmatpush1.msra.mxu0 0.0
        %3675 = vmatprep.subr.mxu0 0.0
        %3676 = vmatpush1.msra.mxu0 0.0
        %3677 = vmatprep.subr.mxu0 0.0
        %3678 = vmatpush1.msra.mxu0 0.0
        %3679 = vmatprep.subr.mxu0 0.0
        %3680 = vmatpush1.msra.mxu0 0.0
        %3681 = vmatprep.subr.mxu0 0.0
        %3682 = vmatpush1.msra.mxu0 0.0
        %3683 = vmatprep.subr.mxu0 0.0
        %3684 = vmatpush1.msra.mxu0 0.0
        %3685 = vmatprep.subr.mxu0 0.0
        %3686 = vmatpush1.msra.mxu0 0.0
        %3687 = vmatprep.subr.mxu0 0.0
        %3688 = vmatpush1.msra.mxu0 0.0
        %3689 = vmatprep.subr.mxu0 0.0
        %3690 = vmatpush1.msra.mxu0 0.0
        %3691 = vmatprep.subr.mxu0 0.0
        %3692 = vmatpush1.msra.mxu0 0.0
        %3693 = vmatprep.subr.mxu0 0.0
        %3694 = vmatpush1.msra.mxu0 0.0
        %3695 = vmatprep.subr.mxu0 0.0
        %3696 = vmatpush1.msra.mxu0 0.0
        %3697 = vmatprep.subr.mxu0 0.0
        %3698 = vmatpush1.msra.mxu0 0.0
        %3699 = vmatprep.subr.mxu0 0.0
        %3700 = vmatpush1.msra.mxu0 0.0
        %3701 = vmatprep.subr.mxu0 0.0
        %3702 = vmatpush1.msra.mxu0 0.0
        %3703 = vmatprep.subr.mxu0 0.0
        %3704 = vmatpush1.msra.mxu0 0.0
        %3705 = vmatprep.subr.mxu0 0.0
        %3706 = vmatpush1.msra.mxu0 0.0
        %3707 = vmatprep.subr.mxu0 0.0
        %3708 = vmatpush1.msra.mxu0 0.0
        %3709 = vmatprep.subr.mxu0 0.0
        %3710 = vmatpush1.msra.mxu0 0.0
        %3711 = vmatprep.subr.mxu0 0.0
        %3712 = vmatpush1.msra.mxu0 0.0
        %3713 = vmatprep.subr.mxu0 0.0
        %3714 = vmatpush1.msra.mxu0 0.0
        %3715 = vmatprep.subr.mxu0 0.0
        %3716 = vmatpush1.msra.mxu0 0.0
        %3717 = vmatprep.mubr.f32.mxu0 0.0
        %3718 = vmatmul.mubr.f32.gmra.mrb[0].mxu0 %v3645
        %v3719 = vpop.f32.mrb[0].mxu0
        %v3720 = vadd.f32 0.0, %v3719
        %v3721 = vpop.f32.mrb[0].mxu0
        %v3722 = vadd.f32 0.0, %v3721
        %3723 = vdwg.mxu0
        %v3726 = vcombine.low %v3720, %v3722
        %v3728 = vunpack.c.l.s4 1966171168
        %v3729 = vunpack.c.0.s8 %v3728
        %v3730 = vlaneseq
        %v3731 = vshrl.u32 %v3730, 7
        %v3732 = vsub.s32 %v3729, %v3731
        %v3733 = vrot.slane %v3726, %v3732
        %v3735 = vunpack.c.l.s4 1966171168
        %v3736 = vunpack.c.0.s8 %v3735
        %v3737 = vlaneseq
        %v3738 = vshrl.u32 %v3737, 7
        %v3739 = vsub.s32 %v3736, %v3738
        %v3740 = vrot.slane %v3733, %v3739
        %v3742 = vadd.f32 %v3632, %v3740
        %s3743 = scalar_lea.vmem %s6, 400
        %v3744 = vld [vmem:[%s3743] sm:$0xff]
        %v3745 = vld [vmem:[%s3743 + $0x8] sm:$0xff]
        %v3746 = vld [vmem:[%s3743 + $0x10] sm:$0xff]
        %v3747 = vld [vmem:[%s3743 + $0x18] sm:$0xff]
        %v3748 = vld [vmem:[%s3743 + $0x20] sm:$0xff]
        %v3749 = vld [vmem:[%s3743 + $0x28] sm:$0xff]
        %v3750 = vld [vmem:[%s3743 + $0x30] sm:$0xff]
        %v3751 = vld [vmem:[%s3743 + $0x38] sm:$0xff]
        %v3752 = vld [vmem:[%s3743 + $0x40] sm:$0xf]
        %v3753 = vld [vmem:[%s3743 + $0x48] sm:$0xf]
        %v3754 = vrot.slane %v3189, 5
        %v3755 = vsel %vm3202, %v3754, 0
        %v3758 = vsel %vm3206, %v3752, 0
        %v3761 = vsel %vm3206, %v3753, 0
        %3763 = vmatprep.subr.mxu0 %v3745
        %3764 = vmatpush1.msra.mxu0 %v3744
        %3765 = vmatprep.subr.mxu0 %v3747
        %3766 = vmatpush1.msra.mxu0 %v3746
        %3767 = vmatprep.subr.mxu0 %v3749
        %3768 = vmatpush1.msra.mxu0 %v3748
        %3769 = vmatprep.subr.mxu0 %v3751
        %3770 = vmatpush1.msra.mxu0 %v3750
        %3771 = vmatprep.subr.mxu0 %v3761
        %3772 = vmatpush1.msra.mxu0 %v3758
        %3773 = vmatprep.subr.mxu0 0.0
        %3774 = vmatpush1.msra.mxu0 0.0
        %3775 = vmatprep.subr.mxu0 0.0
        %3776 = vmatpush1.msra.mxu0 0.0
        %3777 = vmatprep.subr.mxu0 0.0
        %3778 = vmatpush1.msra.mxu0 0.0
        %3779 = vmatprep.subr.mxu0 0.0
        %3780 = vmatpush1.msra.mxu0 0.0
        %3781 = vmatprep.subr.mxu0 0.0
        %3782 = vmatpush1.msra.mxu0 0.0
        %3783 = vmatprep.subr.mxu0 0.0
        %3784 = vmatpush1.msra.mxu0 0.0
        %3785 = vmatprep.subr.mxu0 0.0
        %3786 = vmatpush1.msra.mxu0 0.0
        %3787 = vmatprep.subr.mxu0 0.0
        %3788 = vmatpush1.msra.mxu0 0.0
        %3789 = vmatprep.subr.mxu0 0.0
        %3790 = vmatpush1.msra.mxu0 0.0
        %3791 = vmatprep.subr.mxu0 0.0
        %3792 = vmatpush1.msra.mxu0 0.0
        %3793 = vmatprep.subr.mxu0 0.0
        %3794 = vmatpush1.msra.mxu0 0.0
        %3795 = vmatprep.subr.mxu0 0.0
        %3796 = vmatpush1.msra.mxu0 0.0
        %3797 = vmatprep.subr.mxu0 0.0
        %3798 = vmatpush1.msra.mxu0 0.0
        %3799 = vmatprep.subr.mxu0 0.0
        %3800 = vmatpush1.msra.mxu0 0.0
        %3801 = vmatprep.subr.mxu0 0.0
        %3802 = vmatpush1.msra.mxu0 0.0
        %3803 = vmatprep.subr.mxu0 0.0
        %3804 = vmatpush1.msra.mxu0 0.0
        %3805 = vmatprep.subr.mxu0 0.0
        %3806 = vmatpush1.msra.mxu0 0.0
        %3807 = vmatprep.subr.mxu0 0.0
        %3808 = vmatpush1.msra.mxu0 0.0
        %3809 = vmatprep.subr.mxu0 0.0
        %3810 = vmatpush1.msra.mxu0 0.0
        %3811 = vmatprep.subr.mxu0 0.0
        %3812 = vmatpush1.msra.mxu0 0.0
        %3813 = vmatprep.subr.mxu0 0.0
        %3814 = vmatpush1.msra.mxu0 0.0
        %3815 = vmatprep.subr.mxu0 0.0
        %3816 = vmatpush1.msra.mxu0 0.0
        %3817 = vmatprep.subr.mxu0 0.0
        %3818 = vmatpush1.msra.mxu0 0.0
        %3819 = vmatprep.subr.mxu0 0.0
        %3820 = vmatpush1.msra.mxu0 0.0
        %3821 = vmatprep.subr.mxu0 0.0
        %3822 = vmatpush1.msra.mxu0 0.0
        %3823 = vmatprep.subr.mxu0 0.0
        %3824 = vmatpush1.msra.mxu0 0.0
        %3825 = vmatprep.subr.mxu0 0.0
        %3826 = vmatpush1.msra.mxu0 0.0
        %3827 = vmatprep.mubr.f32.mxu0 0.0
        %3828 = vmatmul.mubr.f32.gmra.mrb[0].mxu0 %v3755
        %v3829 = vpop.f32.mrb[0].mxu0
        %v3830 = vadd.f32 0.0, %v3829
        %v3831 = vpop.f32.mrb[0].mxu0
        %v3832 = vadd.f32 0.0, %v3831
        %3833 = vdwg.mxu0
        %v3836 = vcombine.low %v3830, %v3832
        %v3838 = vunpack.c.l.s4 1966171168
        %v3839 = vunpack.c.0.s8 %v3838
        %v3840 = vlaneseq
        %v3841 = vshrl.u32 %v3840, 7
        %v3842 = vsub.s32 %v3839, %v3841
        %v3843 = vrot.slane %v3836, %v3842
        %v3845 = vunpack.c.l.s4 1966171168
        %v3846 = vunpack.c.0.s8 %v3845
        %v3847 = vlaneseq
        %v3848 = vshrl.u32 %v3847, 7
        %v3849 = vsub.s32 %v3846, %v3848
        %v3850 = vrot.slane %v3843, %v3849
        %v3852 = vadd.f32 %v3742, %v3850
        %s3853 = scalar_lea.vmem %s6, 480
        %v3854 = vld [vmem:[%s3853] sm:$0xff]
        %v3855 = vld [vmem:[%s3853 + $0x8] sm:$0xff]
        %v3856 = vld [vmem:[%s3853 + $0x10] sm:$0xff]
        %v3857 = vld [vmem:[%s3853 + $0x18] sm:$0xff]
        %v3858 = vld [vmem:[%s3853 + $0x20] sm:$0xff]
        %v3859 = vld [vmem:[%s3853 + $0x28] sm:$0xff]
        %v3860 = vld [vmem:[%s3853 + $0x30] sm:$0xff]
        %v3861 = vld [vmem:[%s3853 + $0x38] sm:$0xff]
        %v3862 = vld [vmem:[%s3853 + $0x40] sm:$0xf]
        %v3863 = vld [vmem:[%s3853 + $0x48] sm:$0xf]
        %v3864 = vrot.slane %v3189, 6
        %v3865 = vsel %vm3202, %v3864, 0
        %v3868 = vsel %vm3206, %v3862, 0
        %v3871 = vsel %vm3206, %v3863, 0
        %3873 = vmatprep.subr.mxu0 %v3855
        %3874 = vmatpush1.msra.mxu0 %v3854
        %3875 = vmatprep.subr.mxu0 %v3857
        %3876 = vmatpush1.msra.mxu0 %v3856
        %3877 = vmatprep.subr.mxu0 %v3859
        %3878 = vmatpush1.msra.mxu0 %v3858
        %3879 = vmatprep.subr.mxu0 %v3861
        %3880 = vmatpush1.msra.mxu0 %v3860
        %3881 = vmatprep.subr.mxu0 %v3871
        %3882 = vmatpush1.msra.mxu0 %v3868
        %3883 = vmatprep.subr.mxu0 0.0
        %3884 = vmatpush1.msra.mxu0 0.0
        %3885 = vmatprep.subr.mxu0 0.0
        %3886 = vmatpush1.msra.mxu0 0.0
        %3887 = vmatprep.subr.mxu0 0.0
        %3888 = vmatpush1.msra.mxu0 0.0
        %3889 = vmatprep.subr.mxu0 0.0
        %3890 = vmatpush1.msra.mxu0 0.0
        %3891 = vmatprep.subr.mxu0 0.0
        %3892 = vmatpush1.msra.mxu0 0.0
        %3893 = vmatprep.subr.mxu0 0.0
        %3894 = vmatpush1.msra.mxu0 0.0
        %3895 = vmatprep.subr.mxu0 0.0
        %3896 = vmatpush1.msra.mxu0 0.0
        %3897 = vmatprep.subr.mxu0 0.0
        %3898 = vmatpush1.msra.mxu0 0.0
        %3899 = vmatprep.subr.mxu0 0.0
        %3900 = vmatpush1.msra.mxu0 0.0
        %3901 = vmatprep.subr.mxu0 0.0
        %3902 = vmatpush1.msra.mxu0 0.0
        %3903 = vmatprep.subr.mxu0 0.0
        %3904 = vmatpush1.msra.mxu0 0.0
        %3905 = vmatprep.subr.mxu0 0.0
        %3906 = vmatpush1.msra.mxu0 0.0
        %3907 = vmatprep.subr.mxu0 0.0
        %3908 = vmatpush1.msra.mxu0 0.0
        %3909 = vmatprep.subr.mxu0 0.0
        %3910 = vmatpush1.msra.mxu0 0.0
        %3911 = vmatprep.subr.mxu0 0.0
        %3912 = vmatpush1.msra.mxu0 0.0
        %3913 = vmatprep.subr.mxu0 0.0
        %3914 = vmatpush1.msra.mxu0 0.0
        %3915 = vmatprep.subr.mxu0 0.0
        %3916 = vmatpush1.msra.mxu0 0.0
        %3917 = vmatprep.subr.mxu0 0.0
        %3918 = vmatpush1.msra.mxu0 0.0
        %3919 = vmatprep.subr.mxu0 0.0
        %3920 = vmatpush1.msra.mxu0 0.0
        %3921 = vmatprep.subr.mxu0 0.0
        %3922 = vmatpush1.msra.mxu0 0.0
        %3923 = vmatprep.subr.mxu0 0.0
        %3924 = vmatpush1.msra.mxu0 0.0
        %3925 = vmatprep.subr.mxu0 0.0
        %3926 = vmatpush1.msra.mxu0 0.0
        %3927 = vmatprep.subr.mxu0 0.0
        %3928 = vmatpush1.msra.mxu0 0.0
        %3929 = vmatprep.subr.mxu0 0.0
        %3930 = vmatpush1.msra.mxu0 0.0
        %3931 = vmatprep.subr.mxu0 0.0
        %3932 = vmatpush1.msra.mxu0 0.0
        %3933 = vmatprep.subr.mxu0 0.0
        %3934 = vmatpush1.msra.mxu0 0.0
        %3935 = vmatprep.subr.mxu0 0.0
        %3936 = vmatpush1.msra.mxu0 0.0
        %3937 = vmatprep.mubr.f32.mxu0 0.0
        %3938 = vmatmul.mubr.f32.gmra.mrb[0].mxu0 %v3865
        %v3939 = vpop.f32.mrb[0].mxu0
        %v3940 = vadd.f32 0.0, %v3939
        %v3941 = vpop.f32.mrb[0].mxu0
        %v3942 = vadd.f32 0.0, %v3941
        %3943 = vdwg.mxu0
        %v3946 = vcombine.low %v3940, %v3942
        %v3948 = vunpack.c.l.s4 1966171168
        %v3949 = vunpack.c.0.s8 %v3948
        %v3950 = vlaneseq
        %v3951 = vshrl.u32 %v3950, 7
        %v3952 = vsub.s32 %v3949, %v3951
        %v3953 = vrot.slane %v3946, %v3952
        %v3955 = vunpack.c.l.s4 1966171168
        %v3956 = vunpack.c.0.s8 %v3955
        %v3957 = vlaneseq
        %v3958 = vshrl.u32 %v3957, 7
        %v3959 = vsub.s32 %v3956, %v3958
        %v3960 = vrot.slane %v3953, %v3959
        %v3962 = vadd.f32 %v3852, %v3960
        %s3963 = scalar_lea.vmem %s6, 560
        %v3964 = vld [vmem:[%s3963] sm:$0xff]
        %v3965 = vld [vmem:[%s3963 + $0x8] sm:$0xff]
        %v3966 = vld [vmem:[%s3963 + $0x10] sm:$0xff]
        %v3967 = vld [vmem:[%s3963 + $0x18] sm:$0xff]
        %v3968 = vld [vmem:[%s3963 + $0x20] sm:$0xff]
        %v3969 = vld [vmem:[%s3963 + $0x28] sm:$0xff]
        %v3970 = vld [vmem:[%s3963 + $0x30] sm:$0xff]
        %v3971 = vld [vmem:[%s3963 + $0x38] sm:$0xff]
        %v3972 = vld [vmem:[%s3963 + $0x40] sm:$0xf]
        %v3973 = vld [vmem:[%s3963 + $0x48] sm:$0xf]
        %v3974 = vrot.slane %v3189, 7
        %v3975 = vsel %vm3202, %v3974, 0
        %v3978 = vsel %vm3206, %v3972, 0
        %v3981 = vsel %vm3206, %v3973, 0
        %3983 = vmatprep.subr.mxu0 %v3965
        %3984 = vmatpush1.msra.mxu0 %v3964
        %3985 = vmatprep.subr.mxu0 %v3967
        %3986 = vmatpush1.msra.mxu0 %v3966
        %3987 = vmatprep.subr.mxu0 %v3969
        %3988 = vmatpush1.msra.mxu0 %v3968
        %3989 = vmatprep.subr.mxu0 %v3971
        %3990 = vmatpush1.msra.mxu0 %v3970
        %3991 = vmatprep.subr.mxu0 %v3981
        %3992 = vmatpush1.msra.mxu0 %v3978
        %3993 = vmatprep.subr.mxu0 0.0
        %3994 = vmatpush1.msra.mxu0 0.0
        %3995 = vmatprep.subr.mxu0 0.0
        %3996 = vmatpush1.msra.mxu0 0.0
        %3997 = vmatprep.subr.mxu0 0.0
        %3998 = vmatpush1.msra.mxu0 0.0
        %3999 = vmatprep.subr.mxu0 0.0
        %4000 = vmatpush1.msra.mxu0 0.0
        %4001 = vmatprep.subr.mxu0 0.0
        %4002 = vmatpush1.msra.mxu0 0.0
        %4003 = vmatprep.subr.mxu0 0.0
        %4004 = vmatpush1.msra.mxu0 0.0
        %4005 = vmatprep.subr.mxu0 0.0
        %4006 = vmatpush1.msra.mxu0 0.0
        %4007 = vmatprep.subr.mxu0 0.0
        %4008 = vmatpush1.msra.mxu0 0.0
        %4009 = vmatprep.subr.mxu0 0.0
        %4010 = vmatpush1.msra.mxu0 0.0
        %4011 = vmatprep.subr.mxu0 0.0
        %4012 = vmatpush1.msra.mxu0 0.0
        %4013 = vmatprep.subr.mxu0 0.0
        %4014 = vmatpush1.msra.mxu0 0.0
        %4015 = vmatprep.subr.mxu0 0.0
        %4016 = vmatpush1.msra.mxu0 0.0
        %4017 = vmatprep.subr.mxu0 0.0
        %4018 = vmatpush1.msra.mxu0 0.0
        %4019 = vmatprep.subr.mxu0 0.0
        %4020 = vmatpush1.msra.mxu0 0.0
        %4021 = vmatprep.subr.mxu0 0.0
        %4022 = vmatpush1.msra.mxu0 0.0
        %4023 = vmatprep.subr.mxu0 0.0
        %4024 = vmatpush1.msra.mxu0 0.0
        %4025 = vmatprep.subr.mxu0 0.0
        %4026 = vmatpush1.msra.mxu0 0.0
        %4027 = vmatprep.subr.mxu0 0.0
        %4028 = vmatpush1.msra.mxu0 0.0
        %4029 = vmatprep.subr.mxu0 0.0
        %4030 = vmatpush1.msra.mxu0 0.0
        %4031 = vmatprep.subr.mxu0 0.0
        %4032 = vmatpush1.msra.mxu0 0.0
        %4033 = vmatprep.subr.mxu0 0.0
        %4034 = vmatpush1.msra.mxu0 0.0
        %4035 = vmatprep.subr.mxu0 0.0
        %4036 = vmatpush1.msra.mxu0 0.0
        %4037 = vmatprep.subr.mxu0 0.0
        %4038 = vmatpush1.msra.mxu0 0.0
        %4039 = vmatprep.subr.mxu0 0.0
        %4040 = vmatpush1.msra.mxu0 0.0
        %4041 = vmatprep.subr.mxu0 0.0
        %4042 = vmatpush1.msra.mxu0 0.0
        %4043 = vmatprep.subr.mxu0 0.0
        %4044 = vmatpush1.msra.mxu0 0.0
        %4045 = vmatprep.subr.mxu0 0.0
        %4046 = vmatpush1.msra.mxu0 0.0
        %4047 = vmatprep.mubr.f32.mxu0 0.0
        %4048 = vmatmul.mubr.f32.gmra.mrb[0].mxu0 %v3975
        %v4049 = vpop.f32.mrb[0].mxu0
        %v4050 = vadd.f32 0.0, %v4049
        %v4051 = vpop.f32.mrb[0].mxu0
        %v4052 = vadd.f32 0.0, %v4051
        %4053 = vdwg.mxu0
        %v4056 = vcombine.low %v4050, %v4052
        %v4058 = vunpack.c.l.s4 1966171168
        %v4059 = vunpack.c.0.s8 %v4058
        %v4060 = vlaneseq
        %v4061 = vshrl.u32 %v4060, 7
        %v4062 = vsub.s32 %v4059, %v4061
        %v4063 = vrot.slane %v4056, %v4062
        %v4065 = vunpack.c.l.s4 1966171168
        %v4066 = vunpack.c.0.s8 %v4065
        %v4067 = vlaneseq
        %v4068 = vshrl.u32 %v4067, 7
        %v4069 = vsub.s32 %v4066, %v4068
        %v4070 = vrot.slane %v4063, %v4069
        %v4072 = vadd.f32 %v3962, %v4070
        %s4073 = scalar_lea.vmem %s6, 640
        %v4074 = vld [vmem:[%s4073] sm:$0xff]
        %v4075 = vld [vmem:[%s4073 + $0x8] sm:$0xff]
        %v4076 = vld [vmem:[%s4073 + $0x10] sm:$0xff]
        %v4077 = vld [vmem:[%s4073 + $0x18] sm:$0xff]
        %v4078 = vld [vmem:[%s4073 + $0x20] sm:$0xff]
        %v4079 = vld [vmem:[%s4073 + $0x28] sm:$0xff]
        %v4080 = vld [vmem:[%s4073 + $0x30] sm:$0xff]
        %v4081 = vld [vmem:[%s4073 + $0x38] sm:$0xff]
        %v4082 = vld [vmem:[%s4073 + $0x40] sm:$0xf]
        %v4083 = vld [vmem:[%s4073 + $0x48] sm:$0xf]
        %v4085 = vsel %vm3202, %v3190, 0
        %v4088 = vsel %vm3206, %v4082, 0
        %v4091 = vsel %vm3206, %v4083, 0
        %4093 = vmatprep.subr.mxu0 %v4075
        %4094 = vmatpush1.msra.mxu0 %v4074
        %4095 = vmatprep.subr.mxu0 %v4077
        %4096 = vmatpush1.msra.mxu0 %v4076
        %4097 = vmatprep.subr.mxu0 %v4079
        %4098 = vmatpush1.msra.mxu0 %v4078
        %4099 = vmatprep.subr.mxu0 %v4081
        %4100 = vmatpush1.msra.mxu0 %v4080
        %4101 = vmatprep.subr.mxu0 %v4091
        %4102 = vmatpush1.msra.mxu0 %v4088
        %4103 = vmatprep.subr.mxu0 0.0
        %4104 = vmatpush1.msra.mxu0 0.0
        %4105 = vmatprep.subr.mxu0 0.0
        %4106 = vmatpush1.msra.mxu0 0.0
        %4107 = vmatprep.subr.mxu0 0.0
        %4108 = vmatpush1.msra.mxu0 0.0
        %4109 = vmatprep.subr.mxu0 0.0
        %4110 = vmatpush1.msra.mxu0 0.0
        %4111 = vmatprep.subr.mxu0 0.0
        %4112 = vmatpush1.msra.mxu0 0.0
        %4113 = vmatprep.subr.mxu0 0.0
        %4114 = vmatpush1.msra.mxu0 0.0
        %4115 = vmatprep.subr.mxu0 0.0
        %4116 = vmatpush1.msra.mxu0 0.0
        %4117 = vmatprep.subr.mxu0 0.0
        %4118 = vmatpush1.msra.mxu0 0.0
        %4119 = vmatprep.subr.mxu0 0.0
        %4120 = vmatpush1.msra.mxu0 0.0
        %4121 = vmatprep.subr.mxu0 0.0
        %4122 = vmatpush1.msra.mxu0 0.0
        %4123 = vmatprep.subr.mxu0 0.0
        %4124 = vmatpush1.msra.mxu0 0.0
        %4125 = vmatprep.subr.mxu0 0.0
        %4126 = vmatpush1.msra.mxu0 0.0
        %4127 = vmatprep.subr.mxu0 0.0
        %4128 = vmatpush1.msra.mxu0 0.0
        %4129 = vmatprep.subr.mxu0 0.0
        %4130 = vmatpush1.msra.mxu0 0.0
        %4131 = vmatprep.subr.mxu0 0.0
        %4132 = vmatpush1.msra.mxu0 0.0
        %4133 = vmatprep.subr.mxu0 0.0
        %4134 = vmatpush1.msra.mxu0 0.0
        %4135 = vmatprep.subr.mxu0 0.0
        %4136 = vmatpush1.msra.mxu0 0.0
        %4137 = vmatprep.subr.mxu0 0.0
        %4138 = vmatpush1.msra.mxu0 0.0
        %4139 = vmatprep.subr.mxu0 0.0
        %4140 = vmatpush1.msra.mxu0 0.0
        %4141 = vmatprep.subr.mxu0 0.0
        %4142 = vmatpush1.msra.mxu0 0.0
        %4143 = vmatprep.subr.mxu0 0.0
        %4144 = vmatpush1.msra.mxu0 0.0
        %4145 = vmatprep.subr.mxu0 0.0
        %4146 = vmatpush1.msra.mxu0 0.0
        %4147 = vmatprep.subr.mxu0 0.0
        %4148 = vmatpush1.msra.mxu0 0.0
        %4149 = vmatprep.subr.mxu0 0.0
        %4150 = vmatpush1.msra.mxu0 0.0
        %4151 = vmatprep.subr.mxu0 0.0
        %4152 = vmatpush1.msra.mxu0 0.0
        %4153 = vmatprep.subr.mxu0 0.0
        %4154 = vmatpush1.msra.mxu0 0.0
        %4155 = vmatprep.subr.mxu0 0.0
        %4156 = vmatpush1.msra.mxu0 0.0
        %4157 = vmatprep.mubr.f32.mxu0 0.0
        %4158 = vmatmul.mubr.f32.gmra.mrb[0].mxu0 %v4085
        %v4159 = vpop.f32.mrb[0].mxu0
        %v4160 = vadd.f32 0.0, %v4159
        %v4161 = vpop.f32.mrb[0].mxu0
        %v4162 = vadd.f32 0.0, %v4161
        %4163 = vdwg.mxu0
        %v4166 = vcombine.low %v4160, %v4162
        %v4168 = vunpack.c.l.s4 1966171168
        %v4169 = vunpack.c.0.s8 %v4168
        %v4170 = vlaneseq
        %v4171 = vshrl.u32 %v4170, 7
        %v4172 = vsub.s32 %v4169, %v4171
        %v4173 = vrot.slane %v4166, %v4172
        %v4175 = vunpack.c.l.s4 1966171168
        %v4176 = vunpack.c.0.s8 %v4175
        %v4177 = vlaneseq
        %v4178 = vshrl.u32 %v4177, 7
        %v4179 = vsub.s32 %v4176, %v4178
        %v4180 = vrot.slane %v4173, %v4179
        %v4182 = vadd.f32 %v4072, %v4180
        %s4183 = scalar_lea.vmem %s6, 720
        %v4184 = vld [vmem:[%s4183] sm:$0xff]
        %v4185 = vld [vmem:[%s4183 + $0x8] sm:$0xff]
        %v4186 = vld [vmem:[%s4183 + $0x10] sm:$0xff]
        %v4187 = vld [vmem:[%s4183 + $0x18] sm:$0xff]
        %v4188 = vld [vmem:[%s4183 + $0x20] sm:$0xff]
        %v4189 = vld [vmem:[%s4183 + $0x28] sm:$0xff]
        %v4190 = vld [vmem:[%s4183 + $0x30] sm:$0xff]
        %v4191 = vld [vmem:[%s4183 + $0x38] sm:$0xff]
        %v4192 = vld [vmem:[%s4183 + $0x40] sm:$0xf]
        %v4193 = vld [vmem:[%s4183 + $0x48] sm:$0xf]
        %v4194 = vrot.slane %v3190, 1
        %v4195 = vsel %vm3202, %v4194, 0
        %v4198 = vsel %vm3206, %v4192, 0
        %v4201 = vsel %vm3206, %v4193, 0
        %4203 = vmatprep.subr.mxu0 %v4185
        %4204 = vmatpush1.msra.mxu0 %v4184
        %4205 = vmatprep.subr.mxu0 %v4187
        %4206 = vmatpush1.msra.mxu0 %v4186
        %4207 = vmatprep.subr.mxu0 %v4189
        %4208 = vmatpush1.msra.mxu0 %v4188
        %4209 = vmatprep.subr.mxu0 %v4191
        %4210 = vmatpush1.msra.mxu0 %v4190
        %4211 = vmatprep.subr.mxu0 %v4201
        %4212 = vmatpush1.msra.mxu0 %v4198
        %4213 = vmatprep.subr.mxu0 0.0
        %4214 = vmatpush1.msra.mxu0 0.0
        %4215 = vmatprep.subr.mxu0 0.0
        %4216 = vmatpush1.msra.mxu0 0.0
        %4217 = vmatprep.subr.mxu0 0.0
        %4218 = vmatpush1.msra.mxu0 0.0
        %4219 = vmatprep.subr.mxu0 0.0
        %4220 = vmatpush1.msra.mxu0 0.0
        %4221 = vmatprep.subr.mxu0 0.0
        %4222 = vmatpush1.msra.mxu0 0.0
        %4223 = vmatprep.subr.mxu0 0.0
        %4224 = vmatpush1.msra.mxu0 0.0
        %4225 = vmatprep.subr.mxu0 0.0
        %4226 = vmatpush1.msra.mxu0 0.0
        %4227 = vmatprep.subr.mxu0 0.0
        %4228 = vmatpush1.msra.mxu0 0.0
        %4229 = vmatprep.subr.mxu0 0.0
        %4230 = vmatpush1.msra.mxu0 0.0
        %4231 = vmatprep.subr.mxu0 0.0
        %4232 = vmatpush1.msra.mxu0 0.0
        %4233 = vmatprep.subr.mxu0 0.0
        %4234 = vmatpush1.msra.mxu0 0.0
        %4235 = vmatprep.subr.mxu0 0.0
        %4236 = vmatpush1.msra.mxu0 0.0
        %4237 = vmatprep.subr.mxu0 0.0
        %4238 = vmatpush1.msra.mxu0 0.0
        %4239 = vmatprep.subr.mxu0 0.0
        %4240 = vmatpush1.msra.mxu0 0.0
        %4241 = vmatprep.subr.mxu0 0.0
        %4242 = vmatpush1.msra.mxu0 0.0
        %4243 = vmatprep.subr.mxu0 0.0
        %4244 = vmatpush1.msra.mxu0 0.0
        %4245 = vmatprep.subr.mxu0 0.0
        %4246 = vmatpush1.msra.mxu0 0.0
        %4247 = vmatprep.subr.mxu0 0.0
        %4248 = vmatpush1.msra.mxu0 0.0
        %4249 = vmatprep.subr.mxu0 0.0
        %4250 = vmatpush1.msra.mxu0 0.0
        %4251 = vmatprep.subr.mxu0 0.0
        %4252 = vmatpush1.msra.mxu0 0.0
        %4253 = vmatprep.subr.mxu0 0.0
        %4254 = vmatpush1.msra.mxu0 0.0
        %4255 = vmatprep.subr.mxu0 0.0
        %4256 = vmatpush1.msra.mxu0 0.0
        %4257 = vmatprep.subr.mxu0 0.0
        %4258 = vmatpush1.msra.mxu0 0.0
        %4259 = vmatprep.subr.mxu0 0.0
        %4260 = vmatpush1.msra.mxu0 0.0
        %4261 = vmatprep.subr.mxu0 0.0
        %4262 = vmatpush1.msra.mxu0 0.0
        %4263 = vmatprep.subr.mxu0 0.0
        %4264 = vmatpush1.msra.mxu0 0.0
        %4265 = vmatprep.subr.mxu0 0.0
        %4266 = vmatpush1.msra.mxu0 0.0
        %4267 = vmatprep.mubr.f32.mxu0 0.0
        %4268 = vmatmul.mubr.f32.gmra.mrb[0].mxu0 %v4195
        %v4269 = vpop.f32.mrb[0].mxu0
        %v4270 = vadd.f32 0.0, %v4269
        %v4271 = vpop.f32.mrb[0].mxu0
        %v4272 = vadd.f32 0.0, %v4271
        %4273 = vdwg.mxu0
        %v4276 = vcombine.low %v4270, %v4272
        %v4278 = vunpack.c.l.s4 1966171168
        %v4279 = vunpack.c.0.s8 %v4278
        %v4280 = vlaneseq
        %v4281 = vshrl.u32 %v4280, 7
        %v4282 = vsub.s32 %v4279, %v4281
        %v4283 = vrot.slane %v4276, %v4282
        %v4285 = vunpack.c.l.s4 1966171168
        %v4286 = vunpack.c.0.s8 %v4285
        %v4287 = vlaneseq
        %v4288 = vshrl.u32 %v4287, 7
        %v4289 = vsub.s32 %v4286, %v4288
        %v4290 = vrot.slane %v4283, %v4289
        %v4292 = vadd.f32 %v4182, %v4290
        %s4293 = scalar_lea.vmem %s6, 800
        %v4294 = vld [vmem:[%s4293] sm:$0xff]
        %v4295 = vld [vmem:[%s4293 + $0x8] sm:$0xff]
        %v4296 = vld [vmem:[%s4293 + $0x10] sm:$0xff]
        %v4297 = vld [vmem:[%s4293 + $0x18] sm:$0xff]
        %v4298 = vld [vmem:[%s4293 + $0x20] sm:$0xff]
        %v4299 = vld [vmem:[%s4293 + $0x28] sm:$0xff]
        %v4300 = vld [vmem:[%s4293 + $0x30] sm:$0xff]
        %v4301 = vld [vmem:[%s4293 + $0x38] sm:$0xff]
        %v4302 = vld [vmem:[%s4293 + $0x40] sm:$0xf]
        %v4303 = vld [vmem:[%s4293 + $0x48] sm:$0xf]
        %v4304 = vrot.slane %v3190, 2
        %v4305 = vsel %vm3202, %v4304, 0
        %v4308 = vsel %vm3206, %v4302, 0
        %v4311 = vsel %vm3206, %v4303, 0
        %4313 = vmatprep.subr.mxu0 %v4295
        %4314 = vmatpush1.msra.mxu0 %v4294
        %4315 = vmatprep.subr.mxu0 %v4297
        %4316 = vmatpush1.msra.mxu0 %v4296
        %4317 = vmatprep.subr.mxu0 %v4299
        %4318 = vmatpush1.msra.mxu0 %v4298
        %4319 = vmatprep.subr.mxu0 %v4301
        %4320 = vmatpush1.msra.mxu0 %v4300
        %4321 = vmatprep.subr.mxu0 %v4311
        %4322 = vmatpush1.msra.mxu0 %v4308
        %4323 = vmatprep.subr.mxu0 0.0
        %4324 = vmatpush1.msra.mxu0 0.0
        %4325 = vmatprep.subr.mxu0 0.0
        %4326 = vmatpush1.msra.mxu0 0.0
        %4327 = vmatprep.subr.mxu0 0.0
        %4328 = vmatpush1.msra.mxu0 0.0
        %4329 = vmatprep.subr.mxu0 0.0
        %4330 = vmatpush1.msra.mxu0 0.0
        %4331 = vmatprep.subr.mxu0 0.0
        %4332 = vmatpush1.msra.mxu0 0.0
        %4333 = vmatprep.subr.mxu0 0.0
        %4334 = vmatpush1.msra.mxu0 0.0
        %4335 = vmatprep.subr.mxu0 0.0
        %4336 = vmatpush1.msra.mxu0 0.0
        %4337 = vmatprep.subr.mxu0 0.0
        %4338 = vmatpush1.msra.mxu0 0.0
        %4339 = vmatprep.subr.mxu0 0.0
        %4340 = vmatpush1.msra.mxu0 0.0
        %4341 = vmatprep.subr.mxu0 0.0
        %4342 = vmatpush1.msra.mxu0 0.0
        %4343 = vmatprep.subr.mxu0 0.0
        %4344 = vmatpush1.msra.mxu0 0.0
        %4345 = vmatprep.subr.mxu0 0.0
        %4346 = vmatpush1.msra.mxu0 0.0
        %4347 = vmatprep.subr.mxu0 0.0
        %4348 = vmatpush1.msra.mxu0 0.0
        %4349 = vmatprep.subr.mxu0 0.0
        %4350 = vmatpush1.msra.mxu0 0.0
        %4351 = vmatprep.subr.mxu0 0.0
        %4352 = vmatpush1.msra.mxu0 0.0
        %4353 = vmatprep.subr.mxu0 0.0
        %4354 = vmatpush1.msra.mxu0 0.0
        %4355 = vmatprep.subr.mxu0 0.0
        %4356 = vmatpush1.msra.mxu0 0.0
        %4357 = vmatprep.subr.mxu0 0.0
        %4358 = vmatpush1.msra.mxu0 0.0
        %4359 = vmatprep.subr.mxu0 0.0
        %4360 = vmatpush1.msra.mxu0 0.0
        %4361 = vmatprep.subr.mxu0 0.0
        %4362 = vmatpush1.msra.mxu0 0.0
        %4363 = vmatprep.subr.mxu0 0.0
        %4364 = vmatpush1.msra.mxu0 0.0
        %4365 = vmatprep.subr.mxu0 0.0
        %4366 = vmatpush1.msra.mxu0 0.0
        %4367 = vmatprep.subr.mxu0 0.0
        %4368 = vmatpush1.msra.mxu0 0.0
        %4369 = vmatprep.subr.mxu0 0.0
        %4370 = vmatpush1.msra.mxu0 0.0
        %4371 = vmatprep.subr.mxu0 0.0
        %4372 = vmatpush1.msra.mxu0 0.0
        %4373 = vmatprep.subr.mxu0 0.0
        %4374 = vmatpush1.msra.mxu0 0.0
        %4375 = vmatprep.subr.mxu0 0.0
        %4376 = vmatpush1.msra.mxu0 0.0
        %4377 = vmatprep.mubr.f32.mxu0 0.0
        %4378 = vmatmul.mubr.f32.gmra.mrb[0].mxu0 %v4305
        %v4379 = vpop.f32.mrb[0].mxu0
        %v4380 = vadd.f32 0.0, %v4379
        %v4381 = vpop.f32.mrb[0].mxu0
        %v4382 = vadd.f32 0.0, %v4381
        %4383 = vdwg.mxu0
        %v4386 = vcombine.low %v4380, %v4382
        %v4388 = vunpack.c.l.s4 1966171168
        %v4389 = vunpack.c.0.s8 %v4388
        %v4390 = vlaneseq
        %v4391 = vshrl.u32 %v4390, 7
        %v4392 = vsub.s32 %v4389, %v4391
        %v4393 = vrot.slane %v4386, %v4392
        %v4395 = vunpack.c.l.s4 1966171168
        %v4396 = vunpack.c.0.s8 %v4395
        %v4397 = vlaneseq
        %v4398 = vshrl.u32 %v4397, 7
        %v4399 = vsub.s32 %v4396, %v4398
        %v4400 = vrot.slane %v4393, %v4399
        %v4402 = vadd.f32 %v4292, %v4400
        %s4403 = scalar_lea.vmem %s6, 880
        %v4404 = vld [vmem:[%s4403] sm:$0xff]
        %v4405 = vld [vmem:[%s4403 + $0x8] sm:$0xff]
        %v4406 = vld [vmem:[%s4403 + $0x10] sm:$0xff]
        %v4407 = vld [vmem:[%s4403 + $0x18] sm:$0xff]
        %v4408 = vld [vmem:[%s4403 + $0x20] sm:$0xff]
        %v4409 = vld [vmem:[%s4403 + $0x28] sm:$0xff]
        %v4410 = vld [vmem:[%s4403 + $0x30] sm:$0xff]
        %v4411 = vld [vmem:[%s4403 + $0x38] sm:$0xff]
        %v4412 = vld [vmem:[%s4403 + $0x40] sm:$0xf]
        %v4413 = vld [vmem:[%s4403 + $0x48] sm:$0xf]
        %v4414 = vrot.slane %v3190, 3
        %v4415 = vsel %vm3202, %v4414, 0
        %v4418 = vsel %vm3206, %v4412, 0
        %v4421 = vsel %vm3206, %v4413, 0
        %4423 = vmatprep.subr.mxu0 %v4405
        %4424 = vmatpush1.msra.mxu0 %v4404
        %4425 = vmatprep.subr.mxu0 %v4407
        %4426 = vmatpush1.msra.mxu0 %v4406
        %4427 = vmatprep.subr.mxu0 %v4409
        %4428 = vmatpush1.msra.mxu0 %v4408
        %4429 = vmatprep.subr.mxu0 %v4411
        %4430 = vmatpush1.msra.mxu0 %v4410
        %4431 = vmatprep.subr.mxu0 %v4421
        %4432 = vmatpush1.msra.mxu0 %v4418
        %4433 = vmatprep.subr.mxu0 0.0
        %4434 = vmatpush1.msra.mxu0 0.0
        %4435 = vmatprep.subr.mxu0 0.0
        %4436 = vmatpush1.msra.mxu0 0.0
        %4437 = vmatprep.subr.mxu0 0.0
        %4438 = vmatpush1.msra.mxu0 0.0
        %4439 = vmatprep.subr.mxu0 0.0
        %4440 = vmatpush1.msra.mxu0 0.0
        %4441 = vmatprep.subr.mxu0 0.0
        %4442 = vmatpush1.msra.mxu0 0.0
        %4443 = vmatprep.subr.mxu0 0.0
        %4444 = vmatpush1.msra.mxu0 0.0
        %4445 = vmatprep.subr.mxu0 0.0
        %4446 = vmatpush1.msra.mxu0 0.0
        %4447 = vmatprep.subr.mxu0 0.0
        %4448 = vmatpush1.msra.mxu0 0.0
        %4449 = vmatprep.subr.mxu0 0.0
        %4450 = vmatpush1.msra.mxu0 0.0
        %4451 = vmatprep.subr.mxu0 0.0
        %4452 = vmatpush1.msra.mxu0 0.0
        %4453 = vmatprep.subr.mxu0 0.0
        %4454 = vmatpush1.msra.mxu0 0.0
        %4455 = vmatprep.subr.mxu0 0.0
        %4456 = vmatpush1.msra.mxu0 0.0
        %4457 = vmatprep.subr.mxu0 0.0
        %4458 = vmatpush1.msra.mxu0 0.0
        %4459 = vmatprep.subr.mxu0 0.0
        %4460 = vmatpush1.msra.mxu0 0.0
        %4461 = vmatprep.subr.mxu0 0.0
        %4462 = vmatpush1.msra.mxu0 0.0
        %4463 = vmatprep.subr.mxu0 0.0
        %4464 = vmatpush1.msra.mxu0 0.0
        %4465 = vmatprep.subr.mxu0 0.0
        %4466 = vmatpush1.msra.mxu0 0.0
        %4467 = vmatprep.subr.mxu0 0.0
        %4468 = vmatpush1.msra.mxu0 0.0
        %4469 = vmatprep.subr.mxu0 0.0
        %4470 = vmatpush1.msra.mxu0 0.0
        %4471 = vmatprep.subr.mxu0 0.0
        %4472 = vmatpush1.msra.mxu0 0.0
        %4473 = vmatprep.subr.mxu0 0.0
        %4474 = vmatpush1.msra.mxu0 0.0
        %4475 = vmatprep.subr.mxu0 0.0
        %4476 = vmatpush1.msra.mxu0 0.0
        %4477 = vmatprep.subr.mxu0 0.0
        %4478 = vmatpush1.msra.mxu0 0.0
        %4479 = vmatprep.subr.mxu0 0.0
        %4480 = vmatpush1.msra.mxu0 0.0
        %4481 = vmatprep.subr.mxu0 0.0
        %4482 = vmatpush1.msra.mxu0 0.0
        %4483 = vmatprep.subr.mxu0 0.0
        %4484 = vmatpush1.msra.mxu0 0.0
        %4485 = vmatprep.subr.mxu0 0.0
        %4486 = vmatpush1.msra.mxu0 0.0
        %4487 = vmatprep.mubr.f32.mxu0 0.0
        %4488 = vmatmul.mubr.f32.gmra.mrb[0].mxu0 %v4415
        %v4489 = vpop.f32.mrb[0].mxu0
        %v4490 = vadd.f32 0.0, %v4489
        %v4491 = vpop.f32.mrb[0].mxu0
        %v4492 = vadd.f32 0.0, %v4491
        %4493 = vdwg.mxu0
        %v4496 = vcombine.low %v4490, %v4492
        %v4498 = vunpack.c.l.s4 1966171168
        %v4499 = vunpack.c.0.s8 %v4498
        %v4500 = vlaneseq
        %v4501 = vshrl.u32 %v4500, 7
        %v4502 = vsub.s32 %v4499, %v4501
        %v4503 = vrot.slane %v4496, %v4502
        %v4505 = vunpack.c.l.s4 1966171168
        %v4506 = vunpack.c.0.s8 %v4505
        %v4507 = vlaneseq
        %v4508 = vshrl.u32 %v4507, 7
        %v4509 = vsub.s32 %v4506, %v4508
        %v4510 = vrot.slane %v4503, %v4509
        %v4512 = vadd.f32 %v4402, %v4510
        %v4513 = vmax.f32 %v4512, 0.0
        %v4514 = vld [vmem:[%s8] sm:$0xff]
        %v4515 = vld [vmem:[%s8 + $0x8] sm:$0xff]
        %v4516 = vld [vmem:[%s8 + $0x10] sm:$0xff]
        %v4517 = vld [vmem:[%s8 + $0x18] sm:$0xff]
        %v4518 = vld [vmem:[%s8 + $0x20] sm:$0xff]
        %v4519 = vld [vmem:[%s8 + $0x28] sm:$0xff]
        %v4520 = vld [vmem:[%s8 + $0x30] sm:$0xff]
        %v4521 = vld [vmem:[%s8 + $0x38] sm:$0xff]
        %v4522 = vld [vmem:[%s8 + $0x40] sm:$0xff]
        %v4523 = vld [vmem:[%s8 + $0x48] sm:$0xff]
        %v4524 = vld [vmem:[%s8 + $0x50] sm:$0xff]
        %v4525 = vld [vmem:[%s8 + $0x58] sm:$0xff]
        %v4526 = vld [vmem:[%s8 + $0x60] sm:$0xff]
        %v4527 = vld [vmem:[%s8 + $0x68] sm:$0xff]
        %v4528 = vld [vmem:[%s8 + $0x70] sm:$0xff]
        %v4529 = vld [vmem:[%s8 + $0x78] sm:$0xff]
        %v4530 = vld [vmem:[%s8 + $0x80] sm:$0xff]
        %v4531 = vld [vmem:[%s8 + $0x88] sm:$0xff]
        %v4532 = vld [vmem:[%s8 + $0x90] sm:$0xff]
        %v4533 = vld [vmem:[%s8 + $0x98] sm:$0xff]
        %v4534 = vld [vmem:[%s8 + $0xa0] sm:$0xff]
        %v4535 = vld [vmem:[%s8 + $0xa8] sm:$0xff]
        %v4536 = vld [vmem:[%s8 + $0xb0] sm:$0xff]
        %v4537 = vld [vmem:[%s8 + $0xb8] sm:$0xff]
        %v4538 = vld [vmem:[%s8 + $0xc0] sm:$0xff]
        %v4539 = vld [vmem:[%s8 + $0xc8] sm:$0xff]
        %v4540 = vld [vmem:[%s8 + $0xd0] sm:$0xff]
        %v4541 = vld [vmem:[%s9] sm:$0x1]
        %v4543 = vlaneseq
        %v4544 = vshrl.u32 %v4543, 7
        %v4545 = vsub.s32 0, %v4544
        %v4546 = vrot.slane %v4513, %v4545
        %v4547 = vlaneseq
        %v4548 = vshrl.u32 %v4547, 7
        %v4549 = vsub.s32 1, %v4548
        %v4550 = vrot.slane %v4513, %v4549
        %vm4552 = vcmask 719872
        %v4553 = vsel %vm4552, %v4550, 0
        %4555 = vmatprep.subr.mxu0 0.0
        %4556 = vmatpush1.msra.mxu0 %v4514
        %4557 = vmatprep.subr.mxu0 0.0
        %4558 = vmatpush1.msra.mxu0 %v4515
        %4559 = vmatprep.subr.mxu0 0.0
        %4560 = vmatpush1.msra.mxu0 %v4516
        %4561 = vmatprep.subr.mxu0 0.0
        %4562 = vmatpush1.msra.mxu0 %v4517
        %4563 = vmatprep.subr.mxu0 0.0
        %4564 = vmatpush1.msra.mxu0 %v4518
        %4565 = vmatprep.subr.mxu0 0.0
        %4566 = vmatpush1.msra.mxu0 %v4519
        %4567 = vmatprep.subr.mxu0 0.0
        %4568 = vmatpush1.msra.mxu0 %v4520
        %4569 = vmatprep.subr.mxu0 0.0
        %4570 = vmatpush1.msra.mxu0 %v4521
        %4571 = vmatprep.subr.mxu0 0.0
        %4572 = vmatpush1.msra.mxu0 %v4522
        %4573 = vmatprep.subr.mxu0 0.0
        %4574 = vmatpush1.msra.mxu0 %v4523
        %4575 = vmatprep.subr.mxu0 0.0
        %4576 = vmatpush1.msra.mxu0 %v4524
        %4577 = vmatprep.subr.mxu0 0.0
        %4578 = vmatpush1.msra.mxu0 %v4525
        %4579 = vmatprep.subr.mxu0 0.0
        %4580 = vmatpush1.msra.mxu0 %v4526
        %4581 = vmatprep.subr.mxu0 0.0
        %4582 = vmatpush1.msra.mxu0 %v4527
        %4583 = vmatprep.subr.mxu0 0.0
        %4584 = vmatpush1.msra.mxu0 %v4528
        %4585 = vmatprep.subr.mxu0 0.0
        %4586 = vmatpush1.msra.mxu0 %v4529
        %4587 = vmatprep.subr.mxu0 0.0
        %4588 = vmatpush1.msra.mxu0 %v4530
        %4589 = vmatprep.subr.mxu0 0.0
        %4590 = vmatpush1.msra.mxu0 %v4531
        %4591 = vmatprep.subr.mxu0 0.0
        %4592 = vmatpush1.msra.mxu0 %v4532
        %4593 = vmatprep.subr.mxu0 0.0
        %4594 = vmatpush1.msra.mxu0 %v4533
        %4595 = vmatprep.subr.mxu0 0.0
        %4596 = vmatpush1.msra.mxu0 %v4534
        %4597 = vmatprep.subr.mxu0 0.0
        %4598 = vmatpush1.msra.mxu0 %v4535
        %4599 = vmatprep.subr.mxu0 0.0
        %4600 = vmatpush1.msra.mxu0 %v4536
        %4601 = vmatprep.subr.mxu0 0.0
        %4602 = vmatpush1.msra.mxu0 %v4537
        %4603 = vmatprep.subr.mxu0 0.0
        %4604 = vmatpush1.msra.mxu0 %v4538
        %4605 = vmatprep.subr.mxu0 0.0
        %4606 = vmatpush1.msra.mxu0 %v4539
        %4607 = vmatprep.subr.mxu0 0.0
        %4608 = vmatpush1.msra.mxu0 %v4540
        %4609 = vmatprep.subr.mxu0 0.0
        %4610 = vmatpush1.msra.mxu0 0.0
        %4611 = vmatprep.subr.mxu0 0.0
        %4612 = vmatpush1.msra.mxu0 0.0
        %4613 = vmatprep.subr.mxu0 0.0
        %4614 = vmatpush1.msra.mxu0 0.0
        %4615 = vmatprep.subr.mxu0 0.0
        %4616 = vmatpush1.msra.mxu0 0.0
        %4617 = vmatprep.subr.mxu0 0.0
        %4618 = vmatpush1.msra.mxu0 0.0
        %4619 = vmatprep.mubr.f32.mxu0 %v4553
        %4620 = vmatmul.mubr.f32.gmra.mrb[0].mxu0 %v4546
        %v4621 = vpop.f32.mrb[0].mxu0
        %v4622 = vadd.f32 %v4541, %v4621
        %v4623 = vpop.f32.mrb[0].mxu0
        %4624 = vdwg.mxu0
        %vm4625 = vcmask 24576
        %4626 = vst.msk [vmem:[%s351] sm:$0x1] %vm4625, %v4622
        %s4627 = sand.u32 %s247, 1
        %s4628 = scalar_lea.sflag [#allocation4], %s4627
        %s4629 = sand.u32 %s247, 1
        %s4630 = scalar_lea.vmem [#allocation3], %s4629
        // Predicated region
        $region61: #{dqn_forward.1} parent=59 // pred_check
          %p4631 = pneg %p257
        $region62: #{dqn_forward.1} parent=59 // pred_check_branch
          %4633 = sbr.rel (%p4631) target = $region64
        $region63: #{dqn_forward.1} parent=59 // pred_region
          %s4635 = ssub.s32 16, 16
          %4636 = vsyncadd %s4628, %s4635
          %s4637 = smul.addr %s24, 16
          %s4638 = scalar_lea.hbm %s10, %s4637
          %s4640 = sshll.u32 %s4630, 4
          %s4641 = int_to_ptr.vmem [resolvable:$true] %s4640
          %4643 = dma.vmem_to_hbm [thread:$0]  %s4641, 16, %s4638, %s4628
        $region64: #{dqn_forward.1} parent=59 // pred_fallthru
          _
      $region60: #{dqn_forward.1} parent=5 // pred_fallthru
        _
      %p4644 = scmp.le.s32.totalorder 2, %s19
      // Predicated region
      $region65: #{dqn_forward.1} parent=5 // pred_check
        %p4645 = pneg %p4644
      $region66: #{dqn_forward.1} parent=5 // pred_check_branch
        %4647 = sbr.rel (%p4645) target = $region68
      $region67: #{dqn_forward.1} parent=5 // pred_region
        %s4648 = ssub.s32 %s19, 2
        // Predicated region
        $region69: #{dqn_forward.1} parent=67 // pred_check
          %p4649 = pneg %p263
        $region70: #{dqn_forward.1} parent=67 // pred_check_branch
          %4651 = sbr.rel (%p4649) target = $region72
        $region71: #{dqn_forward.1} parent=67 // pred_region
          %s4652 = sand.u32 %s248, 1
          %s4653 = scalar_lea.sflag [#allocation4], %s4652
          %s4654 = sand.u32 %s248, 1
          %s4655 = scalar_lea.vmem [#allocation3], %s4654
          %4656 = dma.done %s4653, 16
        $region72: #{dqn_forward.1} parent=67 // pred_fallthru
          _
      $region68: #{dqn_forward.1} parent=5 // pred_fallthru
        _
    $region6: #{dqn_forward.1} parent=1 // loop_footer
      %s23 = sadd.s32 1, %s19
    $region7: #{dqn_forward.1} parent=1 // loop_footer_branch
      %18 = sbr.rel target = $region3
    $region8: #{dqn_forward.1} parent=1 // loop_exit
      _
    %4657 = vsyncpa [#allocation4], 1
    %s4658 = scalar_lea.sflag [#allocation4], 1
    %4659 = vsyncpa %s4658, 1

</llo_original>
